<compile_context>
chip_gen: v6e
topology: v6e:2x2x1
jax: 0.10.0
libtpu: 0.0.40
codegen_flags: <defaults>
</compile_context>

<pallas_src>
import math

import jax
import jax.numpy as jnp
from jax.experimental import pallas as pl
from jax.experimental.pallas import tpu as pltpu


def caatt_kernel(x_ref,
                 w_ss_ref, w_sd_ref, w_ds_ref, w_dd_ref, b_s_ref, b_d_ref,
                 ws_s_ref, bs_s_ref, we_s_ref, be_s_ref,
                 ws_d_ref, bs_d_ref, we_d_ref, be_d_ref,
                 o_ref):
    """Processes one batch tile (TB, L, D). All math in f32 regardless of I/O dtype."""
    x = x_ref[...].astype(jnp.float32)                      # (TB, L, D)
    _, L, D = x.shape

    # Coordinate pooling (means over emb_dim and max_len).
    # TODO(synk): if a bundle dump shows the VPU/XLU slot binding, route these
    # reductions through the otherwise-idle MXU (x @ ones((D,1)), ones((1,L)) @ x).
    s_pool = jnp.sum(x, axis=2) * (1.0 / D)                 # (TB, L)
    d_pool = jnp.sum(x, axis=1) * (1.0 / L)                 # (TB, D)

    def mm(a, w_ref):
        return jnp.dot(a, w_ref[...].astype(jnp.float32),
                       preferred_element_type=jnp.float32)

    # f1 Linear over concat([s_pool, d_pool]) done block-wise: no in-kernel
    # concat and no lane-unaligned split of the (L+D)-wide activation.
    y_s = jnp.maximum(mm(s_pool, w_ss_ref) + mm(d_pool, w_sd_ref) + b_s_ref[...], 0.0)
    y_d = jnp.maximum(mm(s_pool, w_ds_ref) + mm(d_pool, w_dd_ref) + b_d_ref[...], 0.0)

    # SELayer over the sequence axis (hidden dim zero-padded to a lane multiple
    # wrapper-side; padded columns are exactly zero so the result is unchanged).
    h_s = jnp.maximum(mm(y_s, ws_s_ref) + bs_s_ref[...], 0.0)
    g_s = jax.nn.sigmoid(mm(h_s, we_s_ref) + be_s_ref[...])          # (TB, L)

    # SELayer over the embedding axis.
    h_d = jnp.maximum(mm(y_d, ws_d_ref) + bs_d_ref[...], 0.0)
    g_d = jax.nn.sigmoid(mm(h_d, we_d_ref) + be_d_ref[...])          # (TB, D)

    # refit: x * g_s[:, :, None] * g_d[:, None, :]; one lane-dense store per tile.
    o_ref[...] = (x * g_s[:, :, None] * g_d[:, None, :]).astype(o_ref.dtype)


# ----------------------------------------------------------------------------
# One-time parameter preprocessing (hoisted out of the per-call path).
# ----------------------------------------------------------------------------
def _pad_last(a, multiple=128):
    n = a.shape[-1]
    target = max(multiple, -(-n // multiple) * multiple)
    if target == n:
        return a
    return jnp.pad(a, [(0, 0)] * (a.ndim - 1) + [(0, target - n)])


def _pad_first(a, multiple=128):
    n = a.shape[0]
    target = max(multiple, -(-n // multiple) * multiple)
    if target == n:
        return a
    return jnp.pad(a, [(0, target - n)] + [(0, 0)] * (a.ndim - 1))


def preprocess_params(params, max_len, input_dim, io_dtype=jnp.float32):
    """Split f1 into lane-aligned quadrants, pre-transpose everything, zero-pad the
    SE hidden dims to a 128-lane multiple, and cast weights to the HBM I/O dtype.
    Biases stay f32 (they are added to f32 accumulators). Do this ONCE per model."""
    L, D = max_len, input_dim
    w_f1, b_f1 = params["w_f1"], params["b_f1"]
    wt = lambda a: jnp.asarray(a.T, dtype=io_dtype)
    bf = lambda a: jnp.asarray(a, dtype=jnp.float32).reshape(1, -1)
    return (
        wt(w_f1[:L, :L]),                    # (L, L)  s_pool -> y_s
        wt(w_f1[:L, L:]),                    # (D, L)  d_pool -> y_s
        wt(w_f1[L:, :L]),                    # (L, D)  s_pool -> y_d
        wt(w_f1[L:, L:]),                    # (D, D)  d_pool -> y_d
        bf(b_f1[:L]),                        # (1, L)
        bf(b_f1[L:]),                        # (1, D)
        _pad_last(wt(params["ws_s"])),       # (L, Hs)   Hs = pad128(L // r)
        _pad_last(bf(params["bs_s"])),       # (1, Hs)
        _pad_first(wt(params["we_s"])),      # (Hs, L)
        bf(params["be_s"]),                  # (1, L)
        _pad_last(wt(params["ws_d"])),       # (D, Hd)   Hd = pad128(D // r)
        _pad_last(bf(params["bs_d"])),       # (1, Hd)
        _pad_first(wt(params["we_d"])),      # (Hd, D)
        bf(params["be_d"]),                  # (1, D)
    )


# ----------------------------------------------------------------------------
# Wrapper.
# ----------------------------------------------------------------------------
def _pick_batch_tile(B, L, D, itemsize, budget_bytes=16 << 20):
    """Largest batch tile whose double-buffered x+out blocks fit the budget,
    capped so there are >= 2 grid steps (pipelining + both v7x TensorCores)."""
    per_item = max(1, L * D * itemsize)
    tb = max(1, budget_bytes // (4 * per_item))      # 2 bufs x (x block + out block)
    if B >= 2:
        tb = min(tb, max(1, B // 2))
    tb = int(max(1, min(tb, B)))
    while B % tb:
        tb -= 1
    return tb


def caatt_forward(x, prep, *, batch_tile=None):
    B, L, D = x.shape
    tb = batch_tile or _pick_batch_tile(B, L, D, x.dtype.itemsize)
    assert B % tb == 0
    grid = (B // tb,)

    weight_bytes = sum(int(a.size) * a.dtype.itemsize for a in prep)
    hs = prep[6].shape[1]
    hd = prep[10].shape[1]
    cost = pl.CostEstimate(
        flops=int(2 * B * ((L + D) * (L + D) + 2 * L * hs + 2 * D * hd) + 4 * B * L * D),
        transcendentals=int(B * (L + D)),
        bytes_accessed=int(2 * B * L * D * x.dtype.itemsize + weight_bytes))

    block_bytes = tb * L * D * x.dtype.itemsize
    vmem_need = 4 * block_bytes + 2 * weight_bytes + (4 << 20)
    vmem_limit = int(min(64 << 20, max(24 << 20, 2 * vmem_need)))   # 64 MiB cap: v7x-safe

    x_spec = pl.BlockSpec((tb, L, D), lambda b: (b, 0, 0))
    out_spec = pl.BlockSpec((tb, L, D), lambda b: (b, 0, 0))

    def resident_spec(arr, single_buffer):
        nd = arr.ndim
        if single_buffer:
            return pl.BlockSpec(arr.shape, lambda b, _nd=nd: (0,) * _nd,
                                pipeline_mode=pl.Buffered(buffer_count=1))
        return pl.BlockSpec(arr.shape, lambda b, _nd=nd: (0,) * _nd)

    def run(single_buffer_weights):
        return pl.pallas_call(
            caatt_kernel,
            out_shape=jax.ShapeDtypeStruct((B, L, D), x.dtype),
            grid=grid,
            in_specs=[x_spec] + [resident_spec(a, single_buffer_weights) for a in prep],
            out_specs=out_spec,
            compiler_params=pltpu.CompilerParams(
                dimension_semantics=("parallel",),
                vmem_limit_bytes=vmem_limit),
            cost_estimate=cost,
        )(x, *prep)

    try:
        return run(True)
    except Exception:
        # TODO(synk): drop this fallback once pl.Buffered(1) single-buffered weight
        # residency is confirmed on the deployed jax version; grid-invariant index
        # maps still avoid re-fetching the weights each step.
        return run(False)


# ----------------------------------------------------------------------------
# Pure-JAX reference and PyTorch-style init.
# ----------------------------------------------------------------------------
def caatt_reference(x, p):
    B, L, D = x.shape
    s_pool = x.mean(axis=2)
    d_pool = x.mean(axis=1)
    y = jnp.concatenate([s_pool, d_pool], axis=1)
    y = jax.nn.relu(y @ p["w_f1"].T + p["b_f1"])
    x_s, x_d = y[:, :L], y[:, L:]
    g_s = jax.nn.sigmoid(jax.nn.relu(x_s @ p["ws_s"].T + p["bs_s"]) @ p["we_s"].T + p["be_s"])
    g_d = jax.nn.sigmoid(jax.nn.relu(x_d @ p["ws_d"].T + p["bs_d"]) @ p["we_d"].T + p["be_d"])
    return x * g_s[:, :, None] * g_d[:, None, :]


def init_params(key, max_len, input_dim, r):
    ks = jax.random.split(key, 10)

    def unif(k, shape, fan_in):
        bound = 1.0 / math.sqrt(fan_in)
        return jax.random.uniform(k, shape, jnp.float32, -bound, bound)

    LD = max_len + input_dim
    return {
        "w_f1": unif(ks[0], (LD, LD), LD),
        "b_f1": unif(ks[1], (LD,), LD),
        "ws_s": unif(ks[2], (max_len // r, max_len), max_len),
        "bs_s": unif(ks[3], (max_len // r,), max_len),
        "we_s": unif(ks[4], (max_len, max_len // r), max_len // r),
        "be_s": unif(ks[5], (max_len,), max_len // r),
        "ws_d": unif(ks[6], (input_dim // r, input_dim), input_dim),
        "bs_d": unif(ks[7], (input_dim // r,), input_dim),
        "we_d": unif(ks[8], (input_dim, input_dim // r), input_dim // r),
        "be_d": unif(ks[9], (input_dim,), input_dim // r),
    }


if __name__ == "__main__":
    B, L, D, r = 4, 16, 128, 4         # batch, max_len, emb_dim (lane-dense), SE reduction
    key = jax.random.PRNGKey(0)
    kx, kp = jax.random.split(key)

    x = jax.random.normal(kx, (B, L, D), jnp.float32)
    params = init_params(kp, L, D, r)

    # f32 HBM I/O path (tight numerical check).
    prep32 = preprocess_params(params, L, D, io_dtype=jnp.float32)
    out = jax.block_until_ready(caatt_forward(x, prep32))
    ref = jax.block_until_ready(caatt_reference(x, params))
    assert out.shape == (B, L, D), out.shape
    assert jnp.allclose(out, ref, rtol=1e-5, atol=1e-5), float(jnp.abs(out - ref).max())

    # bf16 HBM I/O path (halves HBM traffic; compute stays f32; looser check).
    prep16 = preprocess_params(params, L, D, io_dtype=jnp.bfloat16)
    x16 = x.astype(jnp.bfloat16)
    out16 = jax.block_until_ready(caatt_forward(x16, prep16))
    ref16 = caatt_reference(x16.astype(jnp.float32), params)
    assert out16.dtype == jnp.bfloat16
    assert jnp.allclose(out16.astype(jnp.float32), ref16, rtol=5e-2, atol=5e-2), \
        float(jnp.abs(out16.astype(jnp.float32) - ref16).max())

    print("KERNEL_OK")
</pallas_src>

<mosaic_0001>
module attributes {stable_mosaic.version = 11 : i64} {
  func.func @caatt_kernel(%arg0: i32, %arg1: memref<2x16x128xf32, #tpu.memory_space<vmem>>, %arg2: memref<16x16xf32, #tpu.memory_space<vmem>>, %arg3: memref<128x16xf32, #tpu.memory_space<vmem>>, %arg4: memref<16x128xf32, #tpu.memory_space<vmem>>, %arg5: memref<128x128xf32, #tpu.memory_space<vmem>>, %arg6: memref<1x16xf32, #tpu.memory_space<vmem>>, %arg7: memref<1x128xf32, #tpu.memory_space<vmem>>, %arg8: memref<16x128xf32, #tpu.memory_space<vmem>>, %arg9: memref<1x128xf32, #tpu.memory_space<vmem>>, %arg10: memref<128x16xf32, #tpu.memory_space<vmem>>, %arg11: memref<1x16xf32, #tpu.memory_space<vmem>>, %arg12: memref<128x128xf32, #tpu.memory_space<vmem>>, %arg13: memref<1x128xf32, #tpu.memory_space<vmem>>, %arg14: memref<128x128xf32, #tpu.memory_space<vmem>>, %arg15: memref<1x128xf32, #tpu.memory_space<vmem>>, %arg16: memref<2x16x128xf32, #tpu.memory_space<vmem>>) attributes {dimension_semantics = [#tpu.dimension_semantics<parallel>], iteration_bounds = array<i64: 2>, scalar_prefetch = 0 : i64, scratch_operands = 0 : i64, tpu.core_type = #tpu.core_type<tc>, window_params = [{transform_indices = @transform_0, window_bounds = array<i64: 2, 16, 128>}, {pipeline_mode = #tpu.pipeline_mode<synchronous>, transform_indices = @transform_1, window_bounds = array<i64: 16, 16>}, {pipeline_mode = #tpu.pipeline_mode<synchronous>, transform_indices = @transform_2, window_bounds = array<i64: 128, 16>}, {pipeline_mode = #tpu.pipeline_mode<synchronous>, transform_indices = @transform_3, window_bounds = array<i64: 16, 128>}, {pipeline_mode = #tpu.pipeline_mode<synchronous>, transform_indices = @transform_4, window_bounds = array<i64: 128, 128>}, {pipeline_mode = #tpu.pipeline_mode<synchronous>, transform_indices = @transform_5, window_bounds = array<i64: 1, 16>}, {pipeline_mode = #tpu.pipeline_mode<synchronous>, transform_indices = @transform_6, window_bounds = array<i64: 1, 128>}, {pipeline_mode = #tpu.pipeline_mode<synchronous>, transform_indices = @transform_7, window_bounds = array<i64: 16, 128>}, {pipeline_mode = #tpu.pipeline_mode<synchronous>, transform_indices = @transform_8, window_bounds = array<i64: 1, 128>}, {pipeline_mode = #tpu.pipeline_mode<synchronous>, transform_indices = @transform_9, window_bounds = array<i64: 128, 16>}, {pipeline_mode = #tpu.pipeline_mode<synchronous>, transform_indices = @transform_10, window_bounds = array<i64: 1, 16>}, {pipeline_mode = #tpu.pipeline_mode<synchronous>, transform_indices = @transform_11, window_bounds = array<i64: 128, 128>}, {pipeline_mode = #tpu.pipeline_mode<synchronous>, transform_indices = @transform_12, window_bounds = array<i64: 1, 128>}, {pipeline_mode = #tpu.pipeline_mode<synchronous>, transform_indices = @transform_13, window_bounds = array<i64: 128, 128>}, {pipeline_mode = #tpu.pipeline_mode<synchronous>, transform_indices = @transform_14, window_bounds = array<i64: 1, 128>}, {transform_indices = @transform_15, window_bounds = array<i64: 2, 16, 128>}]} {
    %c0 = arith.constant 0 : index
    %c0_0 = arith.constant 0 : index
    %c0_1 = arith.constant 0 : index
    %0 = vector.load %arg1[%c0, %c0_0, %c0_1] : memref<2x16x128xf32, #tpu.memory_space<vmem>>, vector<2x16x128xf32>
    %cst = arith.constant dense<0.000000e+00> : vector<2x16xf32>
    %1 = vector.multi_reduction <add>, %0, %cst [2] : vector<2x16x128xf32> to vector<2x16xf32>
    %cst_2 = arith.constant 7.812500e-03 : f32
    %2 = vector.broadcast %cst_2 : f32 to vector<2x16xf32>
    %3 = arith.mulf %1, %2 : vector<2x16xf32>
    %cst_3 = arith.constant dense<0.000000e+00> : vector<2x128xf32>
    %4 = vector.multi_reduction <add>, %0, %cst_3 [1] : vector<2x16x128xf32> to vector<2x128xf32>
    %cst_4 = arith.constant 6.250000e-02 : f32
    %5 = vector.broadcast %cst_4 : f32 to vector<2x128xf32>
    %6 = arith.mulf %4, %5 : vector<2x128xf32>
    %c0_5 = arith.constant 0 : index
    %c0_6 = arith.constant 0 : index
    %7 = vector.load %arg2[%c0_5, %c0_6] : memref<16x16xf32, #tpu.memory_space<vmem>>, vector<16x16xf32>
    %cst_7 = arith.constant dense<0.000000e+00> : vector<2x16xf32>
    %8 = tpu.matmul %3, %7, %cst_7 {dimension_numbers = #tpu.dot_dimension_numbers<[1], [0], [0], [1], [0, 0, 1, 1], [], []>} : vector<2x16xf32>, vector<16x16xf32>, vector<2x16xf32> -> vector<2x16xf32>
    %c0_8 = arith.constant 0 : index
    %c0_9 = arith.constant 0 : index
    %9 = vector.load %arg3[%c0_8, %c0_9] : memref<128x16xf32, #tpu.memory_space<vmem>>, vector<128x16xf32>
    %cst_10 = arith.constant dense<0.000000e+00> : vector<2x16xf32>
    %10 = tpu.matmul %6, %9, %cst_10 {dimension_numbers = #tpu.dot_dimension_numbers<[1], [0], [0], [1], [0, 0, 1, 1], [], []>} : vector<2x128xf32>, vector<128x16xf32>, vector<2x16xf32> -> vector<2x16xf32>
    %11 = arith.addf %8, %10 : vector<2x16xf32>
    %c0_11 = arith.constant 0 : index
    %c0_12 = arith.constant 0 : index
    %12 = vector.load %arg6[%c0_11, %c0_12] : memref<1x16xf32, #tpu.memory_space<vmem>>, vector<1x16xf32>
    %13 = vector.broadcast %12 : vector<1x16xf32> to vector<2x16xf32>
    %14 = arith.addf %11, %13 : vector<2x16xf32>
    %cst_13 = arith.constant 0.000000e+00 : f32
    %15 = vector.broadcast %cst_13 : f32 to vector<2x16xf32>
    %16 = arith.maximumf %14, %15 : vector<2x16xf32>
    %c0_14 = arith.constant 0 : index
    %c0_15 = arith.constant 0 : index
    %17 = vector.load %arg4[%c0_14, %c0_15] : memref<16x128xf32, #tpu.memory_space<vmem>>, vector<16x128xf32>
    %cst_16 = arith.constant dense<0.000000e+00> : vector<2x128xf32>
    %18 = tpu.matmul %3, %17, %cst_16 {dimension_numbers = #tpu.dot_dimension_numbers<[1], [0], [0], [1], [0, 0, 1, 1], [], []>} : vector<2x16xf32>, vector<16x128xf32>, vector<2x128xf32> -> vector<2x128xf32>
    %c0_17 = arith.constant 0 : index
    %c0_18 = arith.constant 0 : index
    %19 = vector.load %arg5[%c0_17, %c0_18] : memref<128x128xf32, #tpu.memory_space<vmem>>, vector<128x128xf32>
    %cst_19 = arith.constant dense<0.000000e+00> : vector<2x128xf32>
    %20 = tpu.matmul %6, %19, %cst_19 {dimension_numbers = #tpu.dot_dimension_numbers<[1], [0], [0], [1], [0, 0, 1, 1], [], []>} : vector<2x128xf32>, vector<128x128xf32>, vector<2x128xf32> -> vector<2x128xf32>
    %21 = arith.addf %18, %20 : vector<2x128xf32>
    %c0_20 = arith.constant 0 : index
    %c0_21 = arith.constant 0 : index
    %22 = vector.load %arg7[%c0_20, %c0_21] : memref<1x128xf32, #tpu.memory_space<vmem>>, vector<1x128xf32>
    %23 = vector.broadcast %22 : vector<1x128xf32> to vector<2x128xf32>
    %24 = arith.addf %21, %23 : vector<2x128xf32>
    %cst_22 = arith.constant 0.000000e+00 : f32
    %25 = vector.broadcast %cst_22 : f32 to vector<2x128xf32>
    %26 = arith.maximumf %24, %25 : vector<2x128xf32>
    %c0_23 = arith.constant 0 : index
    %c0_24 = arith.constant 0 : index
    %27 = vector.load %arg8[%c0_23, %c0_24] : memref<16x128xf32, #tpu.memory_space<vmem>>, vector<16x128xf32>
    %cst_25 = arith.constant dense<0.000000e+00> : vector<2x128xf32>
    %28 = tpu.matmul %16, %27, %cst_25 {dimension_numbers = #tpu.dot_dimension_numbers<[1], [0], [0], [1], [0, 0, 1, 1], [], []>} : vector<2x16xf32>, vector<16x128xf32>, vector<2x128xf32> -> vector<2x128xf32>
    %c0_26 = arith.constant 0 : index
    %c0_27 = arith.constant 0 : index
    %29 = vector.load %arg9[%c0_26, %c0_27] : memref<1x128xf32, #tpu.memory_space<vmem>>, vector<1x128xf32>
    %30 = vector.broadcast %29 : vector<1x128xf32> to vector<2x128xf32>
    %31 = arith.addf %28, %30 : vector<2x128xf32>
    %cst_28 = arith.constant 0.000000e+00 : f32
    %32 = vector.broadcast %cst_28 : f32 to vector<2x128xf32>
    %33 = arith.maximumf %31, %32 : vector<2x128xf32>
    %c0_29 = arith.constant 0 : index
    %c0_30 = arith.constant 0 : index
    %34 = vector.load %arg10[%c0_29, %c0_30] : memref<128x16xf32, #tpu.memory_space<vmem>>, vector<128x16xf32>
    %cst_31 = arith.constant dense<0.000000e+00> : vector<2x16xf32>
    %35 = tpu.matmul %33, %34, %cst_31 {dimension_numbers = #tpu.dot_dimension_numbers<[1], [0], [0], [1], [0, 0, 1, 1], [], []>} : vector<2x128xf32>, vector<128x16xf32>, vector<2x16xf32> -> vector<2x16xf32>
    %c0_32 = arith.constant 0 : index
    %c0_33 = arith.constant 0 : index
    %36 = vector.load %arg11[%c0_32, %c0_33] : memref<1x16xf32, #tpu.memory_space<vmem>>, vector<1x16xf32>
    %37 = vector.broadcast %36 : vector<1x16xf32> to vector<2x16xf32>
    %38 = arith.addf %35, %37 : vector<2x16xf32>
    %39 = arith.negf %38 : vector<2x16xf32>
    %40 = math.exp %39 : vector<2x16xf32>
    %cst_34 = arith.constant 1.000000e+00 : f32
    %41 = vector.broadcast %cst_34 : f32 to vector<2x16xf32>
    %42 = arith.addf %41, %40 : vector<2x16xf32>
    %43 = arith.divf %41, %42 : vector<2x16xf32>
    %c0_35 = arith.constant 0 : index
    %c0_36 = arith.constant 0 : index
    %44 = vector.load %arg12[%c0_35, %c0_36] : memref<128x128xf32, #tpu.memory_space<vmem>>, vector<128x128xf32>
    %cst_37 = arith.constant dense<0.000000e+00> : vector<2x128xf32>
    %45 = tpu.matmul %26, %44, %cst_37 {dimension_numbers = #tpu.dot_dimension_numbers<[1], [0], [0], [1], [0, 0, 1, 1], [], []>} : vector<2x128xf32>, vector<128x128xf32>, vector<2x128xf32> -> vector<2x128xf32>
    %c0_38 = arith.constant 0 : index
    %c0_39 = arith.constant 0 : index
    %46 = vector.load %arg13[%c0_38, %c0_39] : memref<1x128xf32, #tpu.memory_space<vmem>>, vector<1x128xf32>
    %47 = vector.broadcast %46 : vector<1x128xf32> to vector<2x128xf32>
    %48 = arith.addf %45, %47 : vector<2x128xf32>
    %cst_40 = arith.constant 0.000000e+00 : f32
    %49 = vector.broadcast %cst_40 : f32 to vector<2x128xf32>
    %50 = arith.maximumf %48, %49 : vector<2x128xf32>
    %c0_41 = arith.constant 0 : index
    %c0_42 = arith.constant 0 : index
    %51 = vector.load %arg14[%c0_41, %c0_42] : memref<128x128xf32, #tpu.memory_space<vmem>>, vector<128x128xf32>
    %cst_43 = arith.constant dense<0.000000e+00> : vector<2x128xf32>
    %52 = tpu.matmul %50, %51, %cst_43 {dimension_numbers = #tpu.dot_dimension_numbers<[1], [0], [0], [1], [0, 0, 1, 1], [], []>} : vector<2x128xf32>, vector<128x128xf32>, vector<2x128xf32> -> vector<2x128xf32>
    %c0_44 = arith.constant 0 : index
    %c0_45 = arith.constant 0 : index
    %53 = vector.load %arg15[%c0_44, %c0_45] : memref<1x128xf32, #tpu.memory_space<vmem>>, vector<1x128xf32>
    %54 = vector.broadcast %53 : vector<1x128xf32> to vector<2x128xf32>
    %55 = arith.addf %52, %54 : vector<2x128xf32>
    %56 = arith.negf %55 : vector<2x128xf32>
    %57 = math.exp %56 : vector<2x128xf32>
    %cst_46 = arith.constant 1.000000e+00 : f32
    %58 = vector.broadcast %cst_46 : f32 to vector<2x128xf32>
    %59 = arith.addf %58, %57 : vector<2x128xf32>
    %60 = arith.divf %58, %59 : vector<2x128xf32>
    %61 = vector.shape_cast %43 : vector<2x16xf32> to vector<2x16x1xf32>
    %62 = vector.broadcast %61 : vector<2x16x1xf32> to vector<2x16x128xf32>
    %63 = arith.mulf %0, %62 : vector<2x16x128xf32>
    %64 = vector.shape_cast %60 : vector<2x128xf32> to vector<2x1x128xf32>
    %65 = vector.broadcast %64 : vector<2x1x128xf32> to vector<2x16x128xf32>
    %66 = arith.mulf %63, %65 : vector<2x16x128xf32>
    %c0_47 = arith.constant 0 : index
    %c0_48 = arith.constant 0 : index
    %c0_49 = arith.constant 0 : index
    %67 = vector.load %arg16[%c0_47, %c0_48, %c0_49] : memref<2x16x128xf32, #tpu.memory_space<vmem>>, vector<2x16x128xf32>
    tpu.vector_store %arg16[%c0_47, %c0_48, %c0_49], %66 {strides = array<i32>} : memref<2x16x128xf32, #tpu.memory_space<vmem>>, vector<2x16x128xf32>,
    return
  }
  func.func @transform_0(%arg0: i32) -> (i32, i32, i32) {
    %c0_i32 = arith.constant 0 : i32
    %c0_i32_0 = arith.constant 0 : i32
    %c0_i32_1 = arith.constant 0 : i32
    return %arg0, %c0_i32, %c0_i32_0 : i32, i32, i32
  }
  func.func @transform_1(%arg0: i32) -> (i32, i32) {
    %c0_i32 = arith.constant 0 : i32
    %c0_i32_0 = arith.constant 0 : i32
    %c0_i32_1 = arith.constant 0 : i32
    return %c0_i32, %c0_i32_0 : i32, i32
  }
  func.func @transform_2(%arg0: i32) -> (i32, i32) {
    %c0_i32 = arith.constant 0 : i32
    %c0_i32_0 = arith.constant 0 : i32
    %c0_i32_1 = arith.constant 0 : i32
    return %c0_i32, %c0_i32_0 : i32, i32
  }
  func.func @transform_3(%arg0: i32) -> (i32, i32) {
    %c0_i32 = arith.constant 0 : i32
    %c0_i32_0 = arith.constant 0 : i32
    %c0_i32_1 = arith.constant 0 : i32
    return %c0_i32, %c0_i32_0 : i32, i32
  }
  func.func @transform_4(%arg0: i32) -> (i32, i32) {
    %c0_i32 = arith.constant 0 : i32
    %c0_i32_0 = arith.constant 0 : i32
    %c0_i32_1 = arith.constant 0 : i32
    return %c0_i32, %c0_i32_0 : i32, i32
  }
  func.func @transform_5(%arg0: i32) -> (i32, i32) {
    %c0_i32 = arith.constant 0 : i32
    %c0_i32_0 = arith.constant 0 : i32
    %c0_i32_1 = arith.constant 0 : i32
    return %c0_i32, %c0_i32_0 : i32, i32
  }
  func.func @transform_6(%arg0: i32) -> (i32, i32) {
    %c0_i32 = arith.constant 0 : i32
    %c0_i32_0 = arith.constant 0 : i32
    %c0_i32_1 = arith.constant 0 : i32
    return %c0_i32, %c0_i32_0 : i32, i32
  }
  func.func @transform_7(%arg0: i32) -> (i32, i32) {
    %c0_i32 = arith.constant 0 : i32
    %c0_i32_0 = arith.constant 0 : i32
    %c0_i32_1 = arith.constant 0 : i32
    return %c0_i32, %c0_i32_0 : i32, i32
  }
  func.func @transform_8(%arg0: i32) -> (i32, i32) {
    %c0_i32 = arith.constant 0 : i32
    %c0_i32_0 = arith.constant 0 : i32
    %c0_i32_1 = arith.constant 0 : i32
    return %c0_i32, %c0_i32_0 : i32, i32
  }
  func.func @transform_9(%arg0: i32) -> (i32, i32) {
    %c0_i32 = arith.constant 0 : i32
    %c0_i32_0 = arith.constant 0 : i32
    %c0_i32_1 = arith.constant 0 : i32
    return %c0_i32, %c0_i32_0 : i32, i32
  }
  func.func @transform_10(%arg0: i32) -> (i32, i32) {
    %c0_i32 = arith.constant 0 : i32
    %c0_i32_0 = arith.constant 0 : i32
    %c0_i32_1 = arith.constant 0 : i32
    return %c0_i32, %c0_i32_0 : i32, i32
  }
  func.func @transform_11(%arg0: i32) -> (i32, i32) {
    %c0_i32 = arith.constant 0 : i32
    %c0_i32_0 = arith.constant 0 : i32
    %c0_i32_1 = arith.constant 0 : i32
    return %c0_i32, %c0_i32_0 : i32, i32
  }
  func.func @transform_12(%arg0: i32) -> (i32, i32) {
    %c0_i32 = arith.constant 0 : i32
    %c0_i32_0 = arith.constant 0 : i32
    %c0_i32_1 = arith.constant 0 : i32
    return %c0_i32, %c0_i32_0 : i32, i32
  }
  func.func @transform_13(%arg0: i32) -> (i32, i32) {
    %c0_i32 = arith.constant 0 : i32
    %c0_i32_0 = arith.constant 0 : i32
    %c0_i32_1 = arith.constant 0 : i32
    return %c0_i32, %c0_i32_0 : i32, i32
  }
  func.func @transform_14(%arg0: i32) -> (i32, i32) {
    %c0_i32 = arith.constant 0 : i32
    %c0_i32_0 = arith.constant 0 : i32
    %c0_i32_1 = arith.constant 0 : i32
    return %c0_i32, %c0_i32_0 : i32, i32
  }
  func.func @transform_15(%arg0: i32) -> (i32, i32, i32) {
    %c0_i32 = arith.constant 0 : i32
    %c0_i32_0 = arith.constant 0 : i32
    %c0_i32_1 = arith.constant 0 : i32
    return %arg0, %c0_i32, %c0_i32_0 : i32, i32, i32
  }
}

module attributes {stable_mosaic.version = 11 : i64} {
  func.func @caatt_kernel(%arg0: i32, %arg1: memref<2x16x128xf32, #tpu.memory_space<vmem>>, %arg2: memref<16x16xf32, #tpu.memory_space<vmem>>, %arg3: memref<128x16xf32, #tpu.memory_space<vmem>>, %arg4: memref<16x128xf32, #tpu.memory_space<vmem>>, %arg5: memref<128x128xf32, #tpu.memory_space<vmem>>, %arg6: memref<1x16xf32, #tpu.memory_space<vmem>>, %arg7: memref<1x128xf32, #tpu.memory_space<vmem>>, %arg8: memref<16x128xf32, #tpu.memory_space<vmem>>, %arg9: memref<1x128xf32, #tpu.memory_space<vmem>>, %arg10: memref<128x16xf32, #tpu.memory_space<vmem>>, %arg11: memref<1x16xf32, #tpu.memory_space<vmem>>, %arg12: memref<128x128xf32, #tpu.memory_space<vmem>>, %arg13: memref<1x128xf32, #tpu.memory_space<vmem>>, %arg14: memref<128x128xf32, #tpu.memory_space<vmem>>, %arg15: memref<1x128xf32, #tpu.memory_space<vmem>>, %arg16: memref<2x16x128xf32, #tpu.memory_space<vmem>>) attributes {dimension_semantics = [#tpu.dimension_semantics<parallel>], iteration_bounds = array<i64: 2>, scalar_prefetch = 0 : i64, scratch_operands = 0 : i64, tpu.core_type = #tpu.core_type<tc>, window_params = [{transform_indices = @transform_0, window_bounds = array<i64: 2, 16, 128>}, {pipeline_mode = #tpu.pipeline_mode<synchronous>, transform_indices = @transform_1, window_bounds = array<i64: 16, 16>}, {pipeline_mode = #tpu.pipeline_mode<synchronous>, transform_indices = @transform_2, window_bounds = array<i64: 128, 16>}, {pipeline_mode = #tpu.pipeline_mode<synchronous>, transform_indices = @transform_3, window_bounds = array<i64: 16, 128>}, {pipeline_mode = #tpu.pipeline_mode<synchronous>, transform_indices = @transform_4, window_bounds = array<i64: 128, 128>}, {pipeline_mode = #tpu.pipeline_mode<synchronous>, transform_indices = @transform_5, window_bounds = array<i64: 1, 16>}, {pipeline_mode = #tpu.pipeline_mode<synchronous>, transform_indices = @transform_6, window_bounds = array<i64: 1, 128>}, {pipeline_mode = #tpu.pipeline_mode<synchronous>, transform_indices = @transform_7, window_bounds = array<i64: 16, 128>}, {pipeline_mode = #tpu.pipeline_mode<synchronous>, transform_indices = @transform_8, window_bounds = array<i64: 1, 128>}, {pipeline_mode = #tpu.pipeline_mode<synchronous>, transform_indices = @transform_9, window_bounds = array<i64: 128, 16>}, {pipeline_mode = #tpu.pipeline_mode<synchronous>, transform_indices = @transform_10, window_bounds = array<i64: 1, 16>}, {pipeline_mode = #tpu.pipeline_mode<synchronous>, transform_indices = @transform_11, window_bounds = array<i64: 128, 128>}, {pipeline_mode = #tpu.pipeline_mode<synchronous>, transform_indices = @transform_12, window_bounds = array<i64: 1, 128>}, {pipeline_mode = #tpu.pipeline_mode<synchronous>, transform_indices = @transform_13, window_bounds = array<i64: 128, 128>}, {pipeline_mode = #tpu.pipeline_mode<synchronous>, transform_indices = @transform_14, window_bounds = array<i64: 1, 128>}, {transform_indices = @transform_15, window_bounds = array<i64: 2, 16, 128>}]} {
    %c0 = arith.constant 0 : index
    %c0_0 = arith.constant 0 : index
    %c0_1 = arith.constant 0 : index
    %0 = vector.load %arg1[%c0, %c0_0, %c0_1] : memref<2x16x128xf32, #tpu.memory_space<vmem>>, vector<2x16x128xf32>
    %cst = arith.constant dense<0.000000e+00> : vector<2x16xf32>
    %1 = vector.multi_reduction <add>, %0, %cst [2] : vector<2x16x128xf32> to vector<2x16xf32>
    %cst_2 = arith.constant 7.812500e-03 : f32
    %2 = vector.broadcast %cst_2 : f32 to vector<2x16xf32>
    %3 = arith.mulf %1, %2 : vector<2x16xf32>
    %cst_3 = arith.constant dense<0.000000e+00> : vector<2x128xf32>
    %4 = vector.multi_reduction <add>, %0, %cst_3 [1] : vector<2x16x128xf32> to vector<2x128xf32>
    %cst_4 = arith.constant 6.250000e-02 : f32
    %5 = vector.broadcast %cst_4 : f32 to vector<2x128xf32>
    %6 = arith.mulf %4, %5 : vector<2x128xf32>
    %c0_5 = arith.constant 0 : index
    %c0_6 = arith.constant 0 : index
    %7 = vector.load %arg2[%c0_5, %c0_6] : memref<16x16xf32, #tpu.memory_space<vmem>>, vector<16x16xf32>
    %cst_7 = arith.constant dense<0.000000e+00> : vector<2x16xf32>
    %8 = tpu.matmul %3, %7, %cst_7 {dimension_numbers = #tpu.dot_dimension_numbers<[1], [0], [0], [1], [0, 0, 1, 1], [], []>} : vector<2x16xf32>, vector<16x16xf32>, vector<2x16xf32> -> vector<2x16xf32>
    %c0_8 = arith.constant 0 : index
    %c0_9 = arith.constant 0 : index
    %9 = vector.load %arg3[%c0_8, %c0_9] : memref<128x16xf32, #tpu.memory_space<vmem>>, vector<128x16xf32>
    %cst_10 = arith.constant dense<0.000000e+00> : vector<2x16xf32>
    %10 = tpu.matmul %6, %9, %cst_10 {dimension_numbers = #tpu.dot_dimension_numbers<[1], [0], [0], [1], [0, 0, 1, 1], [], []>} : vector<2x128xf32>, vector<128x16xf32>, vector<2x16xf32> -> vector<2x16xf32>
    %11 = arith.addf %8, %10 : vector<2x16xf32>
    %c0_11 = arith.constant 0 : index
    %c0_12 = arith.constant 0 : index
    %12 = vector.load %arg6[%c0_11, %c0_12] : memref<1x16xf32, #tpu.memory_space<vmem>>, vector<1x16xf32>
    %13 = vector.broadcast %12 : vector<1x16xf32> to vector<2x16xf32>
    %14 = arith.addf %11, %13 : vector<2x16xf32>
    %cst_13 = arith.constant 0.000000e+00 : f32
    %15 = vector.broadcast %cst_13 : f32 to vector<2x16xf32>
    %16 = arith.maximumf %14, %15 : vector<2x16xf32>
    %c0_14 = arith.constant 0 : index
    %c0_15 = arith.constant 0 : index
    %17 = vector.load %arg4[%c0_14, %c0_15] : memref<16x128xf32, #tpu.memory_space<vmem>>, vector<16x128xf32>
    %cst_16 = arith.constant dense<0.000000e+00> : vector<2x128xf32>
    %18 = tpu.matmul %3, %17, %cst_16 {dimension_numbers = #tpu.dot_dimension_numbers<[1], [0], [0], [1], [0, 0, 1, 1], [], []>} : vector<2x16xf32>, vector<16x128xf32>, vector<2x128xf32> -> vector<2x128xf32>
    %c0_17 = arith.constant 0 : index
    %c0_18 = arith.constant 0 : index
    %19 = vector.load %arg5[%c0_17, %c0_18] : memref<128x128xf32, #tpu.memory_space<vmem>>, vector<128x128xf32>
    %cst_19 = arith.constant dense<0.000000e+00> : vector<2x128xf32>
    %20 = tpu.matmul %6, %19, %cst_19 {dimension_numbers = #tpu.dot_dimension_numbers<[1], [0], [0], [1], [0, 0, 1, 1], [], []>} : vector<2x128xf32>, vector<128x128xf32>, vector<2x128xf32> -> vector<2x128xf32>
    %21 = arith.addf %18, %20 : vector<2x128xf32>
    %c0_20 = arith.constant 0 : index
    %c0_21 = arith.constant 0 : index
    %22 = vector.load %arg7[%c0_20, %c0_21] : memref<1x128xf32, #tpu.memory_space<vmem>>, vector<1x128xf32>
    %23 = vector.broadcast %22 : vector<1x128xf32> to vector<2x128xf32>
    %24 = arith.addf %21, %23 : vector<2x128xf32>
    %cst_22 = arith.constant 0.000000e+00 : f32
    %25 = vector.broadcast %cst_22 : f32 to vector<2x128xf32>
    %26 = arith.maximumf %24, %25 : vector<2x128xf32>
    %c0_23 = arith.constant 0 : index
    %c0_24 = arith.constant 0 : index
    %27 = vector.load %arg8[%c0_23, %c0_24] : memref<16x128xf32, #tpu.memory_space<vmem>>, vector<16x128xf32>
    %cst_25 = arith.constant dense<0.000000e+00> : vector<2x128xf32>
    %28 = tpu.matmul %16, %27, %cst_25 {dimension_numbers = #tpu.dot_dimension_numbers<[1], [0], [0], [1], [0, 0, 1, 1], [], []>} : vector<2x16xf32>, vector<16x128xf32>, vector<2x128xf32> -> vector<2x128xf32>
    %c0_26 = arith.constant 0 : index
    %c0_27 = arith.constant 0 : index
    %29 = vector.load %arg9[%c0_26, %c0_27] : memref<1x128xf32, #tpu.memory_space<vmem>>, vector<1x128xf32>
    %30 = vector.broadcast %29 : vector<1x128xf32> to vector<2x128xf32>
    %31 = arith.addf %28, %30 : vector<2x128xf32>
    %cst_28 = arith.constant 0.000000e+00 : f32
    %32 = vector.broadcast %cst_28 : f32 to vector<2x128xf32>
    %33 = arith.maximumf %31, %32 : vector<2x128xf32>
    %c0_29 = arith.constant 0 : index
    %c0_30 = arith.constant 0 : index
    %34 = vector.load %arg10[%c0_29, %c0_30] : memref<128x16xf32, #tpu.memory_space<vmem>>, vector<128x16xf32>
    %cst_31 = arith.constant dense<0.000000e+00> : vector<2x16xf32>
    %35 = tpu.matmul %33, %34, %cst_31 {dimension_numbers = #tpu.dot_dimension_numbers<[1], [0], [0], [1], [0, 0, 1, 1], [], []>} : vector<2x128xf32>, vector<128x16xf32>, vector<2x16xf32> -> vector<2x16xf32>
    %c0_32 = arith.constant 0 : index
    %c0_33 = arith.constant 0 : index
    %36 = vector.load %arg11[%c0_32, %c0_33] : memref<1x16xf32, #tpu.memory_space<vmem>>, vector<1x16xf32>
    %37 = vector.broadcast %36 : vector<1x16xf32> to vector<2x16xf32>
    %38 = arith.addf %35, %37 : vector<2x16xf32>
    %39 = arith.negf %38 : vector<2x16xf32>
    %40 = math.exp %39 : vector<2x16xf32>
    %cst_34 = arith.constant 1.000000e+00 : f32
    %41 = vector.broadcast %cst_34 : f32 to vector<2x16xf32>
    %42 = arith.addf %41, %40 : vector<2x16xf32>
    %43 = arith.divf %41, %42 : vector<2x16xf32>
    %c0_35 = arith.constant 0 : index
    %c0_36 = arith.constant 0 : index
    %44 = vector.load %arg12[%c0_35, %c0_36] : memref<128x128xf32, #tpu.memory_space<vmem>>, vector<128x128xf32>
    %cst_37 = arith.constant dense<0.000000e+00> : vector<2x128xf32>
    %45 = tpu.matmul %26, %44, %cst_37 {dimension_numbers = #tpu.dot_dimension_numbers<[1], [0], [0], [1], [0, 0, 1, 1], [], []>} : vector<2x128xf32>, vector<128x128xf32>, vector<2x128xf32> -> vector<2x128xf32>
    %c0_38 = arith.constant 0 : index
    %c0_39 = arith.constant 0 : index
    %46 = vector.load %arg13[%c0_38, %c0_39] : memref<1x128xf32, #tpu.memory_space<vmem>>, vector<1x128xf32>
    %47 = vector.broadcast %46 : vector<1x128xf32> to vector<2x128xf32>
    %48 = arith.addf %45, %47 : vector<2x128xf32>
    %cst_40 = arith.constant 0.000000e+00 : f32
    %49 = vector.broadcast %cst_40 : f32 to vector<2x128xf32>
    %50 = arith.maximumf %48, %49 : vector<2x128xf32>
    %c0_41 = arith.constant 0 : index
    %c0_42 = arith.constant 0 : index
    %51 = vector.load %arg14[%c0_41, %c0_42] : memref<128x128xf32, #tpu.memory_space<vmem>>, vector<128x128xf32>
    %cst_43 = arith.constant dense<0.000000e+00> : vector<2x128xf32>
    %52 = tpu.matmul %50, %51, %cst_43 {dimension_numbers = #tpu.dot_dimension_numbers<[1], [0], [0], [1], [0, 0, 1, 1], [], []>} : vector<2x128xf32>, vector<128x128xf32>, vector<2x128xf32> -> vector<2x128xf32>
    %c0_44 = arith.constant 0 : index
    %c0_45 = arith.constant 0 : index
    %53 = vector.load %arg15[%c0_44, %c0_45] : memref<1x128xf32, #tpu.memory_space<vmem>>, vector<1x128xf32>
    %54 = vector.broadcast %53 : vector<1x128xf32> to vector<2x128xf32>
    %55 = arith.addf %52, %54 : vector<2x128xf32>
    %56 = arith.negf %55 : vector<2x128xf32>
    %57 = math.exp %56 : vector<2x128xf32>
    %cst_46 = arith.constant 1.000000e+00 : f32
    %58 = vector.broadcast %cst_46 : f32 to vector<2x128xf32>
    %59 = arith.addf %58, %57 : vector<2x128xf32>
    %60 = arith.divf %58, %59 : vector<2x128xf32>
    %61 = vector.shape_cast %43 : vector<2x16xf32> to vector<2x16x1xf32>
    %62 = vector.broadcast %61 : vector<2x16x1xf32> to vector<2x16x128xf32>
    %63 = arith.mulf %0, %62 : vector<2x16x128xf32>
    %64 = vector.shape_cast %60 : vector<2x128xf32> to vector<2x1x128xf32>
    %65 = vector.broadcast %64 : vector<2x1x128xf32> to vector<2x16x128xf32>
    %66 = arith.mulf %63, %65 : vector<2x16x128xf32>
    %c0_47 = arith.constant 0 : index
    %c0_48 = arith.constant 0 : index
    %c0_49 = arith.constant 0 : index
    %67 = vector.load %arg16[%c0_47, %c0_48, %c0_49] : memref<2x16x128xf32, #tpu.memory_space<vmem>>, vector<2x16x128xf32>
    tpu.vector_store %arg16[%c0_47, %c0_48, %c0_49], %66 {strides = array<i32>} : memref<2x16x128xf32, #tpu.memory_space<vmem>>, vector<2x16x128xf32>,
    return
  }
  func.func @transform_0(%arg0: i32) -> (i32, i32, i32) {
    %c0_i32 = arith.constant 0 : i32
    %c0_i32_0 = arith.constant 0 : i32
    %c0_i32_1 = arith.constant 0 : i32
    return %arg0, %c0_i32, %c0_i32_0 : i32, i32, i32
  }
  func.func @transform_1(%arg0: i32) -> (i32, i32) {
    %c0_i32 = arith.constant 0 : i32
    %c0_i32_0 = arith.constant 0 : i32
    %c0_i32_1 = arith.constant 0 : i32
    return %c0_i32, %c0_i32_0 : i32, i32
  }
  func.func @transform_2(%arg0: i32) -> (i32, i32) {
    %c0_i32 = arith.constant 0 : i32
    %c0_i32_0 = arith.constant 0 : i32
    %c0_i32_1 = arith.constant 0 : i32
    return %c0_i32, %c0_i32_0 : i32, i32
  }
  func.func @transform_3(%arg0: i32) -> (i32, i32) {
    %c0_i32 = arith.constant 0 : i32
    %c0_i32_0 = arith.constant 0 : i32
    %c0_i32_1 = arith.constant 0 : i32
    return %c0_i32, %c0_i32_0 : i32, i32
  }
  func.func @transform_4(%arg0: i32) -> (i32, i32) {
    %c0_i32 = arith.constant 0 : i32
    %c0_i32_0 = arith.constant 0 : i32
    %c0_i32_1 = arith.constant 0 : i32
    return %c0_i32, %c0_i32_0 : i32, i32
  }
  func.func @transform_5(%arg0: i32) -> (i32, i32) {
    %c0_i32 = arith.constant 0 : i32
    %c0_i32_0 = arith.constant 0 : i32
    %c0_i32_1 = arith.constant 0 : i32
    return %c0_i32, %c0_i32_0 : i32, i32
  }
  func.func @transform_6(%arg0: i32) -> (i32, i32) {
    %c0_i32 = arith.constant 0 : i32
    %c0_i32_0 = arith.constant 0 : i32
    %c0_i32_1 = arith.constant 0 : i32
    return %c0_i32, %c0_i32_0 : i32, i32
  }
  func.func @transform_7(%arg0: i32) -> (i32, i32) {
    %c0_i32 = arith.constant 0 : i32
    %c0_i32_0 = arith.constant 0 : i32
    %c0_i32_1 = arith.constant 0 : i32
    return %c0_i32, %c0_i32_0 : i32, i32
  }
  func.func @transform_8(%arg0: i32) -> (i32, i32) {
    %c0_i32 = arith.constant 0 : i32
    %c0_i32_0 = arith.constant 0 : i32
    %c0_i32_1 = arith.constant 0 : i32
    return %c0_i32, %c0_i32_0 : i32, i32
  }
  func.func @transform_9(%arg0: i32) -> (i32, i32) {
    %c0_i32 = arith.constant 0 : i32
    %c0_i32_0 = arith.constant 0 : i32
    %c0_i32_1 = arith.constant 0 : i32
    return %c0_i32, %c0_i32_0 : i32, i32
  }
  func.func @transform_10(%arg0: i32) -> (i32, i32) {
    %c0_i32 = arith.constant 0 : i32
    %c0_i32_0 = arith.constant 0 : i32
    %c0_i32_1 = arith.constant 0 : i32
    return %c0_i32, %c0_i32_0 : i32, i32
  }
  func.func @transform_11(%arg0: i32) -> (i32, i32) {
    %c0_i32 = arith.constant 0 : i32
    %c0_i32_0 = arith.constant 0 : i32
    %c0_i32_1 = arith.constant 0 : i32
    return %c0_i32, %c0_i32_0 : i32, i32
  }
  func.func @transform_12(%arg0: i32) -> (i32, i32) {
    %c0_i32 = arith.constant 0 : i32
    %c0_i32_0 = arith.constant 0 : i32
    %c0_i32_1 = arith.constant 0 : i32
    return %c0_i32, %c0_i32_0 : i32, i32
  }
  func.func @transform_13(%arg0: i32) -> (i32, i32) {
    %c0_i32 = arith.constant 0 : i32
    %c0_i32_0 = arith.constant 0 : i32
    %c0_i32_1 = arith.constant 0 : i32
    return %c0_i32, %c0_i32_0 : i32, i32
  }
  func.func @transform_14(%arg0: i32) -> (i32, i32) {
    %c0_i32 = arith.constant 0 : i32
    %c0_i32_0 = arith.constant 0 : i32
    %c0_i32_1 = arith.constant 0 : i32
    return %c0_i32, %c0_i32_0 : i32, i32
  }
  func.func @transform_15(%arg0: i32) -> (i32, i32, i32) {
    %c0_i32 = arith.constant 0 : i32
    %c0_i32_0 = arith.constant 0 : i32
    %c0_i32_1 = arith.constant 0 : i32
    return %arg0, %c0_i32, %c0_i32_0 : i32, i32, i32
  }
}

</mosaic_0001>

<llo_original>
// kernel: tpu_custom_call.1
$region0: #{tpu_custom_call.1}
  #allocation0 [shape = 'u32[]', space=smem, size = 0x4, offset = 0x4, fixed_abs, tag = 'smem constant byte address 0x4 - core index']
  #allocation1 [shape = 'u32[144,128]{1,0:T(1,128)}', space=vmem, size = 0x12000, scoped, tag = 'internal scratch']
  %s0 = inlined_call_operand.hbm [shape: f32[4,16,128], index: 0, kind: input, shape index: {}]
  %s1 = inlined_call_operand.vmem [shape: f32[16,16], index: 1, kind: input, shape index: {}]
  %s2 = inlined_call_operand.vmem [shape: f32[128,16], index: 2, kind: input, shape index: {}]
  %s3 = inlined_call_operand.hbm [shape: f32[16,128], index: 3, kind: input, shape index: {}]
  %s4 = inlined_call_operand.vmem [shape: f32[128,128], index: 4, kind: input, shape index: {}]
  %s5 = inlined_call_operand.vmem [shape: f32[1,16], index: 5, kind: input, shape index: {}]
  %s6 = inlined_call_operand.vmem [shape: f32[1,128], index: 6, kind: input, shape index: {}]
  %s7 = inlined_call_operand.hbm [shape: f32[16,128], index: 7, kind: input, shape index: {}]
  %s8 = inlined_call_operand.vmem [shape: f32[1,128], index: 8, kind: input, shape index: {}]
  %s9 = inlined_call_operand.vmem [shape: f32[128,16], index: 9, kind: input, shape index: {}]
  %s10 = inlined_call_operand.vmem [shape: f32[1,16], index: 10, kind: input, shape index: {}]
  %s11 = inlined_call_operand.vmem [shape: f32[128,128], index: 11, kind: input, shape index: {}]
  %s12 = inlined_call_operand.vmem [shape: f32[1,128], index: 12, kind: input, shape index: {}]
  %s13 = inlined_call_operand.hbm [shape: f32[128,128], index: 13, kind: input, shape index: {}]
  %s14 = inlined_call_operand.vmem [shape: f32[1,128], index: 14, kind: input, shape index: {}]
  %s15 = inlined_call_operand.hbm [shape: f32[4,16,128], index: 15, kind: output, shape index: {}]
  %s16 = sld [smem:[#allocation0]]
  $region109: #{tpu_custom_call.1} parent=0
    _
  %s18 = ssub.s32 1, %s16
  %s19 = scalar_select 0, %s18, %s16
  $region1: #{tpu_custom_call.1} parent=0
    #allocation2 [shape = 'u8[32768]{0}', space=vmem, size = 0x8000, scoped, tag = 'input window, operand 0']
    #allocation3 [shape = 's32[2]{0}', space=sflag, size = 0x8, scoped, tag = 'scoped memory for tpu_custom_call.1']
    #allocation4 [shape = 's32[2]{0}', space=sflag, size = 0x8, scoped, tag = 'scoped memory for tpu_custom_call.1']
    #allocation5 [shape = 'u8[8192]{0}', space=vmem, size = 0x2000, scoped, tag = 'input window, operand 3, single buffered']
    #allocation6 [shape = 's32[1]{0}', space=sflag, size = 0x4, scoped, tag = 'scoped memory for tpu_custom_call.1']
    #allocation7 [shape = 'u8[8192]{0}', space=vmem, size = 0x2000, scoped, tag = 'input window, operand 7, single buffered']
    #allocation8 [shape = 'u8[65536]{0}', space=vmem, size = 0x10000, scoped, tag = 'input window, operand 13, single buffered']
    #allocation9 [shape = 's32[1]{0}', space=sflag, size = 0x4, scoped, tag = 'scoped memory for tpu_custom_call.1']
    #allocation10 [shape = 'u8[32768]{0}', space=vmem, size = 0x8000, scoped, tag = 'output window, operand 0']
    %20 = vsyncpa [#allocation3], 0
    %s21 = scalar_lea.sflag [#allocation3], 1
    %22 = vsyncpa %s21, 0
    %23 = vsyncpa [#allocation6], 0
    %24 = vsyncpa [#allocation9], 0
    %25 = vsyncpa [#allocation4], 0
    %s26 = scalar_lea.sflag [#allocation4], 1
    %27 = vsyncpa %s26, 0
    loop: start=0, step=1, limit=4
    $region2: #{tpu_custom_call.1} parent=1 // loop_pre_header
      _
    $region3: #{tpu_custom_call.1} parent=1 // loop_header
      %s29 = sphi 0, %s33
      %p30 = scmp.ge.s32.totalorder %s29, 4
      %s39 = sphi 0, %s41
      %s42 = sphi 0, %s39
      %s43 = sphi 0, %s42
      %s59 = sphi 0, %s43
      %s63 = sphi 0, %s63
      %s65 = sphi 0, %s63
      %s66 = sphi 0, %s65
      %s80 = sphi 0, %s66
      %s84 = sphi 0, %s84
      %s86 = sphi 0, %s84
      %s87 = sphi 0, %s86
      %s101 = sphi 0, %s87
      %s105 = sphi 0, %s105
      %s107 = sphi 0, %s105
      %s108 = sphi 0, %s107
      %s122 = sphi 0, %s108
      %s126 = sphi 0, %s126
      %s128 = sphi 0, %s126
      %s129 = sphi 0, %s128
      %s143 = sphi 0, %s129
      %s147 = sphi 0, %s147
      %s149 = sphi 0, %s147
      %s150 = sphi 0, %s149
      %s164 = sphi 0, %s150
      %s168 = sphi 0, %s168
      %s170 = sphi 0, %s168
      %s171 = sphi 0, %s170
      %s185 = sphi 0, %s171
      %s189 = sphi 0, %s189
      %s191 = sphi 0, %s189
      %s192 = sphi 0, %s191
      %s206 = sphi 0, %s192
      %s210 = sphi 0, %s210
      %s212 = sphi 0, %s210
      %s213 = sphi 0, %s212
      %s227 = sphi 0, %s213
      %s231 = sphi 0, %s231
      %s233 = sphi 0, %s231
      %s234 = sphi 0, %s233
      %s248 = sphi 0, %s234
      %s252 = sphi 0, %s252
      %s254 = sphi 0, %s252
      %s255 = sphi 0, %s254
      %s269 = sphi 0, %s255
      %s273 = sphi 0, %s273
      %s275 = sphi 0, %s273
      %s276 = sphi 0, %s275
      %s290 = sphi 0, %s276
      %s294 = sphi 0, %s294
      %s296 = sphi 0, %s294
      %s297 = sphi 0, %s296
      %s311 = sphi 0, %s297
      %s315 = sphi 0, %s315
      %s317 = sphi 0, %s315
      %s318 = sphi 0, %s317
      %s332 = sphi 0, %s318
      %s336 = sphi 0, %s336
      %s338 = sphi 0, %s336
      %s339 = sphi 0, %s338
      %s353 = sphi 0, %s339
      %s359 = sphi 0, %s361
      %s362 = sphi 0, %s359
      %s363 = sphi 0, %s362
      %s379 = sphi 0, %s363
    $region4: #{tpu_custom_call.1} parent=1 // loop_header_branch
      %32 = sbr.rel (%p30) target = $region8
    $region5: #{tpu_custom_call.1} parent=1 // loop_body
      %s34 = ssub.s32 %s29, 1
      %s35 = ssub.s32 %s29, 2
      %s36 = sadd.s32 %s29, 1
      %s37 = ssub.s32 %s29, %s36
      %p38 = scmp.eq.s32.totalorder %s37, 0
      %s40 = sadd.s32 %s39, 1
      %s41 = scalar_select %p38, %s39, %s40
      %p44 = pneg %p38
      %p45 = scmp.eq.s32.totalorder %s29, 1
      %p46 = por %p44, %p45
      %p47 = scmp.ne.s32.totalorder %s39, %s42
      %p48 = scmp.eq.s32.totalorder %s29, 0
      %p49 = por %p47, %p48
      %p50 = scmp.ne.s32.totalorder %s39, %s42
      %p51 = scmp.eq.s32.totalorder %s34, 1
      %p52 = por %p50, %p51
      %p53 = scmp.ne.s32.totalorder %s42, %s43
      %p54 = scmp.eq.s32.totalorder %s34, 0
      %p55 = por %p53, %p54
      %p56 = scmp.ne.s32.totalorder %s42, %s43
      %p57 = scmp.eq.s32.totalorder %s35, 1
      %p58 = por %p56, %p57
      %p60 = scmp.ne.s32.totalorder %s43, %s59
      %p61 = scmp.eq.s32.totalorder %s35, 0
      %p62 = por %p60, %p61
      %s64 = sadd.s32 %s63, 1
      %p67 = scmp.eq.s32.totalorder %s29, 1
      %p68 = scmp.ne.s32.totalorder %s63, %s65
      %p69 = scmp.eq.s32.totalorder %s29, 0
      %p70 = por %p68, %p69
      %p71 = scmp.ne.s32.totalorder %s63, %s65
      %p72 = scmp.eq.s32.totalorder %s34, 1
      %p73 = por %p71, %p72
      %p74 = scmp.ne.s32.totalorder %s65, %s66
      %p75 = scmp.eq.s32.totalorder %s34, 0
      %p76 = por %p74, %p75
      %p77 = scmp.ne.s32.totalorder %s65, %s66
      %p78 = scmp.eq.s32.totalorder %s35, 1
      %p79 = por %p77, %p78
      %p81 = scmp.ne.s32.totalorder %s66, %s80
      %p82 = scmp.eq.s32.totalorder %s35, 0
      %p83 = por %p81, %p82
      %s85 = sadd.s32 %s84, 1
      %p88 = scmp.eq.s32.totalorder %s29, 1
      %p89 = scmp.ne.s32.totalorder %s84, %s86
      %p90 = scmp.eq.s32.totalorder %s29, 0
      %p91 = por %p89, %p90
      %p92 = scmp.ne.s32.totalorder %s84, %s86
      %p93 = scmp.eq.s32.totalorder %s34, 1
      %p94 = por %p92, %p93
      %p95 = scmp.ne.s32.totalorder %s86, %s87
      %p96 = scmp.eq.s32.totalorder %s34, 0
      %p97 = por %p95, %p96
      %p98 = scmp.ne.s32.totalorder %s86, %s87
      %p99 = scmp.eq.s32.totalorder %s35, 1
      %p100 = por %p98, %p99
      %p102 = scmp.ne.s32.totalorder %s87, %s101
      %p103 = scmp.eq.s32.totalorder %s35, 0
      %p104 = por %p102, %p103
      %s106 = sadd.s32 %s105, 1
      %p109 = scmp.eq.s32.totalorder %s29, 1
      %p110 = scmp.ne.s32.totalorder %s105, %s107
      %p111 = scmp.eq.s32.totalorder %s29, 0
      %p112 = por %p110, %p111
      %p113 = scmp.ne.s32.totalorder %s105, %s107
      %p114 = scmp.eq.s32.totalorder %s34, 1
      %p115 = por %p113, %p114
      %p116 = scmp.ne.s32.totalorder %s107, %s108
      %p117 = scmp.eq.s32.totalorder %s34, 0
      %p118 = por %p116, %p117
      %p119 = scmp.ne.s32.totalorder %s107, %s108
      %p120 = scmp.eq.s32.totalorder %s35, 1
      %p121 = por %p119, %p120
      %p123 = scmp.ne.s32.totalorder %s108, %s122
      %p124 = scmp.eq.s32.totalorder %s35, 0
      %p125 = por %p123, %p124
      %s127 = sadd.s32 %s126, 1
      %p130 = scmp.eq.s32.totalorder %s29, 1
      %p131 = scmp.ne.s32.totalorder %s126, %s128
      %p132 = scmp.eq.s32.totalorder %s29, 0
      %p133 = por %p131, %p132
      %p134 = scmp.ne.s32.totalorder %s126, %s128
      %p135 = scmp.eq.s32.totalorder %s34, 1
      %p136 = por %p134, %p135
      %p137 = scmp.ne.s32.totalorder %s128, %s129
      %p138 = scmp.eq.s32.totalorder %s34, 0
      %p139 = por %p137, %p138
      %p140 = scmp.ne.s32.totalorder %s128, %s129
      %p141 = scmp.eq.s32.totalorder %s35, 1
      %p142 = por %p140, %p141
      %p144 = scmp.ne.s32.totalorder %s129, %s143
      %p145 = scmp.eq.s32.totalorder %s35, 0
      %p146 = por %p144, %p145
      %s148 = sadd.s32 %s147, 1
      %p151 = scmp.eq.s32.totalorder %s29, 1
      %p152 = scmp.ne.s32.totalorder %s147, %s149
      %p153 = scmp.eq.s32.totalorder %s29, 0
      %p154 = por %p152, %p153
      %p155 = scmp.ne.s32.totalorder %s147, %s149
      %p156 = scmp.eq.s32.totalorder %s34, 1
      %p157 = por %p155, %p156
      %p158 = scmp.ne.s32.totalorder %s149, %s150
      %p159 = scmp.eq.s32.totalorder %s34, 0
      %p160 = por %p158, %p159
      %p161 = scmp.ne.s32.totalorder %s149, %s150
      %p162 = scmp.eq.s32.totalorder %s35, 1
      %p163 = por %p161, %p162
      %p165 = scmp.ne.s32.totalorder %s150, %s164
      %p166 = scmp.eq.s32.totalorder %s35, 0
      %p167 = por %p165, %p166
      %s169 = sadd.s32 %s168, 1
      %p172 = scmp.eq.s32.totalorder %s29, 1
      %p173 = scmp.ne.s32.totalorder %s168, %s170
      %p174 = scmp.eq.s32.totalorder %s29, 0
      %p175 = por %p173, %p174
      %p176 = scmp.ne.s32.totalorder %s168, %s170
      %p177 = scmp.eq.s32.totalorder %s34, 1
      %p178 = por %p176, %p177
      %p179 = scmp.ne.s32.totalorder %s170, %s171
      %p180 = scmp.eq.s32.totalorder %s34, 0
      %p181 = por %p179, %p180
      %p182 = scmp.ne.s32.totalorder %s170, %s171
      %p183 = scmp.eq.s32.totalorder %s35, 1
      %p184 = por %p182, %p183
      %p186 = scmp.ne.s32.totalorder %s171, %s185
      %p187 = scmp.eq.s32.totalorder %s35, 0
      %p188 = por %p186, %p187
      %s190 = sadd.s32 %s189, 1
      %p193 = scmp.eq.s32.totalorder %s29, 1
      %p194 = scmp.ne.s32.totalorder %s189, %s191
      %p195 = scmp.eq.s32.totalorder %s29, 0
      %p196 = por %p194, %p195
      %p197 = scmp.ne.s32.totalorder %s189, %s191
      %p198 = scmp.eq.s32.totalorder %s34, 1
      %p199 = por %p197, %p198
      %p200 = scmp.ne.s32.totalorder %s191, %s192
      %p201 = scmp.eq.s32.totalorder %s34, 0
      %p202 = por %p200, %p201
      %p203 = scmp.ne.s32.totalorder %s191, %s192
      %p204 = scmp.eq.s32.totalorder %s35, 1
      %p205 = por %p203, %p204
      %p207 = scmp.ne.s32.totalorder %s192, %s206
      %p208 = scmp.eq.s32.totalorder %s35, 0
      %p209 = por %p207, %p208
      %s211 = sadd.s32 %s210, 1
      %p214 = scmp.eq.s32.totalorder %s29, 1
      %p215 = scmp.ne.s32.totalorder %s210, %s212
      %p216 = scmp.eq.s32.totalorder %s29, 0
      %p217 = por %p215, %p216
      %p218 = scmp.ne.s32.totalorder %s210, %s212
      %p219 = scmp.eq.s32.totalorder %s34, 1
      %p220 = por %p218, %p219
      %p221 = scmp.ne.s32.totalorder %s212, %s213
      %p222 = scmp.eq.s32.totalorder %s34, 0
      %p223 = por %p221, %p222
      %p224 = scmp.ne.s32.totalorder %s212, %s213
      %p225 = scmp.eq.s32.totalorder %s35, 1
      %p226 = por %p224, %p225
      %p228 = scmp.ne.s32.totalorder %s213, %s227
      %p229 = scmp.eq.s32.totalorder %s35, 0
      %p230 = por %p228, %p229
      %s232 = sadd.s32 %s231, 1
      %p235 = scmp.eq.s32.totalorder %s29, 1
      %p236 = scmp.ne.s32.totalorder %s231, %s233
      %p237 = scmp.eq.s32.totalorder %s29, 0
      %p238 = por %p236, %p237
      %p239 = scmp.ne.s32.totalorder %s231, %s233
      %p240 = scmp.eq.s32.totalorder %s34, 1
      %p241 = por %p239, %p240
      %p242 = scmp.ne.s32.totalorder %s233, %s234
      %p243 = scmp.eq.s32.totalorder %s34, 0
      %p244 = por %p242, %p243
      %p245 = scmp.ne.s32.totalorder %s233, %s234
      %p246 = scmp.eq.s32.totalorder %s35, 1
      %p247 = por %p245, %p246
      %p249 = scmp.ne.s32.totalorder %s234, %s248
      %p250 = scmp.eq.s32.totalorder %s35, 0
      %p251 = por %p249, %p250
      %s253 = sadd.s32 %s252, 1
      %p256 = scmp.eq.s32.totalorder %s29, 1
      %p257 = scmp.ne.s32.totalorder %s252, %s254
      %p258 = scmp.eq.s32.totalorder %s29, 0
      %p259 = por %p257, %p258
      %p260 = scmp.ne.s32.totalorder %s252, %s254
      %p261 = scmp.eq.s32.totalorder %s34, 1
      %p262 = por %p260, %p261
      %p263 = scmp.ne.s32.totalorder %s254, %s255
      %p264 = scmp.eq.s32.totalorder %s34, 0
      %p265 = por %p263, %p264
      %p266 = scmp.ne.s32.totalorder %s254, %s255
      %p267 = scmp.eq.s32.totalorder %s35, 1
      %p268 = por %p266, %p267
      %p270 = scmp.ne.s32.totalorder %s255, %s269
      %p271 = scmp.eq.s32.totalorder %s35, 0
      %p272 = por %p270, %p271
      %s274 = sadd.s32 %s273, 1
      %p277 = scmp.eq.s32.totalorder %s29, 1
      %p278 = scmp.ne.s32.totalorder %s273, %s275
      %p279 = scmp.eq.s32.totalorder %s29, 0
      %p280 = por %p278, %p279
      %p281 = scmp.ne.s32.totalorder %s273, %s275
      %p282 = scmp.eq.s32.totalorder %s34, 1
      %p283 = por %p281, %p282
      %p284 = scmp.ne.s32.totalorder %s275, %s276
      %p285 = scmp.eq.s32.totalorder %s34, 0
      %p286 = por %p284, %p285
      %p287 = scmp.ne.s32.totalorder %s275, %s276
      %p288 = scmp.eq.s32.totalorder %s35, 1
      %p289 = por %p287, %p288
      %p291 = scmp.ne.s32.totalorder %s276, %s290
      %p292 = scmp.eq.s32.totalorder %s35, 0
      %p293 = por %p291, %p292
      %s295 = sadd.s32 %s294, 1
      %p298 = scmp.eq.s32.totalorder %s29, 1
      %p299 = scmp.ne.s32.totalorder %s294, %s296
      %p300 = scmp.eq.s32.totalorder %s29, 0
      %p301 = por %p299, %p300
      %p302 = scmp.ne.s32.totalorder %s294, %s296
      %p303 = scmp.eq.s32.totalorder %s34, 1
      %p304 = por %p302, %p303
      %p305 = scmp.ne.s32.totalorder %s296, %s297
      %p306 = scmp.eq.s32.totalorder %s34, 0
      %p307 = por %p305, %p306
      %p308 = scmp.ne.s32.totalorder %s296, %s297
      %p309 = scmp.eq.s32.totalorder %s35, 1
      %p310 = por %p308, %p309
      %p312 = scmp.ne.s32.totalorder %s297, %s311
      %p313 = scmp.eq.s32.totalorder %s35, 0
      %p314 = por %p312, %p313
      %s316 = sadd.s32 %s315, 1
      %p319 = scmp.eq.s32.totalorder %s29, 1
      %p320 = scmp.ne.s32.totalorder %s315, %s317
      %p321 = scmp.eq.s32.totalorder %s29, 0
      %p322 = por %p320, %p321
      %p323 = scmp.ne.s32.totalorder %s315, %s317
      %p324 = scmp.eq.s32.totalorder %s34, 1
      %p325 = por %p323, %p324
      %p326 = scmp.ne.s32.totalorder %s317, %s318
      %p327 = scmp.eq.s32.totalorder %s34, 0
      %p328 = por %p326, %p327
      %p329 = scmp.ne.s32.totalorder %s317, %s318
      %p330 = scmp.eq.s32.totalorder %s35, 1
      %p331 = por %p329, %p330
      %p333 = scmp.ne.s32.totalorder %s318, %s332
      %p334 = scmp.eq.s32.totalorder %s35, 0
      %p335 = por %p333, %p334
      %s337 = sadd.s32 %s336, 1
      %p340 = scmp.eq.s32.totalorder %s29, 1
      %p341 = scmp.ne.s32.totalorder %s336, %s338
      %p342 = scmp.eq.s32.totalorder %s29, 0
      %p343 = por %p341, %p342
      %p344 = scmp.ne.s32.totalorder %s336, %s338
      %p345 = scmp.eq.s32.totalorder %s34, 1
      %p346 = por %p344, %p345
      %p347 = scmp.ne.s32.totalorder %s338, %s339
      %p348 = scmp.eq.s32.totalorder %s34, 0
      %p349 = por %p347, %p348
      %p350 = scmp.ne.s32.totalorder %s338, %s339
      %p351 = scmp.eq.s32.totalorder %s35, 1
      %p352 = por %p350, %p351
      %p354 = scmp.ne.s32.totalorder %s339, %s353
      %p355 = scmp.eq.s32.totalorder %s35, 0
      %p356 = por %p354, %p355
      %s357 = ssub.s32 %s29, %s36
      %p358 = scmp.eq.s32.totalorder %s357, 0
      %s360 = sadd.s32 %s359, 1
      %s361 = scalar_select %p358, %s359, %s360
      %p364 = pneg %p358
      %p365 = scmp.eq.s32.totalorder %s29, 1
      %p366 = por %p364, %p365
      %p367 = scmp.ne.s32.totalorder %s359, %s362
      %p368 = scmp.eq.s32.totalorder %s29, 0
      %p369 = por %p367, %p368
      %p370 = scmp.ne.s32.totalorder %s359, %s362
      %p371 = scmp.eq.s32.totalorder %s34, 1
      %p372 = por %p370, %p371
      %p373 = scmp.ne.s32.totalorder %s362, %s363
      %p374 = scmp.eq.s32.totalorder %s34, 0
      %p375 = por %p373, %p374
      %p376 = scmp.ne.s32.totalorder %s362, %s363
      %p377 = scmp.eq.s32.totalorder %s35, 1
      %p378 = por %p376, %p377
      %p380 = scmp.ne.s32.totalorder %s363, %s379
      %p381 = scmp.eq.s32.totalorder %s35, 0
      %p382 = por %p380, %p381
      %p383 = scmp.le.s32.totalorder 1, %s29
      %p384 = scmp.lt.s32.totalorder %s29, 3
      %p385 = pnand %p383, %p384
      %p386 = pneg %p385
      // Predicated region
      $region9: #{tpu_custom_call.1} parent=5 // pred_check
        _
      $region10: #{tpu_custom_call.1} parent=5 // pred_check_branch
        %388 = sbr.rel (%p385) target = $region12
      $region11: #{tpu_custom_call.1} parent=5 // pred_region
        %s389 = ssub.s32 %s29, 1
        // Predicated region
        $region13: #{tpu_custom_call.1} parent=11 // pred_check
          %p390 = pneg %p76
        $region14: #{tpu_custom_call.1} parent=11 // pred_check_branch
          %392 = sbr.rel (%p390) target = $region16
        $region15: #{tpu_custom_call.1} parent=11 // pred_region
          _
        $region16: #{tpu_custom_call.1} parent=11 // pred_fallthru
          _
        // Predicated region
        $region17: #{tpu_custom_call.1} parent=11 // pred_check
          %p393 = pneg %p97
        $region18: #{tpu_custom_call.1} parent=11 // pred_check_branch
          %395 = sbr.rel (%p393) target = $region20
        $region19: #{tpu_custom_call.1} parent=11 // pred_region
          _
        $region20: #{tpu_custom_call.1} parent=11 // pred_fallthru
          _
        // Predicated region
        $region21: #{tpu_custom_call.1} parent=11 // pred_check
          %p396 = pneg %p118
        $region22: #{tpu_custom_call.1} parent=11 // pred_check_branch
          %398 = sbr.rel (%p396) target = $region24
        $region23: #{tpu_custom_call.1} parent=11 // pred_region
          %s400 = ssub.s32 256, 256
          %401 = vsyncadd [#allocation6], %s400
          %s402 = sshll.u32 [#allocation5], 4
          %s403 = int_to_ptr.vmem [resolvable:$true] %s402
          %408 = dma.hbm_to_vmem [thread:$0]  %s3, 256, %s403, [#allocation6], 128, 128, 8
        $region24: #{tpu_custom_call.1} parent=11 // pred_fallthru
          _
        // Predicated region
        $region25: #{tpu_custom_call.1} parent=11 // pred_check
          %p409 = pneg %p139
        $region26: #{tpu_custom_call.1} parent=11 // pred_check_branch
          %411 = sbr.rel (%p409) target = $region28
        $region27: #{tpu_custom_call.1} parent=11 // pred_region
          _
        $region28: #{tpu_custom_call.1} parent=11 // pred_fallthru
          _
        // Predicated region
        $region29: #{tpu_custom_call.1} parent=11 // pred_check
          %p412 = pneg %p160
        $region30: #{tpu_custom_call.1} parent=11 // pred_check_branch
          %414 = sbr.rel (%p412) target = $region32
        $region31: #{tpu_custom_call.1} parent=11 // pred_region
          _
        $region32: #{tpu_custom_call.1} parent=11 // pred_fallthru
          _
        // Predicated region
        $region33: #{tpu_custom_call.1} parent=11 // pred_check
          %p415 = pneg %p181
        $region34: #{tpu_custom_call.1} parent=11 // pred_check_branch
          %417 = sbr.rel (%p415) target = $region36
        $region35: #{tpu_custom_call.1} parent=11 // pred_region
          _
        $region36: #{tpu_custom_call.1} parent=11 // pred_fallthru
          _
        // Predicated region
        $region37: #{tpu_custom_call.1} parent=11 // pred_check
          %p418 = pneg %p202
        $region38: #{tpu_custom_call.1} parent=11 // pred_check_branch
          %420 = sbr.rel (%p418) target = $region40
        $region39: #{tpu_custom_call.1} parent=11 // pred_region
          %s422 = ssub.s32 256, 256
          %423 = vsyncadd [#allocation6], %s422
          %s424 = sshll.u32 [#allocation7], 4
          %s425 = int_to_ptr.vmem [resolvable:$true] %s424
          %430 = dma.hbm_to_vmem [thread:$0]  %s7, 256, %s425, [#allocation6], 128, 128, 8
        $region40: #{tpu_custom_call.1} parent=11 // pred_fallthru
          _
        // Predicated region
        $region41: #{tpu_custom_call.1} parent=11 // pred_check
          %p431 = pneg %p223
        $region42: #{tpu_custom_call.1} parent=11 // pred_check_branch
          %433 = sbr.rel (%p431) target = $region44
        $region43: #{tpu_custom_call.1} parent=11 // pred_region
          _
        $region44: #{tpu_custom_call.1} parent=11 // pred_fallthru
          _
        // Predicated region
        $region45: #{tpu_custom_call.1} parent=11 // pred_check
          %p434 = pneg %p244
        $region46: #{tpu_custom_call.1} parent=11 // pred_check_branch
          %436 = sbr.rel (%p434) target = $region48
        $region47: #{tpu_custom_call.1} parent=11 // pred_region
          _
        $region48: #{tpu_custom_call.1} parent=11 // pred_fallthru
          _
        // Predicated region
        $region49: #{tpu_custom_call.1} parent=11 // pred_check
          %p437 = pneg %p265
        $region50: #{tpu_custom_call.1} parent=11 // pred_check_branch
          %439 = sbr.rel (%p437) target = $region52
        $region51: #{tpu_custom_call.1} parent=11 // pred_region
          _
        $region52: #{tpu_custom_call.1} parent=11 // pred_fallthru
          _
        // Predicated region
        $region53: #{tpu_custom_call.1} parent=11 // pred_check
          %p440 = pneg %p286
        $region54: #{tpu_custom_call.1} parent=11 // pred_check_branch
          %442 = sbr.rel (%p440) target = $region56
        $region55: #{tpu_custom_call.1} parent=11 // pred_region
          _
        $region56: #{tpu_custom_call.1} parent=11 // pred_fallthru
          _
        // Predicated region
        $region57: #{tpu_custom_call.1} parent=11 // pred_check
          %p443 = pneg %p307
        $region58: #{tpu_custom_call.1} parent=11 // pred_check_branch
          %445 = sbr.rel (%p443) target = $region60
        $region59: #{tpu_custom_call.1} parent=11 // pred_region
          _
        $region60: #{tpu_custom_call.1} parent=11 // pred_fallthru
          _
        // Predicated region
        $region61: #{tpu_custom_call.1} parent=11 // pred_check
          %p446 = pneg %p328
        $region62: #{tpu_custom_call.1} parent=11 // pred_check_branch
          %448 = sbr.rel (%p446) target = $region64
        $region63: #{tpu_custom_call.1} parent=11 // pred_region
          %s450 = ssub.s32 2048, 2048
          %451 = vsyncadd [#allocation9], %s450
          %s452 = sshll.u32 [#allocation8], 4
          %s453 = int_to_ptr.vmem [resolvable:$true] %s452
          %458 = dma.hbm_to_vmem [thread:$0]  %s13, 2048, %s453, [#allocation9], 128, 128, 8
        $region64: #{tpu_custom_call.1} parent=11 // pred_fallthru
          _
        // Predicated region
        $region65: #{tpu_custom_call.1} parent=11 // pred_check
          %p459 = pneg %p349
        $region66: #{tpu_custom_call.1} parent=11 // pred_check_branch
          %461 = sbr.rel (%p459) target = $region68
        $region67: #{tpu_custom_call.1} parent=11 // pred_region
          _
        $region68: #{tpu_custom_call.1} parent=11 // pred_fallthru
          _
      $region12: #{tpu_custom_call.1} parent=5 // pred_fallthru
        _
      %p462 = scmp.lt.s32.totalorder %s29, 2
      // Predicated region
      $region69: #{tpu_custom_call.1} parent=5 // pred_check
        %p463 = pneg %p462
      $region70: #{tpu_custom_call.1} parent=5 // pred_check_branch
        %465 = sbr.rel (%p463) target = $region72
      $region71: #{tpu_custom_call.1} parent=5 // pred_region
        // Predicated region
        $region73: #{tpu_custom_call.1} parent=71 // pred_check
          %p466 = pneg %p49
        $region74: #{tpu_custom_call.1} parent=71 // pred_check_branch
          %468 = sbr.rel (%p466) target = $region76
        $region75: #{tpu_custom_call.1} parent=71 // pred_region
          %s469 = sand.u32 %s39, 1
          %s470 = scalar_lea.sflag [#allocation3], %s469
          %s471 = sand.u32 %s39, 1
          %s472 = smul.addr %s471, 32
          %s473 = scalar_lea.vmem [#allocation2], %s472
          %s474 = smul.u32 2, %s29
          %s476 = ssub.s32 512, 512
          %477 = vsyncadd %s470, %s476
          %s478 = smul.addr %s474, 2
          %s479 = smul.addr %s478, 128
          %s480 = scalar_lea.hbm %s0, %s479
          %s481 = sshll.u32 %s473, 4
          %s482 = int_to_ptr.vmem [resolvable:$true] %s481
          %487 = dma.hbm_to_vmem [thread:$0]  %s480, 512, %s482, %s470, 128, 128, 8
        $region76: #{tpu_custom_call.1} parent=71 // pred_fallthru
          _
      $region72: #{tpu_custom_call.1} parent=5 // pred_fallthru
        _
      %p488 = scmp.le.s32.totalorder 1, %s29
      %p489 = scmp.lt.s32.totalorder %s29, 3
      %p490 = pnand %p488, %p489
      %p491 = pneg %p490
      // Predicated region
      $region77: #{tpu_custom_call.1} parent=5 // pred_check
        _
      $region78: #{tpu_custom_call.1} parent=5 // pred_check_branch
        %493 = sbr.rel (%p490) target = $region80
      $region79: #{tpu_custom_call.1} parent=5 // pred_region
        %s494 = ssub.s32 %s29, 1
        %s495 = sand.u32 %s42, 1
        %s496 = scalar_lea.sflag [#allocation3], %s495
        %s497 = sand.u32 %s42, 1
        %s498 = smul.addr %s497, 32
        %s499 = scalar_lea.vmem [#allocation2], %s498
        // Predicated region
        $region81: #{tpu_custom_call.1} parent=79 // pred_check
          %p500 = pneg %p55
        $region82: #{tpu_custom_call.1} parent=79 // pred_check_branch
          %502 = sbr.rel (%p500) target = $region84
        $region83: #{tpu_custom_call.1} parent=79 // pred_region
          %503 = dma.done %s496, 512
        $region84: #{tpu_custom_call.1} parent=79 // pred_fallthru
          _
        // Predicated region
        $region85: #{tpu_custom_call.1} parent=79 // pred_check
          %p504 = pneg %p118
        $region86: #{tpu_custom_call.1} parent=79 // pred_check_branch
          %506 = sbr.rel (%p504) target = $region88
        $region87: #{tpu_custom_call.1} parent=79 // pred_region
          %507 = dma.done [#allocation6], 256
        $region88: #{tpu_custom_call.1} parent=79 // pred_fallthru
          _
        // Predicated region
        $region89: #{tpu_custom_call.1} parent=79 // pred_check
          %p508 = pneg %p202
        $region90: #{tpu_custom_call.1} parent=79 // pred_check_branch
          %510 = sbr.rel (%p508) target = $region92
        $region91: #{tpu_custom_call.1} parent=79 // pred_region
          %511 = dma.done [#allocation6], 256
        $region92: #{tpu_custom_call.1} parent=79 // pred_fallthru
          _
        // Predicated region
        $region93: #{tpu_custom_call.1} parent=79 // pred_check
          %p512 = pneg %p328
        $region94: #{tpu_custom_call.1} parent=79 // pred_check_branch
          %514 = sbr.rel (%p512) target = $region96
        $region95: #{tpu_custom_call.1} parent=79 // pred_region
          %515 = dma.done [#allocation9], 2048
        $region96: #{tpu_custom_call.1} parent=79 // pred_fallthru
          _
        %s516 = sand.u32 %s42, 1
        %s517 = scalar_lea.sflag [#allocation3], %s516
        %s518 = sand.u32 %s42, 1
        %s519 = smul.addr %s518, 32
        %s520 = scalar_lea.vmem [#allocation2], %s519
        %p521 = pneg %p55
        %p522 = pneg %p52
        %p523 = pneg %p76
        %p524 = pneg %p73
        %p525 = pneg %p97
        %p526 = pneg %p94
        %p527 = pneg %p118
        %p528 = pneg %p115
        %p529 = pneg %p139
        %p530 = pneg %p136
        %p531 = pneg %p160
        %p532 = pneg %p157
        %p533 = pneg %p181
        %p534 = pneg %p178
        %p535 = pneg %p202
        %p536 = pneg %p199
        %p537 = pneg %p223
        %p538 = pneg %p220
        %p539 = pneg %p244
        %p540 = pneg %p241
        %p541 = pneg %p265
        %p542 = pneg %p262
        %p543 = pneg %p286
        %p544 = pneg %p283
        %p545 = pneg %p307
        %p546 = pneg %p304
        %p547 = pneg %p328
        %p548 = pneg %p325
        %p549 = pneg %p349
        %p550 = pneg %p346
        %p551 = pneg %p375
        %p552 = pneg %p372
        %s553 = sand.u32 %s362, 1
        %s554 = scalar_lea.sflag [#allocation4], %s553
        %s555 = sand.u32 %s362, 1
        %s556 = smul.addr %s555, 32
        %s557 = scalar_lea.vmem [#allocation10], %s556
        %s558 = smul.u32 2, %s34
        %s559 = smul.u32 2, %s34
        %v560 = vld [vmem:[%s499] sm:$0xff]
        %v561 = vld [vmem:[%s499 + $0x8] sm:$0xff]
        %v562 = vld [vmem:[%s499 + $0x10] sm:$0xff]
        %v563 = vld [vmem:[%s499 + $0x18] sm:$0xff]
        %564 = vadd.xlane.f32.xlu0 %v560
        %v565 = vpop.xlane.xlu0 %564
        %566 = vadd.xlane.f32.xlu0 %v561
        %v567 = vpop.xlane.xlu0 %566
        %568 = vadd.xlane.f32.xlu0 %v562
        %v569 = vpop.xlane.xlu0 %568
        %570 = vadd.xlane.f32.xlu0 %v563
        %v571 = vpop.xlane.xlu0 %570
        %v572 = vmul.f32 %v565, 0.0078125
        %v573 = vmul.f32 %v567, 0.0078125
        %v574 = vmul.f32 %v569, 0.0078125
        %v575 = vmul.f32 %v571, 0.0078125
        %v576 = vadd.f32 %v560, %v561
        %v577 = vrot.slane %v576, 4
        %v578 = vadd.f32 %v576, %v577
        %v579 = vrot.slane %v578, 2
        %v580 = vadd.f32 %v578, %v579
        %v581 = vrot.slane %v580, 1
        %v582 = vadd.f32 %v580, %v581
        %v583 = vadd.f32 %v562, %v563
        %v584 = vrot.slane %v583, 4
        %v585 = vadd.f32 %v583, %v584
        %v586 = vrot.slane %v585, 2
        %v587 = vadd.f32 %v585, %v586
        %v588 = vrot.slane %v587, 1
        %v589 = vadd.f32 %v587, %v588
        %v590 = vmul.f32 %v582, 0.0625
        %v591 = vmul.f32 %v589, 0.0625
        %v592 = vld [vmem:[%s1] sm:$0xff]
        %v593 = vld [vmem:[%s1 + $0x8] sm:$0xff]
        %v594 = vld [vmem:[%s2] sm:$0xff]
        %v595 = vld [vmem:[%s2 + $0x8] sm:$0xff]
        %v596 = vld [vmem:[%s2 + $0x10] sm:$0xff]
        %v597 = vld [vmem:[%s2 + $0x18] sm:$0xff]
        %v598 = vld [vmem:[%s2 + $0x20] sm:$0xff]
        %v599 = vld [vmem:[%s2 + $0x28] sm:$0xff]
        %v600 = vld [vmem:[%s2 + $0x30] sm:$0xff]
        %v601 = vld [vmem:[%s2 + $0x38] sm:$0xff]
        %v602 = vld [vmem:[%s2 + $0x40] sm:$0xff]
        %v603 = vld [vmem:[%s2 + $0x48] sm:$0xff]
        %v604 = vld [vmem:[%s2 + $0x50] sm:$0xff]
        %v605 = vld [vmem:[%s2 + $0x58] sm:$0xff]
        %v606 = vld [vmem:[%s2 + $0x60] sm:$0xff]
        %v607 = vld [vmem:[%s2 + $0x68] sm:$0xff]
        %v608 = vld [vmem:[%s2 + $0x70] sm:$0xff]
        %v609 = vld [vmem:[%s2 + $0x78] sm:$0xff]
        %vm612 = vcmask 1041409
        %v613 = vsel %vm612, %v591, %v590
        %615 = vmatprep.subr.mxu0 0.0
        %616 = vmatpush1.msra.mxu0 %v609
        %617 = vmatprep.subr.mxu0 0.0
        %618 = vmatpush1.msra.mxu0 %v608
        %619 = vmatprep.subr.mxu0 0.0
        %620 = vmatpush1.msra.mxu0 %v607
        %621 = vmatprep.subr.mxu0 0.0
        %622 = vmatpush1.msra.mxu0 %v606
        %623 = vmatprep.subr.mxu0 0.0
        %624 = vmatpush1.msra.mxu0 %v605
        %625 = vmatprep.subr.mxu0 0.0
        %626 = vmatpush1.msra.mxu0 %v604
        %627 = vmatprep.subr.mxu0 0.0
        %628 = vmatpush1.msra.mxu0 %v603
        %629 = vmatprep.subr.mxu0 0.0
        %630 = vmatpush1.msra.mxu0 %v602
        %631 = vmatprep.subr.mxu0 0.0
        %632 = vmatpush1.msra.mxu0 %v601
        %633 = vmatprep.subr.mxu0 0.0
        %634 = vmatpush1.msra.mxu0 %v600
        %635 = vmatprep.subr.mxu0 0.0
        %636 = vmatpush1.msra.mxu0 %v599
        %637 = vmatprep.subr.mxu0 0.0
        %638 = vmatpush1.msra.mxu0 %v598
        %639 = vmatprep.subr.mxu0 0.0
        %640 = vmatpush1.msra.mxu0 %v597
        %641 = vmatprep.subr.mxu0 0.0
        %642 = vmatpush1.msra.mxu0 %v596
        %643 = vmatprep.subr.mxu0 0.0
        %644 = vmatpush1.msra.mxu0 %v595
        %645 = vmatprep.subr.mxu0 0.0
        %646 = vmatpush1.msra.mxu0 %v594
        %647 = vmatprep.subr.mxu0 0.0
        %648 = vmatpush2.msra.mxu0 0.0
        %649 = vmatprep.subr.mxu0 0.0
        %650 = vmatpush2.msra.mxu0 0.0
        %651 = vmatprep.subr.mxu0 0.0
        %652 = vmatpush2.msra.mxu0 0.0
        %653 = vmatprep.subr.mxu0 0.0
        %654 = vmatpush2.msra.mxu0 0.0
        %655 = vmatprep.subr.mxu0 0.0
        %656 = vmatpush2.msra.mxu0 0.0
        %657 = vmatprep.subr.mxu0 0.0
        %658 = vmatpush2.msra.mxu0 0.0
        %659 = vmatprep.subr.mxu0 0.0
        %660 = vmatpush2.msra.mxu0 0.0
        %661 = vmatprep.subr.mxu0 0.0
        %662 = vmatpush2.msra.mxu0 0.0
        %663 = vmatprep.subr.mxu0 0.0
        %664 = vmatpush2.msra.mxu0 0.0
        %665 = vmatprep.subr.mxu0 0.0
        %666 = vmatpush2.msra.mxu0 0.0
        %667 = vmatprep.subr.mxu0 0.0
        %668 = vmatpush2.msra.mxu0 0.0
        %669 = vmatprep.subr.mxu0 0.0
        %670 = vmatpush2.msra.mxu0 0.0
        %671 = vmatprep.subr.mxu0 0.0
        %672 = vmatpush2.msra.mxu0 0.0
        %673 = vmatprep.subr.mxu0 0.0
        %674 = vmatpush2.msra.mxu0 0.0
        %675 = vmatprep.subr.mxu0 0.0
        %676 = vmatpush2.msra.mxu0 0.0
        %677 = vmatprep.subr.mxu0 0.0
        %678 = vmatpush2.msra.mxu0 0.0
        %679 = vmatprep.mubr.f32.mxu0 0.0
        %680 = vmatmul.mubr.f32.gmra.mxu0 %v613
        %v681 = vpop.f32.mrf.mxu0
        %v682 = vadd.f32 0.0, %v681
        %v683 = vpop.f32.mrf.mxu0
        %684 = vdwg.mxu0
        %v689 = vlaneseq
        %v690 = vand.u32 %v689, 127
        %v691 = vlaneseq
        %v692 = vshrl.u32 %v691, 7
        %v693 = vsub.s32 %v690, %v692
        %v694 = vrot.slane %v572, %v693
        %v695 = vadd.s32 %v690, 4294967288
        %v696 = vlaneseq
        %v697 = vshrl.u32 %v696, 7
        %v698 = vsub.s32 %v695, %v697
        %v699 = vrot.slane %v573, %v698
        %vm700 = vcmask 130112
        %v701 = vsel %vm700, %v699, %v694
        %v702 = vlaneseq
        %v703 = vshrl.u32 %v702, 7
        %v704 = vsub.s32 %v690, %v703
        %v705 = vrot.slane %v574, %v704
        %v706 = vlaneseq
        %v707 = vshrl.u32 %v706, 7
        %v708 = vsub.s32 %v695, %v707
        %v709 = vrot.slane %v575, %v708
        %v710 = vsel %vm700, %v709, %v705
        %v711 = vsel %vm612, %v710, %v701
        %vm712 = vcmask 130048
        %v713 = vsel %vm712, %v711, 0
        %715 = vmatprep.subr.mxu0 0.0
        %716 = vmatpush1.msra.mxu0 0.0
        %717 = vmatprep.subr.mxu0 0.0
        %718 = vmatpush1.msra.mxu0 0.0
        %719 = vmatprep.subr.mxu0 0.0
        %720 = vmatpush1.msra.mxu0 0.0
        %721 = vmatprep.subr.mxu0 0.0
        %722 = vmatpush1.msra.mxu0 0.0
        %723 = vmatprep.subr.mxu0 0.0
        %724 = vmatpush1.msra.mxu0 0.0
        %725 = vmatprep.subr.mxu0 0.0
        %726 = vmatpush1.msra.mxu0 0.0
        %727 = vmatprep.subr.mxu0 0.0
        %728 = vmatpush1.msra.mxu0 0.0
        %729 = vmatprep.subr.mxu0 0.0
        %730 = vmatpush1.msra.mxu0 0.0
        %731 = vmatprep.subr.mxu0 0.0
        %732 = vmatpush1.msra.mxu0 0.0
        %733 = vmatprep.subr.mxu0 0.0
        %734 = vmatpush1.msra.mxu0 0.0
        %735 = vmatprep.subr.mxu0 0.0
        %736 = vmatpush1.msra.mxu0 0.0
        %737 = vmatprep.subr.mxu0 0.0
        %738 = vmatpush1.msra.mxu0 0.0
        %739 = vmatprep.subr.mxu0 0.0
        %740 = vmatpush1.msra.mxu0 0.0
        %741 = vmatprep.subr.mxu0 0.0
        %742 = vmatpush1.msra.mxu0 0.0
        %743 = vmatprep.subr.mxu0 0.0
        %744 = vmatpush1.msra.mxu0 %v593
        %745 = vmatprep.subr.mxu0 0.0
        %746 = vmatpush1.msra.mxu0 %v592
        %747 = vmatprep.subr.mxu0 0.0
        %748 = vmatpush2.msra.mxu0 0.0
        %749 = vmatprep.subr.mxu0 0.0
        %750 = vmatpush2.msra.mxu0 0.0
        %751 = vmatprep.subr.mxu0 0.0
        %752 = vmatpush2.msra.mxu0 0.0
        %753 = vmatprep.subr.mxu0 0.0
        %754 = vmatpush2.msra.mxu0 0.0
        %755 = vmatprep.subr.mxu0 0.0
        %756 = vmatpush2.msra.mxu0 0.0
        %757 = vmatprep.subr.mxu0 0.0
        %758 = vmatpush2.msra.mxu0 0.0
        %759 = vmatprep.subr.mxu0 0.0
        %760 = vmatpush2.msra.mxu0 0.0
        %761 = vmatprep.subr.mxu0 0.0
        %762 = vmatpush2.msra.mxu0 0.0
        %763 = vmatprep.subr.mxu0 0.0
        %764 = vmatpush2.msra.mxu0 0.0
        %765 = vmatprep.subr.mxu0 0.0
        %766 = vmatpush2.msra.mxu0 0.0
        %767 = vmatprep.subr.mxu0 0.0
        %768 = vmatpush2.msra.mxu0 0.0
        %769 = vmatprep.subr.mxu0 0.0
        %770 = vmatpush2.msra.mxu0 0.0
        %771 = vmatprep.subr.mxu0 0.0
        %772 = vmatpush2.msra.mxu0 0.0
        %773 = vmatprep.subr.mxu0 0.0
        %774 = vmatpush2.msra.mxu0 0.0
        %775 = vmatprep.subr.mxu0 0.0
        %776 = vmatpush2.msra.mxu0 0.0
        %777 = vmatprep.subr.mxu0 0.0
        %778 = vmatpush2.msra.mxu0 0.0
        %779 = vmatprep.mubr.f32.mxu0 0.0
        %780 = vmatmul.mubr.f32.gmra.mxu0 %v713
        %v781 = vpop.f32.mrf.mxu0
        %v782 = vadd.f32 %v682, %v781
        %v783 = vpop.f32.mrf.mxu0
        %784 = vdwg.mxu0
        %v785 = vld [vmem:[%s5] sm:$0x1]
        %v787 = vlaneseq
        %v788 = vshrl.u32 %v787, 7
        %v789 = vsub.s32 0, %v788
        %v790 = vrot.slane %v785, %v789
        %v792 = vadd.f32 %v782, %v790
        %v793 = vmax.f32 %v792, 0.0
        %v794 = vld [vmem:[#allocation5] sm:$0xff]
        %v795 = vld [vmem:[#allocation5 + $0x8] sm:$0xff]
        %v796 = vld [vmem:[%s4] sm:$0xff]
        %v797 = vld [vmem:[%s4 + $0x8] sm:$0xff]
        %v798 = vld [vmem:[%s4 + $0x10] sm:$0xff]
        %v799 = vld [vmem:[%s4 + $0x18] sm:$0xff]
        %v800 = vld [vmem:[%s4 + $0x20] sm:$0xff]
        %v801 = vld [vmem:[%s4 + $0x28] sm:$0xff]
        %v802 = vld [vmem:[%s4 + $0x30] sm:$0xff]
        %v803 = vld [vmem:[%s4 + $0x38] sm:$0xff]
        %v804 = vld [vmem:[%s4 + $0x40] sm:$0xff]
        %v805 = vld [vmem:[%s4 + $0x48] sm:$0xff]
        %v806 = vld [vmem:[%s4 + $0x50] sm:$0xff]
        %v807 = vld [vmem:[%s4 + $0x58] sm:$0xff]
        %v808 = vld [vmem:[%s4 + $0x60] sm:$0xff]
        %v809 = vld [vmem:[%s4 + $0x68] sm:$0xff]
        %v810 = vld [vmem:[%s4 + $0x70] sm:$0xff]
        %v811 = vld [vmem:[%s4 + $0x78] sm:$0xff]
        %812 = vmatprep.subr.mxu0 0.0
        %813 = vmatpush1.msra.mxu0 %v811
        %814 = vmatprep.subr.mxu0 0.0
        %815 = vmatpush1.msra.mxu0 %v810
        %816 = vmatprep.subr.mxu0 0.0
        %817 = vmatpush1.msra.mxu0 %v809
        %818 = vmatprep.subr.mxu0 0.0
        %819 = vmatpush1.msra.mxu0 %v808
        %820 = vmatprep.subr.mxu0 0.0
        %821 = vmatpush1.msra.mxu0 %v807
        %822 = vmatprep.subr.mxu0 0.0
        %823 = vmatpush1.msra.mxu0 %v806
        %824 = vmatprep.subr.mxu0 0.0
        %825 = vmatpush1.msra.mxu0 %v805
        %826 = vmatprep.subr.mxu0 0.0
        %827 = vmatpush1.msra.mxu0 %v804
        %828 = vmatprep.subr.mxu0 0.0
        %829 = vmatpush1.msra.mxu0 %v803
        %830 = vmatprep.subr.mxu0 0.0
        %831 = vmatpush1.msra.mxu0 %v802
        %832 = vmatprep.subr.mxu0 0.0
        %833 = vmatpush1.msra.mxu0 %v801
        %834 = vmatprep.subr.mxu0 0.0
        %835 = vmatpush1.msra.mxu0 %v800
        %836 = vmatprep.subr.mxu0 0.0
        %837 = vmatpush1.msra.mxu0 %v799
        %838 = vmatprep.subr.mxu0 0.0
        %839 = vmatpush1.msra.mxu0 %v798
        %840 = vmatprep.subr.mxu0 0.0
        %841 = vmatpush1.msra.mxu0 %v797
        %842 = vmatprep.subr.mxu0 0.0
        %843 = vmatpush1.msra.mxu0 %v796
        %844 = vmatprep.subr.mxu0 0.0
        %845 = vmatpush2.msra.mxu0 0.0
        %846 = vmatprep.subr.mxu0 0.0
        %847 = vmatpush2.msra.mxu0 0.0
        %848 = vmatprep.subr.mxu0 0.0
        %849 = vmatpush2.msra.mxu0 0.0
        %850 = vmatprep.subr.mxu0 0.0
        %851 = vmatpush2.msra.mxu0 0.0
        %852 = vmatprep.subr.mxu0 0.0
        %853 = vmatpush2.msra.mxu0 0.0
        %854 = vmatprep.subr.mxu0 0.0
        %855 = vmatpush2.msra.mxu0 0.0
        %856 = vmatprep.subr.mxu0 0.0
        %857 = vmatpush2.msra.mxu0 0.0
        %858 = vmatprep.subr.mxu0 0.0
        %859 = vmatpush2.msra.mxu0 0.0
        %860 = vmatprep.subr.mxu0 0.0
        %861 = vmatpush2.msra.mxu0 0.0
        %862 = vmatprep.subr.mxu0 0.0
        %863 = vmatpush2.msra.mxu0 0.0
        %864 = vmatprep.subr.mxu0 0.0
        %865 = vmatpush2.msra.mxu0 0.0
        %866 = vmatprep.subr.mxu0 0.0
        %867 = vmatpush2.msra.mxu0 0.0
        %868 = vmatprep.subr.mxu0 0.0
        %869 = vmatpush2.msra.mxu0 0.0
        %870 = vmatprep.subr.mxu0 0.0
        %871 = vmatpush2.msra.mxu0 0.0
        %872 = vmatprep.subr.mxu0 0.0
        %873 = vmatpush2.msra.mxu0 0.0
        %874 = vmatprep.subr.mxu0 0.0
        %875 = vmatpush2.msra.mxu0 0.0
        %876 = vmatprep.mubr.f32.mxu0 0.0
        %877 = vmatmul.mubr.f32.gmra.mxu0 %v613
        %v878 = vpop.f32.mrf.mxu0
        %v879 = vadd.f32 0.0, %v878
        %v880 = vpop.f32.mrf.mxu0
        %881 = vdwg.mxu0
        %882 = vmatprep.subr.mxu0 0.0
        %883 = vmatpush1.msra.mxu0 0.0
        %884 = vmatprep.subr.mxu0 0.0
        %885 = vmatpush1.msra.mxu0 0.0
        %886 = vmatprep.subr.mxu0 0.0
        %887 = vmatpush1.msra.mxu0 0.0
        %888 = vmatprep.subr.mxu0 0.0
        %889 = vmatpush1.msra.mxu0 0.0
        %890 = vmatprep.subr.mxu0 0.0
        %891 = vmatpush1.msra.mxu0 0.0
        %892 = vmatprep.subr.mxu0 0.0
        %893 = vmatpush1.msra.mxu0 0.0
        %894 = vmatprep.subr.mxu0 0.0
        %895 = vmatpush1.msra.mxu0 0.0
        %896 = vmatprep.subr.mxu0 0.0
        %897 = vmatpush1.msra.mxu0 0.0
        %898 = vmatprep.subr.mxu0 0.0
        %899 = vmatpush1.msra.mxu0 0.0
        %900 = vmatprep.subr.mxu0 0.0
        %901 = vmatpush1.msra.mxu0 0.0
        %902 = vmatprep.subr.mxu0 0.0
        %903 = vmatpush1.msra.mxu0 0.0
        %904 = vmatprep.subr.mxu0 0.0
        %905 = vmatpush1.msra.mxu0 0.0
        %906 = vmatprep.subr.mxu0 0.0
        %907 = vmatpush1.msra.mxu0 0.0
        %908 = vmatprep.subr.mxu0 0.0
        %909 = vmatpush1.msra.mxu0 0.0
        %910 = vmatprep.subr.mxu0 0.0
        %911 = vmatpush1.msra.mxu0 %v795
        %912 = vmatprep.subr.mxu0 0.0
        %913 = vmatpush1.msra.mxu0 %v794
        %914 = vmatprep.subr.mxu0 0.0
        %915 = vmatpush2.msra.mxu0 0.0
        %916 = vmatprep.subr.mxu0 0.0
        %917 = vmatpush2.msra.mxu0 0.0
        %918 = vmatprep.subr.mxu0 0.0
        %919 = vmatpush2.msra.mxu0 0.0
        %920 = vmatprep.subr.mxu0 0.0
        %921 = vmatpush2.msra.mxu0 0.0
        %922 = vmatprep.subr.mxu0 0.0
        %923 = vmatpush2.msra.mxu0 0.0
        %924 = vmatprep.subr.mxu0 0.0
        %925 = vmatpush2.msra.mxu0 0.0
        %926 = vmatprep.subr.mxu0 0.0
        %927 = vmatpush2.msra.mxu0 0.0
        %928 = vmatprep.subr.mxu0 0.0
        %929 = vmatpush2.msra.mxu0 0.0
        %930 = vmatprep.subr.mxu0 0.0
        %931 = vmatpush2.msra.mxu0 0.0
        %932 = vmatprep.subr.mxu0 0.0
        %933 = vmatpush2.msra.mxu0 0.0
        %934 = vmatprep.subr.mxu0 0.0
        %935 = vmatpush2.msra.mxu0 0.0
        %936 = vmatprep.subr.mxu0 0.0
        %937 = vmatpush2.msra.mxu0 0.0
        %938 = vmatprep.subr.mxu0 0.0
        %939 = vmatpush2.msra.mxu0 0.0
        %940 = vmatprep.subr.mxu0 0.0
        %941 = vmatpush2.msra.mxu0 0.0
        %942 = vmatprep.subr.mxu0 0.0
        %943 = vmatpush2.msra.mxu0 0.0
        %944 = vmatprep.subr.mxu0 0.0
        %945 = vmatpush2.msra.mxu0 0.0
        %946 = vmatprep.mubr.f32.mxu0 0.0
        %947 = vmatmul.mubr.f32.gmra.mxu0 %v713
        %v948 = vpop.f32.mrf.mxu0
        %v949 = vadd.f32 %v879, %v948
        %v950 = vpop.f32.mrf.mxu0
        %951 = vdwg.mxu0
        %v952 = vld [vmem:[%s6] sm:$0x1]
        %v954 = vlaneseq
        %v955 = vshrl.u32 %v954, 7
        %v956 = vsub.s32 0, %v955
        %v957 = vrot.slane %v952, %v956
        %v959 = vadd.f32 %v949, %v957
        %v960 = vmax.f32 %v959, 0.0
        %v961 = vld [vmem:[#allocation7] sm:$0xff]
        %v962 = vld [vmem:[#allocation7 + $0x8] sm:$0xff]
        %v963 = vld [vmem:[%s8] sm:$0x1]
        %v965 = vlaneseq
        %v966 = vshrl.u32 %v965, 7
        %v967 = vsub.s32 0, %v966
        %v968 = vrot.slane %v963, %v967
        %v971 = vsel %vm712, %v793, 0
        %973 = vmatprep.subr.mxu0 0.0
        %974 = vmatpush1.msra.mxu0 0.0
        %975 = vmatprep.subr.mxu0 0.0
        %976 = vmatpush1.msra.mxu0 0.0
        %977 = vmatprep.subr.mxu0 0.0
        %978 = vmatpush1.msra.mxu0 0.0
        %979 = vmatprep.subr.mxu0 0.0
        %980 = vmatpush1.msra.mxu0 0.0
        %981 = vmatprep.subr.mxu0 0.0
        %982 = vmatpush1.msra.mxu0 0.0
        %983 = vmatprep.subr.mxu0 0.0
        %984 = vmatpush1.msra.mxu0 0.0
        %985 = vmatprep.subr.mxu0 0.0
        %986 = vmatpush1.msra.mxu0 0.0
        %987 = vmatprep.subr.mxu0 0.0
        %988 = vmatpush1.msra.mxu0 0.0
        %989 = vmatprep.subr.mxu0 0.0
        %990 = vmatpush1.msra.mxu0 0.0
        %991 = vmatprep.subr.mxu0 0.0
        %992 = vmatpush1.msra.mxu0 0.0
        %993 = vmatprep.subr.mxu0 0.0
        %994 = vmatpush1.msra.mxu0 0.0
        %995 = vmatprep.subr.mxu0 0.0
        %996 = vmatpush1.msra.mxu0 0.0
        %997 = vmatprep.subr.mxu0 0.0
        %998 = vmatpush1.msra.mxu0 0.0
        %999 = vmatprep.subr.mxu0 0.0
        %1000 = vmatpush1.msra.mxu0 0.0
        %1001 = vmatprep.subr.mxu0 0.0
        %1002 = vmatpush1.msra.mxu0 %v962
        %1003 = vmatprep.subr.mxu0 0.0
        %1004 = vmatpush1.msra.mxu0 %v961
        %1005 = vmatprep.subr.mxu0 0.0
        %1006 = vmatpush2.msra.mxu0 0.0
        %1007 = vmatprep.subr.mxu0 0.0
        %1008 = vmatpush2.msra.mxu0 0.0
        %1009 = vmatprep.subr.mxu0 0.0
        %1010 = vmatpush2.msra.mxu0 0.0
        %1011 = vmatprep.subr.mxu0 0.0
        %1012 = vmatpush2.msra.mxu0 0.0
        %1013 = vmatprep.subr.mxu0 0.0
        %1014 = vmatpush2.msra.mxu0 0.0
        %1015 = vmatprep.subr.mxu0 0.0
        %1016 = vmatpush2.msra.mxu0 0.0
        %1017 = vmatprep.subr.mxu0 0.0
        %1018 = vmatpush2.msra.mxu0 0.0
        %1019 = vmatprep.subr.mxu0 0.0
        %1020 = vmatpush2.msra.mxu0 0.0
        %1021 = vmatprep.subr.mxu0 0.0
        %1022 = vmatpush2.msra.mxu0 0.0
        %1023 = vmatprep.subr.mxu0 0.0
        %1024 = vmatpush2.msra.mxu0 0.0
        %1025 = vmatprep.subr.mxu0 0.0
        %1026 = vmatpush2.msra.mxu0 0.0
        %1027 = vmatprep.subr.mxu0 0.0
        %1028 = vmatpush2.msra.mxu0 0.0
        %1029 = vmatprep.subr.mxu0 0.0
        %1030 = vmatpush2.msra.mxu0 0.0
        %1031 = vmatprep.subr.mxu0 0.0
        %1032 = vmatpush2.msra.mxu0 0.0
        %1033 = vmatprep.subr.mxu0 0.0
        %1034 = vmatpush2.msra.mxu0 0.0
        %1035 = vmatprep.subr.mxu0 0.0
        %1036 = vmatpush2.msra.mxu0 0.0
        %1037 = vmatprep.mubr.f32.mxu0 0.0
        %1038 = vmatmul.mubr.f32.gmra.mxu0 %v971
        %v1039 = vpop.f32.mrf.mxu0
        %v1040 = vadd.f32 %v968, %v1039
        %v1041 = vpop.f32.mrf.mxu0
        %1042 = vdwg.mxu0
        %v1043 = vmax.f32 %v1040, 0.0
        %v1044 = vld [vmem:[%s9] sm:$0xff]
        %v1045 = vld [vmem:[%s9 + $0x8] sm:$0xff]
        %v1046 = vld [vmem:[%s9 + $0x10] sm:$0xff]
        %v1047 = vld [vmem:[%s9 + $0x18] sm:$0xff]
        %v1048 = vld [vmem:[%s9 + $0x20] sm:$0xff]
        %v1049 = vld [vmem:[%s9 + $0x28] sm:$0xff]
        %v1050 = vld [vmem:[%s9 + $0x30] sm:$0xff]
        %v1051 = vld [vmem:[%s9 + $0x38] sm:$0xff]
        %v1052 = vld [vmem:[%s9 + $0x40] sm:$0xff]
        %v1053 = vld [vmem:[%s9 + $0x48] sm:$0xff]
        %v1054 = vld [vmem:[%s9 + $0x50] sm:$0xff]
        %v1055 = vld [vmem:[%s9 + $0x58] sm:$0xff]
        %v1056 = vld [vmem:[%s9 + $0x60] sm:$0xff]
        %v1057 = vld [vmem:[%s9 + $0x68] sm:$0xff]
        %v1058 = vld [vmem:[%s9 + $0x70] sm:$0xff]
        %v1059 = vld [vmem:[%s9 + $0x78] sm:$0xff]
        %v1060 = vld [vmem:[%s10] sm:$0x1]
        %v1062 = vlaneseq
        %v1063 = vshrl.u32 %v1062, 7
        %v1064 = vsub.s32 0, %v1063
        %v1065 = vrot.slane %v1060, %v1064
        %1067 = vmatprep.subr.mxu0 0.0
        %1068 = vmatpush1.msra.mxu0 %v1059
        %1069 = vmatprep.subr.mxu0 0.0
        %1070 = vmatpush1.msra.mxu0 %v1058
        %1071 = vmatprep.subr.mxu0 0.0
        %1072 = vmatpush1.msra.mxu0 %v1057
        %1073 = vmatprep.subr.mxu0 0.0
        %1074 = vmatpush1.msra.mxu0 %v1056
        %1075 = vmatprep.subr.mxu0 0.0
        %1076 = vmatpush1.msra.mxu0 %v1055
        %1077 = vmatprep.subr.mxu0 0.0
        %1078 = vmatpush1.msra.mxu0 %v1054
        %1079 = vmatprep.subr.mxu0 0.0
        %1080 = vmatpush1.msra.mxu0 %v1053
        %1081 = vmatprep.subr.mxu0 0.0
        %1082 = vmatpush1.msra.mxu0 %v1052
        %1083 = vmatprep.subr.mxu0 0.0
        %1084 = vmatpush1.msra.mxu0 %v1051
        %1085 = vmatprep.subr.mxu0 0.0
        %1086 = vmatpush1.msra.mxu0 %v1050
        %1087 = vmatprep.subr.mxu0 0.0
        %1088 = vmatpush1.msra.mxu0 %v1049
        %1089 = vmatprep.subr.mxu0 0.0
        %1090 = vmatpush1.msra.mxu0 %v1048
        %1091 = vmatprep.subr.mxu0 0.0
        %1092 = vmatpush1.msra.mxu0 %v1047
        %1093 = vmatprep.subr.mxu0 0.0
        %1094 = vmatpush1.msra.mxu0 %v1046
        %1095 = vmatprep.subr.mxu0 0.0
        %1096 = vmatpush1.msra.mxu0 %v1045
        %1097 = vmatprep.subr.mxu0 0.0
        %1098 = vmatpush1.msra.mxu0 %v1044
        %1099 = vmatprep.subr.mxu0 0.0
        %1100 = vmatpush2.msra.mxu0 0.0
        %1101 = vmatprep.subr.mxu0 0.0
        %1102 = vmatpush2.msra.mxu0 0.0
        %1103 = vmatprep.subr.mxu0 0.0
        %1104 = vmatpush2.msra.mxu0 0.0
        %1105 = vmatprep.subr.mxu0 0.0
        %1106 = vmatpush2.msra.mxu0 0.0
        %1107 = vmatprep.subr.mxu0 0.0
        %1108 = vmatpush2.msra.mxu0 0.0
        %1109 = vmatprep.subr.mxu0 0.0
        %1110 = vmatpush2.msra.mxu0 0.0
        %1111 = vmatprep.subr.mxu0 0.0
        %1112 = vmatpush2.msra.mxu0 0.0
        %1113 = vmatprep.subr.mxu0 0.0
        %1114 = vmatpush2.msra.mxu0 0.0
        %1115 = vmatprep.subr.mxu0 0.0
        %1116 = vmatpush2.msra.mxu0 0.0
        %1117 = vmatprep.subr.mxu0 0.0
        %1118 = vmatpush2.msra.mxu0 0.0
        %1119 = vmatprep.subr.mxu0 0.0
        %1120 = vmatpush2.msra.mxu0 0.0
        %1121 = vmatprep.subr.mxu0 0.0
        %1122 = vmatpush2.msra.mxu0 0.0
        %1123 = vmatprep.subr.mxu0 0.0
        %1124 = vmatpush2.msra.mxu0 0.0
        %1125 = vmatprep.subr.mxu0 0.0
        %1126 = vmatpush2.msra.mxu0 0.0
        %1127 = vmatprep.subr.mxu0 0.0
        %1128 = vmatpush2.msra.mxu0 0.0
        %1129 = vmatprep.subr.mxu0 0.0
        %1130 = vmatpush2.msra.mxu0 0.0
        %1131 = vmatprep.mubr.f32.mxu0 0.0
        %1132 = vmatmul.mubr.f32.gmra.mxu0 %v1043
        %v1133 = vpop.f32.mrf.mxu0
        %v1134 = vadd.f32 %v1065, %v1133
        %v1135 = vpop.f32.mrf.mxu0
        %1136 = vdwg.mxu0
        %v1137 = vxor.u32 %v1134, 2147483648
        %v1138 = vmul.f32 %v1137, 1.442695
        %v1139 = vpow.pop %v1138
        %v1140 = vadd.f32 %v1139, 1.0
        %v1141 = vrcp.pop %v1140
        %v1142 = vmul.f32 1.0, %v1141
        %v1143 = vld [vmem:[%s11] sm:$0xff]
        %v1144 = vld [vmem:[%s11 + $0x8] sm:$0xff]
        %v1145 = vld [vmem:[%s11 + $0x10] sm:$0xff]
        %v1146 = vld [vmem:[%s11 + $0x18] sm:$0xff]
        %v1147 = vld [vmem:[%s11 + $0x20] sm:$0xff]
        %v1148 = vld [vmem:[%s11 + $0x28] sm:$0xff]
        %v1149 = vld [vmem:[%s11 + $0x30] sm:$0xff]
        %v1150 = vld [vmem:[%s11 + $0x38] sm:$0xff]
        %v1151 = vld [vmem:[%s11 + $0x40] sm:$0xff]
        %v1152 = vld [vmem:[%s11 + $0x48] sm:$0xff]
        %v1153 = vld [vmem:[%s11 + $0x50] sm:$0xff]
        %v1154 = vld [vmem:[%s11 + $0x58] sm:$0xff]
        %v1155 = vld [vmem:[%s11 + $0x60] sm:$0xff]
        %v1156 = vld [vmem:[%s11 + $0x68] sm:$0xff]
        %v1157 = vld [vmem:[%s11 + $0x70] sm:$0xff]
        %v1158 = vld [vmem:[%s11 + $0x78] sm:$0xff]
        %v1159 = vld [vmem:[%s12] sm:$0x1]
        %v1161 = vlaneseq
        %v1162 = vshrl.u32 %v1161, 7
        %v1163 = vsub.s32 0, %v1162
        %v1164 = vrot.slane %v1159, %v1163
        %1166 = vmatprep.subr.mxu0 0.0
        %1167 = vmatpush1.msra.mxu0 %v1158
        %1168 = vmatprep.subr.mxu0 0.0
        %1169 = vmatpush1.msra.mxu0 %v1157
        %1170 = vmatprep.subr.mxu0 0.0
        %1171 = vmatpush1.msra.mxu0 %v1156
        %1172 = vmatprep.subr.mxu0 0.0
        %1173 = vmatpush1.msra.mxu0 %v1155
        %1174 = vmatprep.subr.mxu0 0.0
        %1175 = vmatpush1.msra.mxu0 %v1154
        %1176 = vmatprep.subr.mxu0 0.0
        %1177 = vmatpush1.msra.mxu0 %v1153
        %1178 = vmatprep.subr.mxu0 0.0
        %1179 = vmatpush1.msra.mxu0 %v1152
        %1180 = vmatprep.subr.mxu0 0.0
        %1181 = vmatpush1.msra.mxu0 %v1151
        %1182 = vmatprep.subr.mxu0 0.0
        %1183 = vmatpush1.msra.mxu0 %v1150
        %1184 = vmatprep.subr.mxu0 0.0
        %1185 = vmatpush1.msra.mxu0 %v1149
        %1186 = vmatprep.subr.mxu0 0.0
        %1187 = vmatpush1.msra.mxu0 %v1148
        %1188 = vmatprep.subr.mxu0 0.0
        %1189 = vmatpush1.msra.mxu0 %v1147
        %1190 = vmatprep.subr.mxu0 0.0
        %1191 = vmatpush1.msra.mxu0 %v1146
        %1192 = vmatprep.subr.mxu0 0.0
        %1193 = vmatpush1.msra.mxu0 %v1145
        %1194 = vmatprep.subr.mxu0 0.0
        %1195 = vmatpush1.msra.mxu0 %v1144
        %1196 = vmatprep.subr.mxu0 0.0
        %1197 = vmatpush1.msra.mxu0 %v1143
        %1198 = vmatprep.subr.mxu0 0.0
        %1199 = vmatpush2.msra.mxu0 0.0
        %1200 = vmatprep.subr.mxu0 0.0
        %1201 = vmatpush2.msra.mxu0 0.0
        %1202 = vmatprep.subr.mxu0 0.0
        %1203 = vmatpush2.msra.mxu0 0.0
        %1204 = vmatprep.subr.mxu0 0.0
        %1205 = vmatpush2.msra.mxu0 0.0
        %1206 = vmatprep.subr.mxu0 0.0
        %1207 = vmatpush2.msra.mxu0 0.0
        %1208 = vmatprep.subr.mxu0 0.0
        %1209 = vmatpush2.msra.mxu0 0.0
        %1210 = vmatprep.subr.mxu0 0.0
        %1211 = vmatpush2.msra.mxu0 0.0
        %1212 = vmatprep.subr.mxu0 0.0
        %1213 = vmatpush2.msra.mxu0 0.0
        %1214 = vmatprep.subr.mxu0 0.0
        %1215 = vmatpush2.msra.mxu0 0.0
        %1216 = vmatprep.subr.mxu0 0.0
        %1217 = vmatpush2.msra.mxu0 0.0
        %1218 = vmatprep.subr.mxu0 0.0
        %1219 = vmatpush2.msra.mxu0 0.0
        %1220 = vmatprep.subr.mxu0 0.0
        %1221 = vmatpush2.msra.mxu0 0.0
        %1222 = vmatprep.subr.mxu0 0.0
        %1223 = vmatpush2.msra.mxu0 0.0
        %1224 = vmatprep.subr.mxu0 0.0
        %1225 = vmatpush2.msra.mxu0 0.0
        %1226 = vmatprep.subr.mxu0 0.0
        %1227 = vmatpush2.msra.mxu0 0.0
        %1228 = vmatprep.subr.mxu0 0.0
        %1229 = vmatpush2.msra.mxu0 0.0
        %1230 = vmatprep.mubr.f32.mxu0 0.0
        %1231 = vmatmul.mubr.f32.gmra.mxu0 %v960
        %v1232 = vpop.f32.mrf.mxu0
        %v1233 = vadd.f32 %v1164, %v1232
        %v1234 = vpop.f32.mrf.mxu0
        %1235 = vdwg.mxu0
        %v1236 = vmax.f32 %v1233, 0.0
        %v1237 = vld [vmem:[#allocation8] sm:$0xff]
        %v1238 = vld [vmem:[#allocation8 + $0x8] sm:$0xff]
        %v1239 = vld [vmem:[#allocation8 + $0x10] sm:$0xff]
        %v1240 = vld [vmem:[#allocation8 + $0x18] sm:$0xff]
        %v1241 = vld [vmem:[#allocation8 + $0x20] sm:$0xff]
        %v1242 = vld [vmem:[#allocation8 + $0x28] sm:$0xff]
        %v1243 = vld [vmem:[#allocation8 + $0x30] sm:$0xff]
        %v1244 = vld [vmem:[#allocation8 + $0x38] sm:$0xff]
        %v1245 = vld [vmem:[#allocation8 + $0x40] sm:$0xff]
        %v1246 = vld [vmem:[#allocation8 + $0x48] sm:$0xff]
        %v1247 = vld [vmem:[#allocation8 + $0x50] sm:$0xff]
        %v1248 = vld [vmem:[#allocation8 + $0x58] sm:$0xff]
        %v1249 = vld [vmem:[#allocation8 + $0x60] sm:$0xff]
        %v1250 = vld [vmem:[#allocation8 + $0x68] sm:$0xff]
        %v1251 = vld [vmem:[#allocation8 + $0x70] sm:$0xff]
        %v1252 = vld [vmem:[#allocation8 + $0x78] sm:$0xff]
        %v1253 = vld [vmem:[%s14] sm:$0x1]
        %v1255 = vlaneseq
        %v1256 = vshrl.u32 %v1255, 7
        %v1257 = vsub.s32 0, %v1256
        %v1258 = vrot.slane %v1253, %v1257
        %1260 = vmatprep.subr.mxu0 0.0
        %1261 = vmatpush1.msra.mxu0 %v1252
        %1262 = vmatprep.subr.mxu0 0.0
        %1263 = vmatpush1.msra.mxu0 %v1251
        %1264 = vmatprep.subr.mxu0 0.0
        %1265 = vmatpush1.msra.mxu0 %v1250
        %1266 = vmatprep.subr.mxu0 0.0
        %1267 = vmatpush1.msra.mxu0 %v1249
        %1268 = vmatprep.subr.mxu0 0.0
        %1269 = vmatpush1.msra.mxu0 %v1248
        %1270 = vmatprep.subr.mxu0 0.0
        %1271 = vmatpush1.msra.mxu0 %v1247
        %1272 = vmatprep.subr.mxu0 0.0
        %1273 = vmatpush1.msra.mxu0 %v1246
        %1274 = vmatprep.subr.mxu0 0.0
        %1275 = vmatpush1.msra.mxu0 %v1245
        %1276 = vmatprep.subr.mxu0 0.0
        %1277 = vmatpush1.msra.mxu0 %v1244
        %1278 = vmatprep.subr.mxu0 0.0
        %1279 = vmatpush1.msra.mxu0 %v1243
        %1280 = vmatprep.subr.mxu0 0.0
        %1281 = vmatpush1.msra.mxu0 %v1242
        %1282 = vmatprep.subr.mxu0 0.0
        %1283 = vmatpush1.msra.mxu0 %v1241
        %1284 = vmatprep.subr.mxu0 0.0
        %1285 = vmatpush1.msra.mxu0 %v1240
        %1286 = vmatprep.subr.mxu0 0.0
        %1287 = vmatpush1.msra.mxu0 %v1239
        %1288 = vmatprep.subr.mxu0 0.0
        %1289 = vmatpush1.msra.mxu0 %v1238
        %1290 = vmatprep.subr.mxu0 0.0
        %1291 = vmatpush1.msra.mxu0 %v1237
        %1292 = vmatprep.subr.mxu0 0.0
        %1293 = vmatpush2.msra.mxu0 0.0
        %1294 = vmatprep.subr.mxu0 0.0
        %1295 = vmatpush2.msra.mxu0 0.0
        %1296 = vmatprep.subr.mxu0 0.0
        %1297 = vmatpush2.msra.mxu0 0.0
        %1298 = vmatprep.subr.mxu0 0.0
        %1299 = vmatpush2.msra.mxu0 0.0
        %1300 = vmatprep.subr.mxu0 0.0
        %1301 = vmatpush2.msra.mxu0 0.0
        %1302 = vmatprep.subr.mxu0 0.0
        %1303 = vmatpush2.msra.mxu0 0.0
        %1304 = vmatprep.subr.mxu0 0.0
        %1305 = vmatpush2.msra.mxu0 0.0
        %1306 = vmatprep.subr.mxu0 0.0
        %1307 = vmatpush2.msra.mxu0 0.0
        %1308 = vmatprep.subr.mxu0 0.0
        %1309 = vmatpush2.msra.mxu0 0.0
        %1310 = vmatprep.subr.mxu0 0.0
        %1311 = vmatpush2.msra.mxu0 0.0
        %1312 = vmatprep.subr.mxu0 0.0
        %1313 = vmatpush2.msra.mxu0 0.0
        %1314 = vmatprep.subr.mxu0 0.0
        %1315 = vmatpush2.msra.mxu0 0.0
        %1316 = vmatprep.subr.mxu0 0.0
        %1317 = vmatpush2.msra.mxu0 0.0
        %1318 = vmatprep.subr.mxu0 0.0
        %1319 = vmatpush2.msra.mxu0 0.0
        %1320 = vmatprep.subr.mxu0 0.0
        %1321 = vmatpush2.msra.mxu0 0.0
        %1322 = vmatprep.subr.mxu0 0.0
        %1323 = vmatpush2.msra.mxu0 0.0
        %1324 = vmatprep.mubr.f32.mxu0 0.0
        %1325 = vmatmul.mubr.f32.gmra.mxu0 %v1236
        %v1326 = vpop.f32.mrf.mxu0
        %v1327 = vadd.f32 %v1258, %v1326
        %v1328 = vpop.f32.mrf.mxu0
        %1329 = vdwg.mxu0
        %v1330 = vxor.u32 %v1327, 2147483648
        %v1331 = vmul.f32 %v1330, 1.442695
        %v1332 = vpow.pop %v1331
        %v1333 = vadd.f32 %v1332, 1.0
        %v1334 = vrcp.pop %v1333
        %v1335 = vmul.f32 1.0, %v1334
        %v1336 = vlaneseq
        %v1337 = vshrl.u32 %v1336, 7
        %v1338 = vsub.s32 0, %v1337
        %v1339 = vrot.slane %v1142, %v1338
        %1341 = vbcast.lane.b32.xlu0 %v1339, 256
        %v1342 = vpop.permute.xlu0 %1341
        %s1344 = sor.u32 256, 8
        %1345 = vbcast.lane.b32.xlu0 %v1339, %s1344
        %v1346 = vpop.permute.xlu0 %1345
        %v1347 = vlaneseq
        %v1348 = vshrl.u32 %v1347, 7
        %v1349 = vsub.s32 1, %v1348
        %v1350 = vrot.slane %v1142, %v1349
        %1352 = vbcast.lane.b32.xlu0 %v1350, 256
        %v1353 = vpop.permute.xlu0 %1352
        %s1355 = sor.u32 256, 8
        %1356 = vbcast.lane.b32.xlu0 %v1350, %s1355
        %v1357 = vpop.permute.xlu0 %1356
        %v1358 = vmul.f32 %v560, %v1342
        %v1359 = vmul.f32 %v561, %v1346
        %v1360 = vmul.f32 %v562, %v1353
        %v1361 = vmul.f32 %v563, %v1357
        %v1364 = vunpack.c.l.s4 1966171168
        %v1365 = vunpack.c.0.s8 %v1364
        %v1366 = vlaneseq
        %v1367 = vshrl.u32 %v1366, 7
        %v1368 = vsub.s32 %v1365, %v1367
        %v1369 = vrot.slane %v1335, %v1368
        %v1370 = vcombine.high %v1369, %v1369
        %v1372 = vunpack.c.l.s4 1966171168
        %v1373 = vunpack.c.0.s8 %v1372
        %v1374 = vlaneseq
        %v1375 = vshrl.u32 %v1374, 7
        %v1376 = vsub.s32 %v1373, %v1375
        %v1377 = vrot.slane %v1369, %v1376
        %v1379 = vunpack.c.l.s4 1966171168
        %v1380 = vunpack.c.0.s8 %v1379
        %v1381 = vlaneseq
        %v1382 = vshrl.u32 %v1381, 7
        %v1383 = vsub.s32 %v1380, %v1382
        %v1384 = vrot.slane %v1370, %v1383
        %v1385 = vlaneseq
        %v1386 = vshrl.u32 %v1385, 7
        %v1387 = vsub.s32 0, %v1386
        %v1388 = vrot.slane %v1377, %v1387
        %v1389 = vlaneseq
        %v1390 = vshrl.u32 %v1389, 7
        %v1391 = vsub.s32 0, %v1390
        %v1392 = vrot.slane %v1384, %v1391
        %v1395 = vmul.f32 %v1358, %v1388
        %v1396 = vmul.f32 %v1359, %v1388
        %v1397 = vmul.f32 %v1360, %v1392
        %v1398 = vmul.f32 %v1361, %v1392
        %1399 = vst [vmem:[%s557] sm:$0xff] %v1395
        %1400 = vst [vmem:[%s557 + $0x8] sm:$0xff] %v1396
        %1401 = vst [vmem:[%s557 + $0x10] sm:$0xff] %v1397
        %1402 = vst [vmem:[%s557 + $0x18] sm:$0xff] %v1398
        %s1403 = sand.u32 %s362, 1
        %s1404 = scalar_lea.sflag [#allocation4], %s1403
        %s1405 = sand.u32 %s362, 1
        %s1406 = smul.addr %s1405, 32
        %s1407 = scalar_lea.vmem [#allocation10], %s1406
        // Predicated region
        $region97: #{tpu_custom_call.1} parent=79 // pred_check
          %p1408 = pneg %p372
        $region98: #{tpu_custom_call.1} parent=79 // pred_check_branch
          %1410 = sbr.rel (%p1408) target = $region100
        $region99: #{tpu_custom_call.1} parent=79 // pred_region
          %s1411 = smul.u32 2, %s34
          %s1413 = ssub.s32 512, 512
          %1414 = vsyncadd %s1404, %s1413
          %s1415 = smul.addr %s1411, 2
          %s1416 = smul.addr %s1415, 128
          %s1417 = scalar_lea.hbm %s15, %s1416
          %s1418 = sshll.u32 %s1407, 4
          %s1419 = int_to_ptr.vmem [resolvable:$true] %s1418
          %1424 = dma.vmem_to_hbm [thread:$0]  %s1419, 512, %s1417, %s1404, 128, 128, 8
        $region100: #{tpu_custom_call.1} parent=79 // pred_fallthru
          _
      $region80: #{tpu_custom_call.1} parent=5 // pred_fallthru
        _
      %p1425 = scmp.le.s32.totalorder 2, %s29
      // Predicated region
      $region101: #{tpu_custom_call.1} parent=5 // pred_check
        %p1426 = pneg %p1425
      $region102: #{tpu_custom_call.1} parent=5 // pred_check_branch
        %1428 = sbr.rel (%p1426) target = $region104
      $region103: #{tpu_custom_call.1} parent=5 // pred_region
        %s1429 = ssub.s32 %s29, 2
        // Predicated region
        $region105: #{tpu_custom_call.1} parent=103 // pred_check
          %p1430 = pneg %p378
        $region106: #{tpu_custom_call.1} parent=103 // pred_check_branch
          %1432 = sbr.rel (%p1430) target = $region108
        $region107: #{tpu_custom_call.1} parent=103 // pred_region
          %s1433 = sand.u32 %s363, 1
          %s1434 = scalar_lea.sflag [#allocation4], %s1433
          %s1435 = sand.u32 %s363, 1
          %s1436 = smul.addr %s1435, 32
          %s1437 = scalar_lea.vmem [#allocation10], %s1436
          %1438 = dma.done %s1434, 512
        $region108: #{tpu_custom_call.1} parent=103 // pred_fallthru
          _
      $region104: #{tpu_custom_call.1} parent=5 // pred_fallthru
        _
    $region6: #{tpu_custom_call.1} parent=1 // loop_footer
      %s33 = sadd.s32 1, %s29
    $region7: #{tpu_custom_call.1} parent=1 // loop_footer_branch
      %28 = sbr.rel target = $region3
    $region8: #{tpu_custom_call.1} parent=1 // loop_exit
      _
    %1439 = vsyncpa [#allocation3], 1
    %s1440 = scalar_lea.sflag [#allocation3], 1
    %1441 = vsyncpa %s1440, 1
    %1442 = vsyncpa [#allocation6], 1
    %1443 = vsyncpa [#allocation9], 1
    %1444 = vsyncpa [#allocation4], 1
    %s1445 = scalar_lea.sflag [#allocation4], 1
    %1446 = vsyncpa %s1445, 1

// kernel: tpu_custom_call.1
$region0: #{tpu_custom_call.1}
  #allocation0 [shape = 'u32[]', space=smem, size = 0x4, offset = 0x4, fixed_abs, tag = 'smem constant byte address 0x4 - core index']
  #allocation1 [shape = 'u32[144,128]{1,0:T(1,128)}', space=vmem, size = 0x12000, scoped, tag = 'internal scratch']
  %s0 = inlined_call_operand.hbm [shape: f32[4,16,128], index: 0, kind: input, shape index: {}]
  %s1 = inlined_call_operand.vmem [shape: f32[16,16], index: 1, kind: input, shape index: {}]
  %s2 = inlined_call_operand.vmem [shape: f32[128,16], index: 2, kind: input, shape index: {}]
  %s3 = inlined_call_operand.hbm [shape: f32[16,128], index: 3, kind: input, shape index: {}]
  %s4 = inlined_call_operand.vmem [shape: f32[128,128], index: 4, kind: input, shape index: {}]
  %s5 = inlined_call_operand.vmem [shape: f32[1,16], index: 5, kind: input, shape index: {}]
  %s6 = inlined_call_operand.vmem [shape: f32[1,128], index: 6, kind: input, shape index: {}]
  %s7 = inlined_call_operand.hbm [shape: f32[16,128], index: 7, kind: input, shape index: {}]
  %s8 = inlined_call_operand.vmem [shape: f32[1,128], index: 8, kind: input, shape index: {}]
  %s9 = inlined_call_operand.vmem [shape: f32[128,16], index: 9, kind: input, shape index: {}]
  %s10 = inlined_call_operand.vmem [shape: f32[1,16], index: 10, kind: input, shape index: {}]
  %s11 = inlined_call_operand.vmem [shape: f32[128,128], index: 11, kind: input, shape index: {}]
  %s12 = inlined_call_operand.vmem [shape: f32[1,128], index: 12, kind: input, shape index: {}]
  %s13 = inlined_call_operand.hbm [shape: f32[128,128], index: 13, kind: input, shape index: {}]
  %s14 = inlined_call_operand.vmem [shape: f32[1,128], index: 14, kind: input, shape index: {}]
  %s15 = inlined_call_operand.hbm [shape: f32[4,16,128], index: 15, kind: output, shape index: {}]
  %s16 = sld [smem:[#allocation0]]
  $region109: #{tpu_custom_call.1} parent=0
    _
  %s18 = ssub.s32 1, %s16
  %s19 = scalar_select 0, %s18, %s16
  $region1: #{tpu_custom_call.1} parent=0
    #allocation2 [shape = 'u8[32768]{0}', space=vmem, size = 0x8000, scoped, tag = 'input window, operand 0']
    #allocation3 [shape = 's32[2]{0}', space=sflag, size = 0x8, scoped, tag = 'scoped memory for tpu_custom_call.1']
    #allocation4 [shape = 's32[2]{0}', space=sflag, size = 0x8, scoped, tag = 'scoped memory for tpu_custom_call.1']
    #allocation5 [shape = 'u8[8192]{0}', space=vmem, size = 0x2000, scoped, tag = 'input window, operand 3, single buffered']
    #allocation6 [shape = 's32[1]{0}', space=sflag, size = 0x4, scoped, tag = 'scoped memory for tpu_custom_call.1']
    #allocation7 [shape = 'u8[8192]{0}', space=vmem, size = 0x2000, scoped, tag = 'input window, operand 7, single buffered']
    #allocation8 [shape = 'u8[65536]{0}', space=vmem, size = 0x10000, scoped, tag = 'input window, operand 13, single buffered']
    #allocation9 [shape = 's32[1]{0}', space=sflag, size = 0x4, scoped, tag = 'scoped memory for tpu_custom_call.1']
    #allocation10 [shape = 'u8[32768]{0}', space=vmem, size = 0x8000, scoped, tag = 'output window, operand 0']
    %20 = vsyncpa [#allocation3], 0
    %s21 = scalar_lea.sflag [#allocation3], 1
    %22 = vsyncpa %s21, 0
    %23 = vsyncpa [#allocation6], 0
    %24 = vsyncpa [#allocation9], 0
    %25 = vsyncpa [#allocation4], 0
    %s26 = scalar_lea.sflag [#allocation4], 1
    %27 = vsyncpa %s26, 0
    loop: start=0, step=1, limit=4
    $region2: #{tpu_custom_call.1} parent=1 // loop_pre_header
      _
    $region3: #{tpu_custom_call.1} parent=1 // loop_header
      %s29 = sphi 0, %s33
      %p30 = scmp.ge.s32.totalorder %s29, 4
      %s39 = sphi 0, %s41
      %s42 = sphi 0, %s39
      %s43 = sphi 0, %s42
      %s59 = sphi 0, %s43
      %s63 = sphi 0, %s63
      %s65 = sphi 0, %s63
      %s66 = sphi 0, %s65
      %s80 = sphi 0, %s66
      %s84 = sphi 0, %s84
      %s86 = sphi 0, %s84
      %s87 = sphi 0, %s86
      %s101 = sphi 0, %s87
      %s105 = sphi 0, %s105
      %s107 = sphi 0, %s105
      %s108 = sphi 0, %s107
      %s122 = sphi 0, %s108
      %s126 = sphi 0, %s126
      %s128 = sphi 0, %s126
      %s129 = sphi 0, %s128
      %s143 = sphi 0, %s129
      %s147 = sphi 0, %s147
      %s149 = sphi 0, %s147
      %s150 = sphi 0, %s149
      %s164 = sphi 0, %s150
      %s168 = sphi 0, %s168
      %s170 = sphi 0, %s168
      %s171 = sphi 0, %s170
      %s185 = sphi 0, %s171
      %s189 = sphi 0, %s189
      %s191 = sphi 0, %s189
      %s192 = sphi 0, %s191
      %s206 = sphi 0, %s192
      %s210 = sphi 0, %s210
      %s212 = sphi 0, %s210
      %s213 = sphi 0, %s212
      %s227 = sphi 0, %s213
      %s231 = sphi 0, %s231
      %s233 = sphi 0, %s231
      %s234 = sphi 0, %s233
      %s248 = sphi 0, %s234
      %s252 = sphi 0, %s252
      %s254 = sphi 0, %s252
      %s255 = sphi 0, %s254
      %s269 = sphi 0, %s255
      %s273 = sphi 0, %s273
      %s275 = sphi 0, %s273
      %s276 = sphi 0, %s275
      %s290 = sphi 0, %s276
      %s294 = sphi 0, %s294
      %s296 = sphi 0, %s294
      %s297 = sphi 0, %s296
      %s311 = sphi 0, %s297
      %s315 = sphi 0, %s315
      %s317 = sphi 0, %s315
      %s318 = sphi 0, %s317
      %s332 = sphi 0, %s318
      %s336 = sphi 0, %s336
      %s338 = sphi 0, %s336
      %s339 = sphi 0, %s338
      %s353 = sphi 0, %s339
      %s359 = sphi 0, %s361
      %s362 = sphi 0, %s359
      %s363 = sphi 0, %s362
      %s379 = sphi 0, %s363
    $region4: #{tpu_custom_call.1} parent=1 // loop_header_branch
      %32 = sbr.rel (%p30) target = $region8
    $region5: #{tpu_custom_call.1} parent=1 // loop_body
      %s34 = ssub.s32 %s29, 1
      %s35 = ssub.s32 %s29, 2
      %s36 = sadd.s32 %s29, 1
      %s37 = ssub.s32 %s29, %s36
      %p38 = scmp.eq.s32.totalorder %s37, 0
      %s40 = sadd.s32 %s39, 1
      %s41 = scalar_select %p38, %s39, %s40
      %p44 = pneg %p38
      %p45 = scmp.eq.s32.totalorder %s29, 1
      %p46 = por %p44, %p45
      %p47 = scmp.ne.s32.totalorder %s39, %s42
      %p48 = scmp.eq.s32.totalorder %s29, 0
      %p49 = por %p47, %p48
      %p50 = scmp.ne.s32.totalorder %s39, %s42
      %p51 = scmp.eq.s32.totalorder %s34, 1
      %p52 = por %p50, %p51
      %p53 = scmp.ne.s32.totalorder %s42, %s43
      %p54 = scmp.eq.s32.totalorder %s34, 0
      %p55 = por %p53, %p54
      %p56 = scmp.ne.s32.totalorder %s42, %s43
      %p57 = scmp.eq.s32.totalorder %s35, 1
      %p58 = por %p56, %p57
      %p60 = scmp.ne.s32.totalorder %s43, %s59
      %p61 = scmp.eq.s32.totalorder %s35, 0
      %p62 = por %p60, %p61
      %s64 = sadd.s32 %s63, 1
      %p67 = scmp.eq.s32.totalorder %s29, 1
      %p68 = scmp.ne.s32.totalorder %s63, %s65
      %p69 = scmp.eq.s32.totalorder %s29, 0
      %p70 = por %p68, %p69
      %p71 = scmp.ne.s32.totalorder %s63, %s65
      %p72 = scmp.eq.s32.totalorder %s34, 1
      %p73 = por %p71, %p72
      %p74 = scmp.ne.s32.totalorder %s65, %s66
      %p75 = scmp.eq.s32.totalorder %s34, 0
      %p76 = por %p74, %p75
      %p77 = scmp.ne.s32.totalorder %s65, %s66
      %p78 = scmp.eq.s32.totalorder %s35, 1
      %p79 = por %p77, %p78
      %p81 = scmp.ne.s32.totalorder %s66, %s80
      %p82 = scmp.eq.s32.totalorder %s35, 0
      %p83 = por %p81, %p82
      %s85 = sadd.s32 %s84, 1
      %p88 = scmp.eq.s32.totalorder %s29, 1
      %p89 = scmp.ne.s32.totalorder %s84, %s86
      %p90 = scmp.eq.s32.totalorder %s29, 0
      %p91 = por %p89, %p90
      %p92 = scmp.ne.s32.totalorder %s84, %s86
      %p93 = scmp.eq.s32.totalorder %s34, 1
      %p94 = por %p92, %p93
      %p95 = scmp.ne.s32.totalorder %s86, %s87
      %p96 = scmp.eq.s32.totalorder %s34, 0
      %p97 = por %p95, %p96
      %p98 = scmp.ne.s32.totalorder %s86, %s87
      %p99 = scmp.eq.s32.totalorder %s35, 1
      %p100 = por %p98, %p99
      %p102 = scmp.ne.s32.totalorder %s87, %s101
      %p103 = scmp.eq.s32.totalorder %s35, 0
      %p104 = por %p102, %p103
      %s106 = sadd.s32 %s105, 1
      %p109 = scmp.eq.s32.totalorder %s29, 1
      %p110 = scmp.ne.s32.totalorder %s105, %s107
      %p111 = scmp.eq.s32.totalorder %s29, 0
      %p112 = por %p110, %p111
      %p113 = scmp.ne.s32.totalorder %s105, %s107
      %p114 = scmp.eq.s32.totalorder %s34, 1
      %p115 = por %p113, %p114
      %p116 = scmp.ne.s32.totalorder %s107, %s108
      %p117 = scmp.eq.s32.totalorder %s34, 0
      %p118 = por %p116, %p117
      %p119 = scmp.ne.s32.totalorder %s107, %s108
      %p120 = scmp.eq.s32.totalorder %s35, 1
      %p121 = por %p119, %p120
      %p123 = scmp.ne.s32.totalorder %s108, %s122
      %p124 = scmp.eq.s32.totalorder %s35, 0
      %p125 = por %p123, %p124
      %s127 = sadd.s32 %s126, 1
      %p130 = scmp.eq.s32.totalorder %s29, 1
      %p131 = scmp.ne.s32.totalorder %s126, %s128
      %p132 = scmp.eq.s32.totalorder %s29, 0
      %p133 = por %p131, %p132
      %p134 = scmp.ne.s32.totalorder %s126, %s128
      %p135 = scmp.eq.s32.totalorder %s34, 1
      %p136 = por %p134, %p135
      %p137 = scmp.ne.s32.totalorder %s128, %s129
      %p138 = scmp.eq.s32.totalorder %s34, 0
      %p139 = por %p137, %p138
      %p140 = scmp.ne.s32.totalorder %s128, %s129
      %p141 = scmp.eq.s32.totalorder %s35, 1
      %p142 = por %p140, %p141
      %p144 = scmp.ne.s32.totalorder %s129, %s143
      %p145 = scmp.eq.s32.totalorder %s35, 0
      %p146 = por %p144, %p145
      %s148 = sadd.s32 %s147, 1
      %p151 = scmp.eq.s32.totalorder %s29, 1
      %p152 = scmp.ne.s32.totalorder %s147, %s149
      %p153 = scmp.eq.s32.totalorder %s29, 0
      %p154 = por %p152, %p153
      %p155 = scmp.ne.s32.totalorder %s147, %s149
      %p156 = scmp.eq.s32.totalorder %s34, 1
      %p157 = por %p155, %p156
      %p158 = scmp.ne.s32.totalorder %s149, %s150
      %p159 = scmp.eq.s32.totalorder %s34, 0
      %p160 = por %p158, %p159
      %p161 = scmp.ne.s32.totalorder %s149, %s150
      %p162 = scmp.eq.s32.totalorder %s35, 1
      %p163 = por %p161, %p162
      %p165 = scmp.ne.s32.totalorder %s150, %s164
      %p166 = scmp.eq.s32.totalorder %s35, 0
      %p167 = por %p165, %p166
      %s169 = sadd.s32 %s168, 1
      %p172 = scmp.eq.s32.totalorder %s29, 1
      %p173 = scmp.ne.s32.totalorder %s168, %s170
      %p174 = scmp.eq.s32.totalorder %s29, 0
      %p175 = por %p173, %p174
      %p176 = scmp.ne.s32.totalorder %s168, %s170
      %p177 = scmp.eq.s32.totalorder %s34, 1
      %p178 = por %p176, %p177
      %p179 = scmp.ne.s32.totalorder %s170, %s171
      %p180 = scmp.eq.s32.totalorder %s34, 0
      %p181 = por %p179, %p180
      %p182 = scmp.ne.s32.totalorder %s170, %s171
      %p183 = scmp.eq.s32.totalorder %s35, 1
      %p184 = por %p182, %p183
      %p186 = scmp.ne.s32.totalorder %s171, %s185
      %p187 = scmp.eq.s32.totalorder %s35, 0
      %p188 = por %p186, %p187
      %s190 = sadd.s32 %s189, 1
      %p193 = scmp.eq.s32.totalorder %s29, 1
      %p194 = scmp.ne.s32.totalorder %s189, %s191
      %p195 = scmp.eq.s32.totalorder %s29, 0
      %p196 = por %p194, %p195
      %p197 = scmp.ne.s32.totalorder %s189, %s191
      %p198 = scmp.eq.s32.totalorder %s34, 1
      %p199 = por %p197, %p198
      %p200 = scmp.ne.s32.totalorder %s191, %s192
      %p201 = scmp.eq.s32.totalorder %s34, 0
      %p202 = por %p200, %p201
      %p203 = scmp.ne.s32.totalorder %s191, %s192
      %p204 = scmp.eq.s32.totalorder %s35, 1
      %p205 = por %p203, %p204
      %p207 = scmp.ne.s32.totalorder %s192, %s206
      %p208 = scmp.eq.s32.totalorder %s35, 0
      %p209 = por %p207, %p208
      %s211 = sadd.s32 %s210, 1
      %p214 = scmp.eq.s32.totalorder %s29, 1
      %p215 = scmp.ne.s32.totalorder %s210, %s212
      %p216 = scmp.eq.s32.totalorder %s29, 0
      %p217 = por %p215, %p216
      %p218 = scmp.ne.s32.totalorder %s210, %s212
      %p219 = scmp.eq.s32.totalorder %s34, 1
      %p220 = por %p218, %p219
      %p221 = scmp.ne.s32.totalorder %s212, %s213
      %p222 = scmp.eq.s32.totalorder %s34, 0
      %p223 = por %p221, %p222
      %p224 = scmp.ne.s32.totalorder %s212, %s213
      %p225 = scmp.eq.s32.totalorder %s35, 1
      %p226 = por %p224, %p225
      %p228 = scmp.ne.s32.totalorder %s213, %s227
      %p229 = scmp.eq.s32.totalorder %s35, 0
      %p230 = por %p228, %p229
      %s232 = sadd.s32 %s231, 1
      %p235 = scmp.eq.s32.totalorder %s29, 1
      %p236 = scmp.ne.s32.totalorder %s231, %s233
      %p237 = scmp.eq.s32.totalorder %s29, 0
      %p238 = por %p236, %p237
      %p239 = scmp.ne.s32.totalorder %s231, %s233
      %p240 = scmp.eq.s32.totalorder %s34, 1
      %p241 = por %p239, %p240
      %p242 = scmp.ne.s32.totalorder %s233, %s234
      %p243 = scmp.eq.s32.totalorder %s34, 0
      %p244 = por %p242, %p243
      %p245 = scmp.ne.s32.totalorder %s233, %s234
      %p246 = scmp.eq.s32.totalorder %s35, 1
      %p247 = por %p245, %p246
      %p249 = scmp.ne.s32.totalorder %s234, %s248
      %p250 = scmp.eq.s32.totalorder %s35, 0
      %p251 = por %p249, %p250
      %s253 = sadd.s32 %s252, 1
      %p256 = scmp.eq.s32.totalorder %s29, 1
      %p257 = scmp.ne.s32.totalorder %s252, %s254
      %p258 = scmp.eq.s32.totalorder %s29, 0
      %p259 = por %p257, %p258
      %p260 = scmp.ne.s32.totalorder %s252, %s254
      %p261 = scmp.eq.s32.totalorder %s34, 1
      %p262 = por %p260, %p261
      %p263 = scmp.ne.s32.totalorder %s254, %s255
      %p264 = scmp.eq.s32.totalorder %s34, 0
      %p265 = por %p263, %p264
      %p266 = scmp.ne.s32.totalorder %s254, %s255
      %p267 = scmp.eq.s32.totalorder %s35, 1
      %p268 = por %p266, %p267
      %p270 = scmp.ne.s32.totalorder %s255, %s269
      %p271 = scmp.eq.s32.totalorder %s35, 0
      %p272 = por %p270, %p271
      %s274 = sadd.s32 %s273, 1
      %p277 = scmp.eq.s32.totalorder %s29, 1
      %p278 = scmp.ne.s32.totalorder %s273, %s275
      %p279 = scmp.eq.s32.totalorder %s29, 0
      %p280 = por %p278, %p279
      %p281 = scmp.ne.s32.totalorder %s273, %s275
      %p282 = scmp.eq.s32.totalorder %s34, 1
      %p283 = por %p281, %p282
      %p284 = scmp.ne.s32.totalorder %s275, %s276
      %p285 = scmp.eq.s32.totalorder %s34, 0
      %p286 = por %p284, %p285
      %p287 = scmp.ne.s32.totalorder %s275, %s276
      %p288 = scmp.eq.s32.totalorder %s35, 1
      %p289 = por %p287, %p288
      %p291 = scmp.ne.s32.totalorder %s276, %s290
      %p292 = scmp.eq.s32.totalorder %s35, 0
      %p293 = por %p291, %p292
      %s295 = sadd.s32 %s294, 1
      %p298 = scmp.eq.s32.totalorder %s29, 1
      %p299 = scmp.ne.s32.totalorder %s294, %s296
      %p300 = scmp.eq.s32.totalorder %s29, 0
      %p301 = por %p299, %p300
      %p302 = scmp.ne.s32.totalorder %s294, %s296
      %p303 = scmp.eq.s32.totalorder %s34, 1
      %p304 = por %p302, %p303
      %p305 = scmp.ne.s32.totalorder %s296, %s297
      %p306 = scmp.eq.s32.totalorder %s34, 0
      %p307 = por %p305, %p306
      %p308 = scmp.ne.s32.totalorder %s296, %s297
      %p309 = scmp.eq.s32.totalorder %s35, 1
      %p310 = por %p308, %p309
      %p312 = scmp.ne.s32.totalorder %s297, %s311
      %p313 = scmp.eq.s32.totalorder %s35, 0
      %p314 = por %p312, %p313
      %s316 = sadd.s32 %s315, 1
      %p319 = scmp.eq.s32.totalorder %s29, 1
      %p320 = scmp.ne.s32.totalorder %s315, %s317
      %p321 = scmp.eq.s32.totalorder %s29, 0
      %p322 = por %p320, %p321
      %p323 = scmp.ne.s32.totalorder %s315, %s317
      %p324 = scmp.eq.s32.totalorder %s34, 1
      %p325 = por %p323, %p324
      %p326 = scmp.ne.s32.totalorder %s317, %s318
      %p327 = scmp.eq.s32.totalorder %s34, 0
      %p328 = por %p326, %p327
      %p329 = scmp.ne.s32.totalorder %s317, %s318
      %p330 = scmp.eq.s32.totalorder %s35, 1
      %p331 = por %p329, %p330
      %p333 = scmp.ne.s32.totalorder %s318, %s332
      %p334 = scmp.eq.s32.totalorder %s35, 0
      %p335 = por %p333, %p334
      %s337 = sadd.s32 %s336, 1
      %p340 = scmp.eq.s32.totalorder %s29, 1
      %p341 = scmp.ne.s32.totalorder %s336, %s338
      %p342 = scmp.eq.s32.totalorder %s29, 0
      %p343 = por %p341, %p342
      %p344 = scmp.ne.s32.totalorder %s336, %s338
      %p345 = scmp.eq.s32.totalorder %s34, 1
      %p346 = por %p344, %p345
      %p347 = scmp.ne.s32.totalorder %s338, %s339
      %p348 = scmp.eq.s32.totalorder %s34, 0
      %p349 = por %p347, %p348
      %p350 = scmp.ne.s32.totalorder %s338, %s339
      %p351 = scmp.eq.s32.totalorder %s35, 1
      %p352 = por %p350, %p351
      %p354 = scmp.ne.s32.totalorder %s339, %s353
      %p355 = scmp.eq.s32.totalorder %s35, 0
      %p356 = por %p354, %p355
      %s357 = ssub.s32 %s29, %s36
      %p358 = scmp.eq.s32.totalorder %s357, 0
      %s360 = sadd.s32 %s359, 1
      %s361 = scalar_select %p358, %s359, %s360
      %p364 = pneg %p358
      %p365 = scmp.eq.s32.totalorder %s29, 1
      %p366 = por %p364, %p365
      %p367 = scmp.ne.s32.totalorder %s359, %s362
      %p368 = scmp.eq.s32.totalorder %s29, 0
      %p369 = por %p367, %p368
      %p370 = scmp.ne.s32.totalorder %s359, %s362
      %p371 = scmp.eq.s32.totalorder %s34, 1
      %p372 = por %p370, %p371
      %p373 = scmp.ne.s32.totalorder %s362, %s363
      %p374 = scmp.eq.s32.totalorder %s34, 0
      %p375 = por %p373, %p374
      %p376 = scmp.ne.s32.totalorder %s362, %s363
      %p377 = scmp.eq.s32.totalorder %s35, 1
      %p378 = por %p376, %p377
      %p380 = scmp.ne.s32.totalorder %s363, %s379
      %p381 = scmp.eq.s32.totalorder %s35, 0
      %p382 = por %p380, %p381
      %p383 = scmp.le.s32.totalorder 1, %s29
      %p384 = scmp.lt.s32.totalorder %s29, 3
      %p385 = pnand %p383, %p384
      %p386 = pneg %p385
      // Predicated region
      $region9: #{tpu_custom_call.1} parent=5 // pred_check
        _
      $region10: #{tpu_custom_call.1} parent=5 // pred_check_branch
        %388 = sbr.rel (%p385) target = $region12
      $region11: #{tpu_custom_call.1} parent=5 // pred_region
        %s389 = ssub.s32 %s29, 1
        // Predicated region
        $region13: #{tpu_custom_call.1} parent=11 // pred_check
          %p390 = pneg %p76
        $region14: #{tpu_custom_call.1} parent=11 // pred_check_branch
          %392 = sbr.rel (%p390) target = $region16
        $region15: #{tpu_custom_call.1} parent=11 // pred_region
          _
        $region16: #{tpu_custom_call.1} parent=11 // pred_fallthru
          _
        // Predicated region
        $region17: #{tpu_custom_call.1} parent=11 // pred_check
          %p393 = pneg %p97
        $region18: #{tpu_custom_call.1} parent=11 // pred_check_branch
          %395 = sbr.rel (%p393) target = $region20
        $region19: #{tpu_custom_call.1} parent=11 // pred_region
          _
        $region20: #{tpu_custom_call.1} parent=11 // pred_fallthru
          _
        // Predicated region
        $region21: #{tpu_custom_call.1} parent=11 // pred_check
          %p396 = pneg %p118
        $region22: #{tpu_custom_call.1} parent=11 // pred_check_branch
          %398 = sbr.rel (%p396) target = $region24
        $region23: #{tpu_custom_call.1} parent=11 // pred_region
          %s400 = ssub.s32 256, 256
          %401 = vsyncadd [#allocation6], %s400
          %s402 = sshll.u32 [#allocation5], 4
          %s403 = int_to_ptr.vmem [resolvable:$true] %s402
          %408 = dma.hbm_to_vmem [thread:$0]  %s3, 256, %s403, [#allocation6], 128, 128, 8
        $region24: #{tpu_custom_call.1} parent=11 // pred_fallthru
          _
        // Predicated region
        $region25: #{tpu_custom_call.1} parent=11 // pred_check
          %p409 = pneg %p139
        $region26: #{tpu_custom_call.1} parent=11 // pred_check_branch
          %411 = sbr.rel (%p409) target = $region28
        $region27: #{tpu_custom_call.1} parent=11 // pred_region
          _
        $region28: #{tpu_custom_call.1} parent=11 // pred_fallthru
          _
        // Predicated region
        $region29: #{tpu_custom_call.1} parent=11 // pred_check
          %p412 = pneg %p160
        $region30: #{tpu_custom_call.1} parent=11 // pred_check_branch
          %414 = sbr.rel (%p412) target = $region32
        $region31: #{tpu_custom_call.1} parent=11 // pred_region
          _
        $region32: #{tpu_custom_call.1} parent=11 // pred_fallthru
          _
        // Predicated region
        $region33: #{tpu_custom_call.1} parent=11 // pred_check
          %p415 = pneg %p181
        $region34: #{tpu_custom_call.1} parent=11 // pred_check_branch
          %417 = sbr.rel (%p415) target = $region36
        $region35: #{tpu_custom_call.1} parent=11 // pred_region
          _
        $region36: #{tpu_custom_call.1} parent=11 // pred_fallthru
          _
        // Predicated region
        $region37: #{tpu_custom_call.1} parent=11 // pred_check
          %p418 = pneg %p202
        $region38: #{tpu_custom_call.1} parent=11 // pred_check_branch
          %420 = sbr.rel (%p418) target = $region40
        $region39: #{tpu_custom_call.1} parent=11 // pred_region
          %s422 = ssub.s32 256, 256
          %423 = vsyncadd [#allocation6], %s422
          %s424 = sshll.u32 [#allocation7], 4
          %s425 = int_to_ptr.vmem [resolvable:$true] %s424
          %430 = dma.hbm_to_vmem [thread:$0]  %s7, 256, %s425, [#allocation6], 128, 128, 8
        $region40: #{tpu_custom_call.1} parent=11 // pred_fallthru
          _
        // Predicated region
        $region41: #{tpu_custom_call.1} parent=11 // pred_check
          %p431 = pneg %p223
        $region42: #{tpu_custom_call.1} parent=11 // pred_check_branch
          %433 = sbr.rel (%p431) target = $region44
        $region43: #{tpu_custom_call.1} parent=11 // pred_region
          _
        $region44: #{tpu_custom_call.1} parent=11 // pred_fallthru
          _
        // Predicated region
        $region45: #{tpu_custom_call.1} parent=11 // pred_check
          %p434 = pneg %p244
        $region46: #{tpu_custom_call.1} parent=11 // pred_check_branch
          %436 = sbr.rel (%p434) target = $region48
        $region47: #{tpu_custom_call.1} parent=11 // pred_region
          _
        $region48: #{tpu_custom_call.1} parent=11 // pred_fallthru
          _
        // Predicated region
        $region49: #{tpu_custom_call.1} parent=11 // pred_check
          %p437 = pneg %p265
        $region50: #{tpu_custom_call.1} parent=11 // pred_check_branch
          %439 = sbr.rel (%p437) target = $region52
        $region51: #{tpu_custom_call.1} parent=11 // pred_region
          _
        $region52: #{tpu_custom_call.1} parent=11 // pred_fallthru
          _
        // Predicated region
        $region53: #{tpu_custom_call.1} parent=11 // pred_check
          %p440 = pneg %p286
        $region54: #{tpu_custom_call.1} parent=11 // pred_check_branch
          %442 = sbr.rel (%p440) target = $region56
        $region55: #{tpu_custom_call.1} parent=11 // pred_region
          _
        $region56: #{tpu_custom_call.1} parent=11 // pred_fallthru
          _
        // Predicated region
        $region57: #{tpu_custom_call.1} parent=11 // pred_check
          %p443 = pneg %p307
        $region58: #{tpu_custom_call.1} parent=11 // pred_check_branch
          %445 = sbr.rel (%p443) target = $region60
        $region59: #{tpu_custom_call.1} parent=11 // pred_region
          _
        $region60: #{tpu_custom_call.1} parent=11 // pred_fallthru
          _
        // Predicated region
        $region61: #{tpu_custom_call.1} parent=11 // pred_check
          %p446 = pneg %p328
        $region62: #{tpu_custom_call.1} parent=11 // pred_check_branch
          %448 = sbr.rel (%p446) target = $region64
        $region63: #{tpu_custom_call.1} parent=11 // pred_region
          %s450 = ssub.s32 2048, 2048
          %451 = vsyncadd [#allocation9], %s450
          %s452 = sshll.u32 [#allocation8], 4
          %s453 = int_to_ptr.vmem [resolvable:$true] %s452
          %458 = dma.hbm_to_vmem [thread:$0]  %s13, 2048, %s453, [#allocation9], 128, 128, 8
        $region64: #{tpu_custom_call.1} parent=11 // pred_fallthru
          _
        // Predicated region
        $region65: #{tpu_custom_call.1} parent=11 // pred_check
          %p459 = pneg %p349
        $region66: #{tpu_custom_call.1} parent=11 // pred_check_branch
          %461 = sbr.rel (%p459) target = $region68
        $region67: #{tpu_custom_call.1} parent=11 // pred_region
          _
        $region68: #{tpu_custom_call.1} parent=11 // pred_fallthru
          _
      $region12: #{tpu_custom_call.1} parent=5 // pred_fallthru
        _
      %p462 = scmp.lt.s32.totalorder %s29, 2
      // Predicated region
      $region69: #{tpu_custom_call.1} parent=5 // pred_check
        %p463 = pneg %p462
      $region70: #{tpu_custom_call.1} parent=5 // pred_check_branch
        %465 = sbr.rel (%p463) target = $region72
      $region71: #{tpu_custom_call.1} parent=5 // pred_region
        // Predicated region
        $region73: #{tpu_custom_call.1} parent=71 // pred_check
          %p466 = pneg %p49
        $region74: #{tpu_custom_call.1} parent=71 // pred_check_branch
          %468 = sbr.rel (%p466) target = $region76
        $region75: #{tpu_custom_call.1} parent=71 // pred_region
          %s469 = sand.u32 %s39, 1
          %s470 = scalar_lea.sflag [#allocation3], %s469
          %s471 = sand.u32 %s39, 1
          %s472 = smul.addr %s471, 32
          %s473 = scalar_lea.vmem [#allocation2], %s472
          %s474 = smul.u32 2, %s29
          %s476 = ssub.s32 512, 512
          %477 = vsyncadd %s470, %s476
          %s478 = smul.addr %s474, 2
          %s479 = smul.addr %s478, 128
          %s480 = scalar_lea.hbm %s0, %s479
          %s481 = sshll.u32 %s473, 4
          %s482 = int_to_ptr.vmem [resolvable:$true] %s481
          %487 = dma.hbm_to_vmem [thread:$0]  %s480, 512, %s482, %s470, 128, 128, 8
        $region76: #{tpu_custom_call.1} parent=71 // pred_fallthru
          _
      $region72: #{tpu_custom_call.1} parent=5 // pred_fallthru
        _
      %p488 = scmp.le.s32.totalorder 1, %s29
      %p489 = scmp.lt.s32.totalorder %s29, 3
      %p490 = pnand %p488, %p489
      %p491 = pneg %p490
      // Predicated region
      $region77: #{tpu_custom_call.1} parent=5 // pred_check
        _
      $region78: #{tpu_custom_call.1} parent=5 // pred_check_branch
        %493 = sbr.rel (%p490) target = $region80
      $region79: #{tpu_custom_call.1} parent=5 // pred_region
        %s494 = ssub.s32 %s29, 1
        %s495 = sand.u32 %s42, 1
        %s496 = scalar_lea.sflag [#allocation3], %s495
        %s497 = sand.u32 %s42, 1
        %s498 = smul.addr %s497, 32
        %s499 = scalar_lea.vmem [#allocation2], %s498
        // Predicated region
        $region81: #{tpu_custom_call.1} parent=79 // pred_check
          %p500 = pneg %p55
        $region82: #{tpu_custom_call.1} parent=79 // pred_check_branch
          %502 = sbr.rel (%p500) target = $region84
        $region83: #{tpu_custom_call.1} parent=79 // pred_region
          %503 = dma.done %s496, 512
        $region84: #{tpu_custom_call.1} parent=79 // pred_fallthru
          _
        // Predicated region
        $region85: #{tpu_custom_call.1} parent=79 // pred_check
          %p504 = pneg %p118
        $region86: #{tpu_custom_call.1} parent=79 // pred_check_branch
          %506 = sbr.rel (%p504) target = $region88
        $region87: #{tpu_custom_call.1} parent=79 // pred_region
          %507 = dma.done [#allocation6], 256
        $region88: #{tpu_custom_call.1} parent=79 // pred_fallthru
          _
        // Predicated region
        $region89: #{tpu_custom_call.1} parent=79 // pred_check
          %p508 = pneg %p202
        $region90: #{tpu_custom_call.1} parent=79 // pred_check_branch
          %510 = sbr.rel (%p508) target = $region92
        $region91: #{tpu_custom_call.1} parent=79 // pred_region
          %511 = dma.done [#allocation6], 256
        $region92: #{tpu_custom_call.1} parent=79 // pred_fallthru
          _
        // Predicated region
        $region93: #{tpu_custom_call.1} parent=79 // pred_check
          %p512 = pneg %p328
        $region94: #{tpu_custom_call.1} parent=79 // pred_check_branch
          %514 = sbr.rel (%p512) target = $region96
        $region95: #{tpu_custom_call.1} parent=79 // pred_region
          %515 = dma.done [#allocation9], 2048
        $region96: #{tpu_custom_call.1} parent=79 // pred_fallthru
          _
        %s516 = sand.u32 %s42, 1
        %s517 = scalar_lea.sflag [#allocation3], %s516
        %s518 = sand.u32 %s42, 1
        %s519 = smul.addr %s518, 32
        %s520 = scalar_lea.vmem [#allocation2], %s519
        %p521 = pneg %p55
        %p522 = pneg %p52
        %p523 = pneg %p76
        %p524 = pneg %p73
        %p525 = pneg %p97
        %p526 = pneg %p94
        %p527 = pneg %p118
        %p528 = pneg %p115
        %p529 = pneg %p139
        %p530 = pneg %p136
        %p531 = pneg %p160
        %p532 = pneg %p157
        %p533 = pneg %p181
        %p534 = pneg %p178
        %p535 = pneg %p202
        %p536 = pneg %p199
        %p537 = pneg %p223
        %p538 = pneg %p220
        %p539 = pneg %p244
        %p540 = pneg %p241
        %p541 = pneg %p265
        %p542 = pneg %p262
        %p543 = pneg %p286
        %p544 = pneg %p283
        %p545 = pneg %p307
        %p546 = pneg %p304
        %p547 = pneg %p328
        %p548 = pneg %p325
        %p549 = pneg %p349
        %p550 = pneg %p346
        %p551 = pneg %p375
        %p552 = pneg %p372
        %s553 = sand.u32 %s362, 1
        %s554 = scalar_lea.sflag [#allocation4], %s553
        %s555 = sand.u32 %s362, 1
        %s556 = smul.addr %s555, 32
        %s557 = scalar_lea.vmem [#allocation10], %s556
        %s558 = smul.u32 2, %s34
        %s559 = smul.u32 2, %s34
        %v560 = vld [vmem:[%s499] sm:$0xff]
        %v561 = vld [vmem:[%s499 + $0x8] sm:$0xff]
        %v562 = vld [vmem:[%s499 + $0x10] sm:$0xff]
        %v563 = vld [vmem:[%s499 + $0x18] sm:$0xff]
        %564 = vadd.xlane.f32.xlu0 %v560
        %v565 = vpop.xlane.xlu0 %564
        %566 = vadd.xlane.f32.xlu0 %v561
        %v567 = vpop.xlane.xlu0 %566
        %568 = vadd.xlane.f32.xlu0 %v562
        %v569 = vpop.xlane.xlu0 %568
        %570 = vadd.xlane.f32.xlu0 %v563
        %v571 = vpop.xlane.xlu0 %570
        %v572 = vmul.f32 %v565, 0.0078125
        %v573 = vmul.f32 %v567, 0.0078125
        %v574 = vmul.f32 %v569, 0.0078125
        %v575 = vmul.f32 %v571, 0.0078125
        %v576 = vadd.f32 %v560, %v561
        %v577 = vrot.slane %v576, 4
        %v578 = vadd.f32 %v576, %v577
        %v579 = vrot.slane %v578, 2
        %v580 = vadd.f32 %v578, %v579
        %v581 = vrot.slane %v580, 1
        %v582 = vadd.f32 %v580, %v581
        %v583 = vadd.f32 %v562, %v563
        %v584 = vrot.slane %v583, 4
        %v585 = vadd.f32 %v583, %v584
        %v586 = vrot.slane %v585, 2
        %v587 = vadd.f32 %v585, %v586
        %v588 = vrot.slane %v587, 1
        %v589 = vadd.f32 %v587, %v588
        %v590 = vmul.f32 %v582, 0.0625
        %v591 = vmul.f32 %v589, 0.0625
        %v592 = vld [vmem:[%s1] sm:$0xff]
        %v593 = vld [vmem:[%s1 + $0x8] sm:$0xff]
        %v594 = vld [vmem:[%s2] sm:$0xff]
        %v595 = vld [vmem:[%s2 + $0x8] sm:$0xff]
        %v596 = vld [vmem:[%s2 + $0x10] sm:$0xff]
        %v597 = vld [vmem:[%s2 + $0x18] sm:$0xff]
        %v598 = vld [vmem:[%s2 + $0x20] sm:$0xff]
        %v599 = vld [vmem:[%s2 + $0x28] sm:$0xff]
        %v600 = vld [vmem:[%s2 + $0x30] sm:$0xff]
        %v601 = vld [vmem:[%s2 + $0x38] sm:$0xff]
        %v602 = vld [vmem:[%s2 + $0x40] sm:$0xff]
        %v603 = vld [vmem:[%s2 + $0x48] sm:$0xff]
        %v604 = vld [vmem:[%s2 + $0x50] sm:$0xff]
        %v605 = vld [vmem:[%s2 + $0x58] sm:$0xff]
        %v606 = vld [vmem:[%s2 + $0x60] sm:$0xff]
        %v607 = vld [vmem:[%s2 + $0x68] sm:$0xff]
        %v608 = vld [vmem:[%s2 + $0x70] sm:$0xff]
        %v609 = vld [vmem:[%s2 + $0x78] sm:$0xff]
        %vm612 = vcmask 1041409
        %v613 = vsel %vm612, %v591, %v590
        %615 = vmatprep.subr.mxu0 0.0
        %616 = vmatpush1.msra.mxu0 %v609
        %617 = vmatprep.subr.mxu0 0.0
        %618 = vmatpush1.msra.mxu0 %v608
        %619 = vmatprep.subr.mxu0 0.0
        %620 = vmatpush1.msra.mxu0 %v607
        %621 = vmatprep.subr.mxu0 0.0
        %622 = vmatpush1.msra.mxu0 %v606
        %623 = vmatprep.subr.mxu0 0.0
        %624 = vmatpush1.msra.mxu0 %v605
        %625 = vmatprep.subr.mxu0 0.0
        %626 = vmatpush1.msra.mxu0 %v604
        %627 = vmatprep.subr.mxu0 0.0
        %628 = vmatpush1.msra.mxu0 %v603
        %629 = vmatprep.subr.mxu0 0.0
        %630 = vmatpush1.msra.mxu0 %v602
        %631 = vmatprep.subr.mxu0 0.0
        %632 = vmatpush1.msra.mxu0 %v601
        %633 = vmatprep.subr.mxu0 0.0
        %634 = vmatpush1.msra.mxu0 %v600
        %635 = vmatprep.subr.mxu0 0.0
        %636 = vmatpush1.msra.mxu0 %v599
        %637 = vmatprep.subr.mxu0 0.0
        %638 = vmatpush1.msra.mxu0 %v598
        %639 = vmatprep.subr.mxu0 0.0
        %640 = vmatpush1.msra.mxu0 %v597
        %641 = vmatprep.subr.mxu0 0.0
        %642 = vmatpush1.msra.mxu0 %v596
        %643 = vmatprep.subr.mxu0 0.0
        %644 = vmatpush1.msra.mxu0 %v595
        %645 = vmatprep.subr.mxu0 0.0
        %646 = vmatpush1.msra.mxu0 %v594
        %647 = vmatprep.subr.mxu0 0.0
        %648 = vmatpush2.msra.mxu0 0.0
        %649 = vmatprep.subr.mxu0 0.0
        %650 = vmatpush2.msra.mxu0 0.0
        %651 = vmatprep.subr.mxu0 0.0
        %652 = vmatpush2.msra.mxu0 0.0
        %653 = vmatprep.subr.mxu0 0.0
        %654 = vmatpush2.msra.mxu0 0.0
        %655 = vmatprep.subr.mxu0 0.0
        %656 = vmatpush2.msra.mxu0 0.0
        %657 = vmatprep.subr.mxu0 0.0
        %658 = vmatpush2.msra.mxu0 0.0
        %659 = vmatprep.subr.mxu0 0.0
        %660 = vmatpush2.msra.mxu0 0.0
        %661 = vmatprep.subr.mxu0 0.0
        %662 = vmatpush2.msra.mxu0 0.0
        %663 = vmatprep.subr.mxu0 0.0
        %664 = vmatpush2.msra.mxu0 0.0
        %665 = vmatprep.subr.mxu0 0.0
        %666 = vmatpush2.msra.mxu0 0.0
        %667 = vmatprep.subr.mxu0 0.0
        %668 = vmatpush2.msra.mxu0 0.0
        %669 = vmatprep.subr.mxu0 0.0
        %670 = vmatpush2.msra.mxu0 0.0
        %671 = vmatprep.subr.mxu0 0.0
        %672 = vmatpush2.msra.mxu0 0.0
        %673 = vmatprep.subr.mxu0 0.0
        %674 = vmatpush2.msra.mxu0 0.0
        %675 = vmatprep.subr.mxu0 0.0
        %676 = vmatpush2.msra.mxu0 0.0
        %677 = vmatprep.subr.mxu0 0.0
        %678 = vmatpush2.msra.mxu0 0.0
        %679 = vmatprep.mubr.f32.mxu0 0.0
        %680 = vmatmul.mubr.f32.gmra.mxu0 %v613
        %v681 = vpop.f32.mrf.mxu0
        %v682 = vadd.f32 0.0, %v681
        %v683 = vpop.f32.mrf.mxu0
        %684 = vdwg.mxu0
        %v689 = vlaneseq
        %v690 = vand.u32 %v689, 127
        %v691 = vlaneseq
        %v692 = vshrl.u32 %v691, 7
        %v693 = vsub.s32 %v690, %v692
        %v694 = vrot.slane %v572, %v693
        %v695 = vadd.s32 %v690, 4294967288
        %v696 = vlaneseq
        %v697 = vshrl.u32 %v696, 7
        %v698 = vsub.s32 %v695, %v697
        %v699 = vrot.slane %v573, %v698
        %vm700 = vcmask 130112
        %v701 = vsel %vm700, %v699, %v694
        %v702 = vlaneseq
        %v703 = vshrl.u32 %v702, 7
        %v704 = vsub.s32 %v690, %v703
        %v705 = vrot.slane %v574, %v704
        %v706 = vlaneseq
        %v707 = vshrl.u32 %v706, 7
        %v708 = vsub.s32 %v695, %v707
        %v709 = vrot.slane %v575, %v708
        %v710 = vsel %vm700, %v709, %v705
        %v711 = vsel %vm612, %v710, %v701
        %vm712 = vcmask 130048
        %v713 = vsel %vm712, %v711, 0
        %715 = vmatprep.subr.mxu0 0.0
        %716 = vmatpush1.msra.mxu0 0.0
        %717 = vmatprep.subr.mxu0 0.0
        %718 = vmatpush1.msra.mxu0 0.0
        %719 = vmatprep.subr.mxu0 0.0
        %720 = vmatpush1.msra.mxu0 0.0
        %721 = vmatprep.subr.mxu0 0.0
        %722 = vmatpush1.msra.mxu0 0.0
        %723 = vmatprep.subr.mxu0 0.0
        %724 = vmatpush1.msra.mxu0 0.0
        %725 = vmatprep.subr.mxu0 0.0
        %726 = vmatpush1.msra.mxu0 0.0
        %727 = vmatprep.subr.mxu0 0.0
        %728 = vmatpush1.msra.mxu0 0.0
        %729 = vmatprep.subr.mxu0 0.0
        %730 = vmatpush1.msra.mxu0 0.0
        %731 = vmatprep.subr.mxu0 0.0
        %732 = vmatpush1.msra.mxu0 0.0
        %733 = vmatprep.subr.mxu0 0.0
        %734 = vmatpush1.msra.mxu0 0.0
        %735 = vmatprep.subr.mxu0 0.0
        %736 = vmatpush1.msra.mxu0 0.0
        %737 = vmatprep.subr.mxu0 0.0
        %738 = vmatpush1.msra.mxu0 0.0
        %739 = vmatprep.subr.mxu0 0.0
        %740 = vmatpush1.msra.mxu0 0.0
        %741 = vmatprep.subr.mxu0 0.0
        %742 = vmatpush1.msra.mxu0 0.0
        %743 = vmatprep.subr.mxu0 0.0
        %744 = vmatpush1.msra.mxu0 %v593
        %745 = vmatprep.subr.mxu0 0.0
        %746 = vmatpush1.msra.mxu0 %v592
        %747 = vmatprep.subr.mxu0 0.0
        %748 = vmatpush2.msra.mxu0 0.0
        %749 = vmatprep.subr.mxu0 0.0
        %750 = vmatpush2.msra.mxu0 0.0
        %751 = vmatprep.subr.mxu0 0.0
        %752 = vmatpush2.msra.mxu0 0.0
        %753 = vmatprep.subr.mxu0 0.0
        %754 = vmatpush2.msra.mxu0 0.0
        %755 = vmatprep.subr.mxu0 0.0
        %756 = vmatpush2.msra.mxu0 0.0
        %757 = vmatprep.subr.mxu0 0.0
        %758 = vmatpush2.msra.mxu0 0.0
        %759 = vmatprep.subr.mxu0 0.0
        %760 = vmatpush2.msra.mxu0 0.0
        %761 = vmatprep.subr.mxu0 0.0
        %762 = vmatpush2.msra.mxu0 0.0
        %763 = vmatprep.subr.mxu0 0.0
        %764 = vmatpush2.msra.mxu0 0.0
        %765 = vmatprep.subr.mxu0 0.0
        %766 = vmatpush2.msra.mxu0 0.0
        %767 = vmatprep.subr.mxu0 0.0
        %768 = vmatpush2.msra.mxu0 0.0
        %769 = vmatprep.subr.mxu0 0.0
        %770 = vmatpush2.msra.mxu0 0.0
        %771 = vmatprep.subr.mxu0 0.0
        %772 = vmatpush2.msra.mxu0 0.0
        %773 = vmatprep.subr.mxu0 0.0
        %774 = vmatpush2.msra.mxu0 0.0
        %775 = vmatprep.subr.mxu0 0.0
        %776 = vmatpush2.msra.mxu0 0.0
        %777 = vmatprep.subr.mxu0 0.0
        %778 = vmatpush2.msra.mxu0 0.0
        %779 = vmatprep.mubr.f32.mxu0 0.0
        %780 = vmatmul.mubr.f32.gmra.mxu0 %v713
        %v781 = vpop.f32.mrf.mxu0
        %v782 = vadd.f32 %v682, %v781
        %v783 = vpop.f32.mrf.mxu0
        %784 = vdwg.mxu0
        %v785 = vld [vmem:[%s5] sm:$0x1]
        %v787 = vlaneseq
        %v788 = vshrl.u32 %v787, 7
        %v789 = vsub.s32 0, %v788
        %v790 = vrot.slane %v785, %v789
        %v792 = vadd.f32 %v782, %v790
        %v793 = vmax.f32 %v792, 0.0
        %v794 = vld [vmem:[#allocation5] sm:$0xff]
        %v795 = vld [vmem:[#allocation5 + $0x8] sm:$0xff]
        %v796 = vld [vmem:[%s4] sm:$0xff]
        %v797 = vld [vmem:[%s4 + $0x8] sm:$0xff]
        %v798 = vld [vmem:[%s4 + $0x10] sm:$0xff]
        %v799 = vld [vmem:[%s4 + $0x18] sm:$0xff]
        %v800 = vld [vmem:[%s4 + $0x20] sm:$0xff]
        %v801 = vld [vmem:[%s4 + $0x28] sm:$0xff]
        %v802 = vld [vmem:[%s4 + $0x30] sm:$0xff]
        %v803 = vld [vmem:[%s4 + $0x38] sm:$0xff]
        %v804 = vld [vmem:[%s4 + $0x40] sm:$0xff]
        %v805 = vld [vmem:[%s4 + $0x48] sm:$0xff]
        %v806 = vld [vmem:[%s4 + $0x50] sm:$0xff]
        %v807 = vld [vmem:[%s4 + $0x58] sm:$0xff]
        %v808 = vld [vmem:[%s4 + $0x60] sm:$0xff]
        %v809 = vld [vmem:[%s4 + $0x68] sm:$0xff]
        %v810 = vld [vmem:[%s4 + $0x70] sm:$0xff]
        %v811 = vld [vmem:[%s4 + $0x78] sm:$0xff]
        %812 = vmatprep.subr.mxu0 0.0
        %813 = vmatpush1.msra.mxu0 %v811
        %814 = vmatprep.subr.mxu0 0.0
        %815 = vmatpush1.msra.mxu0 %v810
        %816 = vmatprep.subr.mxu0 0.0
        %817 = vmatpush1.msra.mxu0 %v809
        %818 = vmatprep.subr.mxu0 0.0
        %819 = vmatpush1.msra.mxu0 %v808
        %820 = vmatprep.subr.mxu0 0.0
        %821 = vmatpush1.msra.mxu0 %v807
        %822 = vmatprep.subr.mxu0 0.0
        %823 = vmatpush1.msra.mxu0 %v806
        %824 = vmatprep.subr.mxu0 0.0
        %825 = vmatpush1.msra.mxu0 %v805
        %826 = vmatprep.subr.mxu0 0.0
        %827 = vmatpush1.msra.mxu0 %v804
        %828 = vmatprep.subr.mxu0 0.0
        %829 = vmatpush1.msra.mxu0 %v803
        %830 = vmatprep.subr.mxu0 0.0
        %831 = vmatpush1.msra.mxu0 %v802
        %832 = vmatprep.subr.mxu0 0.0
        %833 = vmatpush1.msra.mxu0 %v801
        %834 = vmatprep.subr.mxu0 0.0
        %835 = vmatpush1.msra.mxu0 %v800
        %836 = vmatprep.subr.mxu0 0.0
        %837 = vmatpush1.msra.mxu0 %v799
        %838 = vmatprep.subr.mxu0 0.0
        %839 = vmatpush1.msra.mxu0 %v798
        %840 = vmatprep.subr.mxu0 0.0
        %841 = vmatpush1.msra.mxu0 %v797
        %842 = vmatprep.subr.mxu0 0.0
        %843 = vmatpush1.msra.mxu0 %v796
        %844 = vmatprep.subr.mxu0 0.0
        %845 = vmatpush2.msra.mxu0 0.0
        %846 = vmatprep.subr.mxu0 0.0
        %847 = vmatpush2.msra.mxu0 0.0
        %848 = vmatprep.subr.mxu0 0.0
        %849 = vmatpush2.msra.mxu0 0.0
        %850 = vmatprep.subr.mxu0 0.0
        %851 = vmatpush2.msra.mxu0 0.0
        %852 = vmatprep.subr.mxu0 0.0
        %853 = vmatpush2.msra.mxu0 0.0
        %854 = vmatprep.subr.mxu0 0.0
        %855 = vmatpush2.msra.mxu0 0.0
        %856 = vmatprep.subr.mxu0 0.0
        %857 = vmatpush2.msra.mxu0 0.0
        %858 = vmatprep.subr.mxu0 0.0
        %859 = vmatpush2.msra.mxu0 0.0
        %860 = vmatprep.subr.mxu0 0.0
        %861 = vmatpush2.msra.mxu0 0.0
        %862 = vmatprep.subr.mxu0 0.0
        %863 = vmatpush2.msra.mxu0 0.0
        %864 = vmatprep.subr.mxu0 0.0
        %865 = vmatpush2.msra.mxu0 0.0
        %866 = vmatprep.subr.mxu0 0.0
        %867 = vmatpush2.msra.mxu0 0.0
        %868 = vmatprep.subr.mxu0 0.0
        %869 = vmatpush2.msra.mxu0 0.0
        %870 = vmatprep.subr.mxu0 0.0
        %871 = vmatpush2.msra.mxu0 0.0
        %872 = vmatprep.subr.mxu0 0.0
        %873 = vmatpush2.msra.mxu0 0.0
        %874 = vmatprep.subr.mxu0 0.0
        %875 = vmatpush2.msra.mxu0 0.0
        %876 = vmatprep.mubr.f32.mxu0 0.0
        %877 = vmatmul.mubr.f32.gmra.mxu0 %v613
        %v878 = vpop.f32.mrf.mxu0
        %v879 = vadd.f32 0.0, %v878
        %v880 = vpop.f32.mrf.mxu0
        %881 = vdwg.mxu0
        %882 = vmatprep.subr.mxu0 0.0
        %883 = vmatpush1.msra.mxu0 0.0
        %884 = vmatprep.subr.mxu0 0.0
        %885 = vmatpush1.msra.mxu0 0.0
        %886 = vmatprep.subr.mxu0 0.0
        %887 = vmatpush1.msra.mxu0 0.0
        %888 = vmatprep.subr.mxu0 0.0
        %889 = vmatpush1.msra.mxu0 0.0
        %890 = vmatprep.subr.mxu0 0.0
        %891 = vmatpush1.msra.mxu0 0.0
        %892 = vmatprep.subr.mxu0 0.0
        %893 = vmatpush1.msra.mxu0 0.0
        %894 = vmatprep.subr.mxu0 0.0
        %895 = vmatpush1.msra.mxu0 0.0
        %896 = vmatprep.subr.mxu0 0.0
        %897 = vmatpush1.msra.mxu0 0.0
        %898 = vmatprep.subr.mxu0 0.0
        %899 = vmatpush1.msra.mxu0 0.0
        %900 = vmatprep.subr.mxu0 0.0
        %901 = vmatpush1.msra.mxu0 0.0
        %902 = vmatprep.subr.mxu0 0.0
        %903 = vmatpush1.msra.mxu0 0.0
        %904 = vmatprep.subr.mxu0 0.0
        %905 = vmatpush1.msra.mxu0 0.0
        %906 = vmatprep.subr.mxu0 0.0
        %907 = vmatpush1.msra.mxu0 0.0
        %908 = vmatprep.subr.mxu0 0.0
        %909 = vmatpush1.msra.mxu0 0.0
        %910 = vmatprep.subr.mxu0 0.0
        %911 = vmatpush1.msra.mxu0 %v795
        %912 = vmatprep.subr.mxu0 0.0
        %913 = vmatpush1.msra.mxu0 %v794
        %914 = vmatprep.subr.mxu0 0.0
        %915 = vmatpush2.msra.mxu0 0.0
        %916 = vmatprep.subr.mxu0 0.0
        %917 = vmatpush2.msra.mxu0 0.0
        %918 = vmatprep.subr.mxu0 0.0
        %919 = vmatpush2.msra.mxu0 0.0
        %920 = vmatprep.subr.mxu0 0.0
        %921 = vmatpush2.msra.mxu0 0.0
        %922 = vmatprep.subr.mxu0 0.0
        %923 = vmatpush2.msra.mxu0 0.0
        %924 = vmatprep.subr.mxu0 0.0
        %925 = vmatpush2.msra.mxu0 0.0
        %926 = vmatprep.subr.mxu0 0.0
        %927 = vmatpush2.msra.mxu0 0.0
        %928 = vmatprep.subr.mxu0 0.0
        %929 = vmatpush2.msra.mxu0 0.0
        %930 = vmatprep.subr.mxu0 0.0
        %931 = vmatpush2.msra.mxu0 0.0
        %932 = vmatprep.subr.mxu0 0.0
        %933 = vmatpush2.msra.mxu0 0.0
        %934 = vmatprep.subr.mxu0 0.0
        %935 = vmatpush2.msra.mxu0 0.0
        %936 = vmatprep.subr.mxu0 0.0
        %937 = vmatpush2.msra.mxu0 0.0
        %938 = vmatprep.subr.mxu0 0.0
        %939 = vmatpush2.msra.mxu0 0.0
        %940 = vmatprep.subr.mxu0 0.0
        %941 = vmatpush2.msra.mxu0 0.0
        %942 = vmatprep.subr.mxu0 0.0
        %943 = vmatpush2.msra.mxu0 0.0
        %944 = vmatprep.subr.mxu0 0.0
        %945 = vmatpush2.msra.mxu0 0.0
        %946 = vmatprep.mubr.f32.mxu0 0.0
        %947 = vmatmul.mubr.f32.gmra.mxu0 %v713
        %v948 = vpop.f32.mrf.mxu0
        %v949 = vadd.f32 %v879, %v948
        %v950 = vpop.f32.mrf.mxu0
        %951 = vdwg.mxu0
        %v952 = vld [vmem:[%s6] sm:$0x1]
        %v954 = vlaneseq
        %v955 = vshrl.u32 %v954, 7
        %v956 = vsub.s32 0, %v955
        %v957 = vrot.slane %v952, %v956
        %v959 = vadd.f32 %v949, %v957
        %v960 = vmax.f32 %v959, 0.0
        %v961 = vld [vmem:[#allocation7] sm:$0xff]
        %v962 = vld [vmem:[#allocation7 + $0x8] sm:$0xff]
        %v963 = vld [vmem:[%s8] sm:$0x1]
        %v965 = vlaneseq
        %v966 = vshrl.u32 %v965, 7
        %v967 = vsub.s32 0, %v966
        %v968 = vrot.slane %v963, %v967
        %v971 = vsel %vm712, %v793, 0
        %973 = vmatprep.subr.mxu0 0.0
        %974 = vmatpush1.msra.mxu0 0.0
        %975 = vmatprep.subr.mxu0 0.0
        %976 = vmatpush1.msra.mxu0 0.0
        %977 = vmatprep.subr.mxu0 0.0
        %978 = vmatpush1.msra.mxu0 0.0
        %979 = vmatprep.subr.mxu0 0.0
        %980 = vmatpush1.msra.mxu0 0.0
        %981 = vmatprep.subr.mxu0 0.0
        %982 = vmatpush1.msra.mxu0 0.0
        %983 = vmatprep.subr.mxu0 0.0
        %984 = vmatpush1.msra.mxu0 0.0
        %985 = vmatprep.subr.mxu0 0.0
        %986 = vmatpush1.msra.mxu0 0.0
        %987 = vmatprep.subr.mxu0 0.0
        %988 = vmatpush1.msra.mxu0 0.0
        %989 = vmatprep.subr.mxu0 0.0
        %990 = vmatpush1.msra.mxu0 0.0
        %991 = vmatprep.subr.mxu0 0.0
        %992 = vmatpush1.msra.mxu0 0.0
        %993 = vmatprep.subr.mxu0 0.0
        %994 = vmatpush1.msra.mxu0 0.0
        %995 = vmatprep.subr.mxu0 0.0
        %996 = vmatpush1.msra.mxu0 0.0
        %997 = vmatprep.subr.mxu0 0.0
        %998 = vmatpush1.msra.mxu0 0.0
        %999 = vmatprep.subr.mxu0 0.0
        %1000 = vmatpush1.msra.mxu0 0.0
        %1001 = vmatprep.subr.mxu0 0.0
        %1002 = vmatpush1.msra.mxu0 %v962
        %1003 = vmatprep.subr.mxu0 0.0
        %1004 = vmatpush1.msra.mxu0 %v961
        %1005 = vmatprep.subr.mxu0 0.0
        %1006 = vmatpush2.msra.mxu0 0.0
        %1007 = vmatprep.subr.mxu0 0.0
        %1008 = vmatpush2.msra.mxu0 0.0
        %1009 = vmatprep.subr.mxu0 0.0
        %1010 = vmatpush2.msra.mxu0 0.0
        %1011 = vmatprep.subr.mxu0 0.0
        %1012 = vmatpush2.msra.mxu0 0.0
        %1013 = vmatprep.subr.mxu0 0.0
        %1014 = vmatpush2.msra.mxu0 0.0
        %1015 = vmatprep.subr.mxu0 0.0
        %1016 = vmatpush2.msra.mxu0 0.0
        %1017 = vmatprep.subr.mxu0 0.0
        %1018 = vmatpush2.msra.mxu0 0.0
        %1019 = vmatprep.subr.mxu0 0.0
        %1020 = vmatpush2.msra.mxu0 0.0
        %1021 = vmatprep.subr.mxu0 0.0
        %1022 = vmatpush2.msra.mxu0 0.0
        %1023 = vmatprep.subr.mxu0 0.0
        %1024 = vmatpush2.msra.mxu0 0.0
        %1025 = vmatprep.subr.mxu0 0.0
        %1026 = vmatpush2.msra.mxu0 0.0
        %1027 = vmatprep.subr.mxu0 0.0
        %1028 = vmatpush2.msra.mxu0 0.0
        %1029 = vmatprep.subr.mxu0 0.0
        %1030 = vmatpush2.msra.mxu0 0.0
        %1031 = vmatprep.subr.mxu0 0.0
        %1032 = vmatpush2.msra.mxu0 0.0
        %1033 = vmatprep.subr.mxu0 0.0
        %1034 = vmatpush2.msra.mxu0 0.0
        %1035 = vmatprep.subr.mxu0 0.0
        %1036 = vmatpush2.msra.mxu0 0.0
        %1037 = vmatprep.mubr.f32.mxu0 0.0
        %1038 = vmatmul.mubr.f32.gmra.mxu0 %v971
        %v1039 = vpop.f32.mrf.mxu0
        %v1040 = vadd.f32 %v968, %v1039
        %v1041 = vpop.f32.mrf.mxu0
        %1042 = vdwg.mxu0
        %v1043 = vmax.f32 %v1040, 0.0
        %v1044 = vld [vmem:[%s9] sm:$0xff]
        %v1045 = vld [vmem:[%s9 + $0x8] sm:$0xff]
        %v1046 = vld [vmem:[%s9 + $0x10] sm:$0xff]
        %v1047 = vld [vmem:[%s9 + $0x18] sm:$0xff]
        %v1048 = vld [vmem:[%s9 + $0x20] sm:$0xff]
        %v1049 = vld [vmem:[%s9 + $0x28] sm:$0xff]
        %v1050 = vld [vmem:[%s9 + $0x30] sm:$0xff]
        %v1051 = vld [vmem:[%s9 + $0x38] sm:$0xff]
        %v1052 = vld [vmem:[%s9 + $0x40] sm:$0xff]
        %v1053 = vld [vmem:[%s9 + $0x48] sm:$0xff]
        %v1054 = vld [vmem:[%s9 + $0x50] sm:$0xff]
        %v1055 = vld [vmem:[%s9 + $0x58] sm:$0xff]
        %v1056 = vld [vmem:[%s9 + $0x60] sm:$0xff]
        %v1057 = vld [vmem:[%s9 + $0x68] sm:$0xff]
        %v1058 = vld [vmem:[%s9 + $0x70] sm:$0xff]
        %v1059 = vld [vmem:[%s9 + $0x78] sm:$0xff]
        %v1060 = vld [vmem:[%s10] sm:$0x1]
        %v1062 = vlaneseq
        %v1063 = vshrl.u32 %v1062, 7
        %v1064 = vsub.s32 0, %v1063
        %v1065 = vrot.slane %v1060, %v1064
        %1067 = vmatprep.subr.mxu0 0.0
        %1068 = vmatpush1.msra.mxu0 %v1059
        %1069 = vmatprep.subr.mxu0 0.0
        %1070 = vmatpush1.msra.mxu0 %v1058
        %1071 = vmatprep.subr.mxu0 0.0
        %1072 = vmatpush1.msra.mxu0 %v1057
        %1073 = vmatprep.subr.mxu0 0.0
        %1074 = vmatpush1.msra.mxu0 %v1056
        %1075 = vmatprep.subr.mxu0 0.0
        %1076 = vmatpush1.msra.mxu0 %v1055
        %1077 = vmatprep.subr.mxu0 0.0
        %1078 = vmatpush1.msra.mxu0 %v1054
        %1079 = vmatprep.subr.mxu0 0.0
        %1080 = vmatpush1.msra.mxu0 %v1053
        %1081 = vmatprep.subr.mxu0 0.0
        %1082 = vmatpush1.msra.mxu0 %v1052
        %1083 = vmatprep.subr.mxu0 0.0
        %1084 = vmatpush1.msra.mxu0 %v1051
        %1085 = vmatprep.subr.mxu0 0.0
        %1086 = vmatpush1.msra.mxu0 %v1050
        %1087 = vmatprep.subr.mxu0 0.0
        %1088 = vmatpush1.msra.mxu0 %v1049
        %1089 = vmatprep.subr.mxu0 0.0
        %1090 = vmatpush1.msra.mxu0 %v1048
        %1091 = vmatprep.subr.mxu0 0.0
        %1092 = vmatpush1.msra.mxu0 %v1047
        %1093 = vmatprep.subr.mxu0 0.0
        %1094 = vmatpush1.msra.mxu0 %v1046
        %1095 = vmatprep.subr.mxu0 0.0
        %1096 = vmatpush1.msra.mxu0 %v1045
        %1097 = vmatprep.subr.mxu0 0.0
        %1098 = vmatpush1.msra.mxu0 %v1044
        %1099 = vmatprep.subr.mxu0 0.0
        %1100 = vmatpush2.msra.mxu0 0.0
        %1101 = vmatprep.subr.mxu0 0.0
        %1102 = vmatpush2.msra.mxu0 0.0
        %1103 = vmatprep.subr.mxu0 0.0
        %1104 = vmatpush2.msra.mxu0 0.0
        %1105 = vmatprep.subr.mxu0 0.0
        %1106 = vmatpush2.msra.mxu0 0.0
        %1107 = vmatprep.subr.mxu0 0.0
        %1108 = vmatpush2.msra.mxu0 0.0
        %1109 = vmatprep.subr.mxu0 0.0
        %1110 = vmatpush2.msra.mxu0 0.0
        %1111 = vmatprep.subr.mxu0 0.0
        %1112 = vmatpush2.msra.mxu0 0.0
        %1113 = vmatprep.subr.mxu0 0.0
        %1114 = vmatpush2.msra.mxu0 0.0
        %1115 = vmatprep.subr.mxu0 0.0
        %1116 = vmatpush2.msra.mxu0 0.0
        %1117 = vmatprep.subr.mxu0 0.0
        %1118 = vmatpush2.msra.mxu0 0.0
        %1119 = vmatprep.subr.mxu0 0.0
        %1120 = vmatpush2.msra.mxu0 0.0
        %1121 = vmatprep.subr.mxu0 0.0
        %1122 = vmatpush2.msra.mxu0 0.0
        %1123 = vmatprep.subr.mxu0 0.0
        %1124 = vmatpush2.msra.mxu0 0.0
        %1125 = vmatprep.subr.mxu0 0.0
        %1126 = vmatpush2.msra.mxu0 0.0
        %1127 = vmatprep.subr.mxu0 0.0
        %1128 = vmatpush2.msra.mxu0 0.0
        %1129 = vmatprep.subr.mxu0 0.0
        %1130 = vmatpush2.msra.mxu0 0.0
        %1131 = vmatprep.mubr.f32.mxu0 0.0
        %1132 = vmatmul.mubr.f32.gmra.mxu0 %v1043
        %v1133 = vpop.f32.mrf.mxu0
        %v1134 = vadd.f32 %v1065, %v1133
        %v1135 = vpop.f32.mrf.mxu0
        %1136 = vdwg.mxu0
        %v1137 = vxor.u32 %v1134, 2147483648
        %v1138 = vmul.f32 %v1137, 1.442695
        %v1139 = vpow.pop %v1138
        %v1140 = vadd.f32 %v1139, 1.0
        %v1141 = vrcp.pop %v1140
        %v1142 = vmul.f32 1.0, %v1141
        %v1143 = vld [vmem:[%s11] sm:$0xff]
        %v1144 = vld [vmem:[%s11 + $0x8] sm:$0xff]
        %v1145 = vld [vmem:[%s11 + $0x10] sm:$0xff]
        %v1146 = vld [vmem:[%s11 + $0x18] sm:$0xff]
        %v1147 = vld [vmem:[%s11 + $0x20] sm:$0xff]
        %v1148 = vld [vmem:[%s11 + $0x28] sm:$0xff]
        %v1149 = vld [vmem:[%s11 + $0x30] sm:$0xff]
        %v1150 = vld [vmem:[%s11 + $0x38] sm:$0xff]
        %v1151 = vld [vmem:[%s11 + $0x40] sm:$0xff]
        %v1152 = vld [vmem:[%s11 + $0x48] sm:$0xff]
        %v1153 = vld [vmem:[%s11 + $0x50] sm:$0xff]
        %v1154 = vld [vmem:[%s11 + $0x58] sm:$0xff]
        %v1155 = vld [vmem:[%s11 + $0x60] sm:$0xff]
        %v1156 = vld [vmem:[%s11 + $0x68] sm:$0xff]
        %v1157 = vld [vmem:[%s11 + $0x70] sm:$0xff]
        %v1158 = vld [vmem:[%s11 + $0x78] sm:$0xff]
        %v1159 = vld [vmem:[%s12] sm:$0x1]
        %v1161 = vlaneseq
        %v1162 = vshrl.u32 %v1161, 7
        %v1163 = vsub.s32 0, %v1162
        %v1164 = vrot.slane %v1159, %v1163
        %1166 = vmatprep.subr.mxu0 0.0
        %1167 = vmatpush1.msra.mxu0 %v1158
        %1168 = vmatprep.subr.mxu0 0.0
        %1169 = vmatpush1.msra.mxu0 %v1157
        %1170 = vmatprep.subr.mxu0 0.0
        %1171 = vmatpush1.msra.mxu0 %v1156
        %1172 = vmatprep.subr.mxu0 0.0
        %1173 = vmatpush1.msra.mxu0 %v1155
        %1174 = vmatprep.subr.mxu0 0.0
        %1175 = vmatpush1.msra.mxu0 %v1154
        %1176 = vmatprep.subr.mxu0 0.0
        %1177 = vmatpush1.msra.mxu0 %v1153
        %1178 = vmatprep.subr.mxu0 0.0
        %1179 = vmatpush1.msra.mxu0 %v1152
        %1180 = vmatprep.subr.mxu0 0.0
        %1181 = vmatpush1.msra.mxu0 %v1151
        %1182 = vmatprep.subr.mxu0 0.0
        %1183 = vmatpush1.msra.mxu0 %v1150
        %1184 = vmatprep.subr.mxu0 0.0
        %1185 = vmatpush1.msra.mxu0 %v1149
        %1186 = vmatprep.subr.mxu0 0.0
        %1187 = vmatpush1.msra.mxu0 %v1148
        %1188 = vmatprep.subr.mxu0 0.0
        %1189 = vmatpush1.msra.mxu0 %v1147
        %1190 = vmatprep.subr.mxu0 0.0
        %1191 = vmatpush1.msra.mxu0 %v1146
        %1192 = vmatprep.subr.mxu0 0.0
        %1193 = vmatpush1.msra.mxu0 %v1145
        %1194 = vmatprep.subr.mxu0 0.0
        %1195 = vmatpush1.msra.mxu0 %v1144
        %1196 = vmatprep.subr.mxu0 0.0
        %1197 = vmatpush1.msra.mxu0 %v1143
        %1198 = vmatprep.subr.mxu0 0.0
        %1199 = vmatpush2.msra.mxu0 0.0
        %1200 = vmatprep.subr.mxu0 0.0
        %1201 = vmatpush2.msra.mxu0 0.0
        %1202 = vmatprep.subr.mxu0 0.0
        %1203 = vmatpush2.msra.mxu0 0.0
        %1204 = vmatprep.subr.mxu0 0.0
        %1205 = vmatpush2.msra.mxu0 0.0
        %1206 = vmatprep.subr.mxu0 0.0
        %1207 = vmatpush2.msra.mxu0 0.0
        %1208 = vmatprep.subr.mxu0 0.0
        %1209 = vmatpush2.msra.mxu0 0.0
        %1210 = vmatprep.subr.mxu0 0.0
        %1211 = vmatpush2.msra.mxu0 0.0
        %1212 = vmatprep.subr.mxu0 0.0
        %1213 = vmatpush2.msra.mxu0 0.0
        %1214 = vmatprep.subr.mxu0 0.0
        %1215 = vmatpush2.msra.mxu0 0.0
        %1216 = vmatprep.subr.mxu0 0.0
        %1217 = vmatpush2.msra.mxu0 0.0
        %1218 = vmatprep.subr.mxu0 0.0
        %1219 = vmatpush2.msra.mxu0 0.0
        %1220 = vmatprep.subr.mxu0 0.0
        %1221 = vmatpush2.msra.mxu0 0.0
        %1222 = vmatprep.subr.mxu0 0.0
        %1223 = vmatpush2.msra.mxu0 0.0
        %1224 = vmatprep.subr.mxu0 0.0
        %1225 = vmatpush2.msra.mxu0 0.0
        %1226 = vmatprep.subr.mxu0 0.0
        %1227 = vmatpush2.msra.mxu0 0.0
        %1228 = vmatprep.subr.mxu0 0.0
        %1229 = vmatpush2.msra.mxu0 0.0
        %1230 = vmatprep.mubr.f32.mxu0 0.0
        %1231 = vmatmul.mubr.f32.gmra.mxu0 %v960
        %v1232 = vpop.f32.mrf.mxu0
        %v1233 = vadd.f32 %v1164, %v1232
        %v1234 = vpop.f32.mrf.mxu0
        %1235 = vdwg.mxu0
        %v1236 = vmax.f32 %v1233, 0.0
        %v1237 = vld [vmem:[#allocation8] sm:$0xff]
        %v1238 = vld [vmem:[#allocation8 + $0x8] sm:$0xff]
        %v1239 = vld [vmem:[#allocation8 + $0x10] sm:$0xff]
        %v1240 = vld [vmem:[#allocation8 + $0x18] sm:$0xff]
        %v1241 = vld [vmem:[#allocation8 + $0x20] sm:$0xff]
        %v1242 = vld [vmem:[#allocation8 + $0x28] sm:$0xff]
        %v1243 = vld [vmem:[#allocation8 + $0x30] sm:$0xff]
        %v1244 = vld [vmem:[#allocation8 + $0x38] sm:$0xff]
        %v1245 = vld [vmem:[#allocation8 + $0x40] sm:$0xff]
        %v1246 = vld [vmem:[#allocation8 + $0x48] sm:$0xff]
        %v1247 = vld [vmem:[#allocation8 + $0x50] sm:$0xff]
        %v1248 = vld [vmem:[#allocation8 + $0x58] sm:$0xff]
        %v1249 = vld [vmem:[#allocation8 + $0x60] sm:$0xff]
        %v1250 = vld [vmem:[#allocation8 + $0x68] sm:$0xff]
        %v1251 = vld [vmem:[#allocation8 + $0x70] sm:$0xff]
        %v1252 = vld [vmem:[#allocation8 + $0x78] sm:$0xff]
        %v1253 = vld [vmem:[%s14] sm:$0x1]
        %v1255 = vlaneseq
        %v1256 = vshrl.u32 %v1255, 7
        %v1257 = vsub.s32 0, %v1256
        %v1258 = vrot.slane %v1253, %v1257
        %1260 = vmatprep.subr.mxu0 0.0
        %1261 = vmatpush1.msra.mxu0 %v1252
        %1262 = vmatprep.subr.mxu0 0.0
        %1263 = vmatpush1.msra.mxu0 %v1251
        %1264 = vmatprep.subr.mxu0 0.0
        %1265 = vmatpush1.msra.mxu0 %v1250
        %1266 = vmatprep.subr.mxu0 0.0
        %1267 = vmatpush1.msra.mxu0 %v1249
        %1268 = vmatprep.subr.mxu0 0.0
        %1269 = vmatpush1.msra.mxu0 %v1248
        %1270 = vmatprep.subr.mxu0 0.0
        %1271 = vmatpush1.msra.mxu0 %v1247
        %1272 = vmatprep.subr.mxu0 0.0
        %1273 = vmatpush1.msra.mxu0 %v1246
        %1274 = vmatprep.subr.mxu0 0.0
        %1275 = vmatpush1.msra.mxu0 %v1245
        %1276 = vmatprep.subr.mxu0 0.0
        %1277 = vmatpush1.msra.mxu0 %v1244
        %1278 = vmatprep.subr.mxu0 0.0
        %1279 = vmatpush1.msra.mxu0 %v1243
        %1280 = vmatprep.subr.mxu0 0.0
        %1281 = vmatpush1.msra.mxu0 %v1242
        %1282 = vmatprep.subr.mxu0 0.0
        %1283 = vmatpush1.msra.mxu0 %v1241
        %1284 = vmatprep.subr.mxu0 0.0
        %1285 = vmatpush1.msra.mxu0 %v1240
        %1286 = vmatprep.subr.mxu0 0.0
        %1287 = vmatpush1.msra.mxu0 %v1239
        %1288 = vmatprep.subr.mxu0 0.0
        %1289 = vmatpush1.msra.mxu0 %v1238
        %1290 = vmatprep.subr.mxu0 0.0
        %1291 = vmatpush1.msra.mxu0 %v1237
        %1292 = vmatprep.subr.mxu0 0.0
        %1293 = vmatpush2.msra.mxu0 0.0
        %1294 = vmatprep.subr.mxu0 0.0
        %1295 = vmatpush2.msra.mxu0 0.0
        %1296 = vmatprep.subr.mxu0 0.0
        %1297 = vmatpush2.msra.mxu0 0.0
        %1298 = vmatprep.subr.mxu0 0.0
        %1299 = vmatpush2.msra.mxu0 0.0
        %1300 = vmatprep.subr.mxu0 0.0
        %1301 = vmatpush2.msra.mxu0 0.0
        %1302 = vmatprep.subr.mxu0 0.0
        %1303 = vmatpush2.msra.mxu0 0.0
        %1304 = vmatprep.subr.mxu0 0.0
        %1305 = vmatpush2.msra.mxu0 0.0
        %1306 = vmatprep.subr.mxu0 0.0
        %1307 = vmatpush2.msra.mxu0 0.0
        %1308 = vmatprep.subr.mxu0 0.0
        %1309 = vmatpush2.msra.mxu0 0.0
        %1310 = vmatprep.subr.mxu0 0.0
        %1311 = vmatpush2.msra.mxu0 0.0
        %1312 = vmatprep.subr.mxu0 0.0
        %1313 = vmatpush2.msra.mxu0 0.0
        %1314 = vmatprep.subr.mxu0 0.0
        %1315 = vmatpush2.msra.mxu0 0.0
        %1316 = vmatprep.subr.mxu0 0.0
        %1317 = vmatpush2.msra.mxu0 0.0
        %1318 = vmatprep.subr.mxu0 0.0
        %1319 = vmatpush2.msra.mxu0 0.0
        %1320 = vmatprep.subr.mxu0 0.0
        %1321 = vmatpush2.msra.mxu0 0.0
        %1322 = vmatprep.subr.mxu0 0.0
        %1323 = vmatpush2.msra.mxu0 0.0
        %1324 = vmatprep.mubr.f32.mxu0 0.0
        %1325 = vmatmul.mubr.f32.gmra.mxu0 %v1236
        %v1326 = vpop.f32.mrf.mxu0
        %v1327 = vadd.f32 %v1258, %v1326
        %v1328 = vpop.f32.mrf.mxu0
        %1329 = vdwg.mxu0
        %v1330 = vxor.u32 %v1327, 2147483648
        %v1331 = vmul.f32 %v1330, 1.442695
        %v1332 = vpow.pop %v1331
        %v1333 = vadd.f32 %v1332, 1.0
        %v1334 = vrcp.pop %v1333
        %v1335 = vmul.f32 1.0, %v1334
        %v1336 = vlaneseq
        %v1337 = vshrl.u32 %v1336, 7
        %v1338 = vsub.s32 0, %v1337
        %v1339 = vrot.slane %v1142, %v1338
        %1341 = vbcast.lane.b32.xlu0 %v1339, 256
        %v1342 = vpop.permute.xlu0 %1341
        %s1344 = sor.u32 256, 8
        %1345 = vbcast.lane.b32.xlu0 %v1339, %s1344
        %v1346 = vpop.permute.xlu0 %1345
        %v1347 = vlaneseq
        %v1348 = vshrl.u32 %v1347, 7
        %v1349 = vsub.s32 1, %v1348
        %v1350 = vrot.slane %v1142, %v1349
        %1352 = vbcast.lane.b32.xlu0 %v1350, 256
        %v1353 = vpop.permute.xlu0 %1352
        %s1355 = sor.u32 256, 8
        %1356 = vbcast.lane.b32.xlu0 %v1350, %s1355
        %v1357 = vpop.permute.xlu0 %1356
        %v1358 = vmul.f32 %v560, %v1342
        %v1359 = vmul.f32 %v561, %v1346
        %v1360 = vmul.f32 %v562, %v1353
        %v1361 = vmul.f32 %v563, %v1357
        %v1364 = vunpack.c.l.s4 1966171168
        %v1365 = vunpack.c.0.s8 %v1364
        %v1366 = vlaneseq
        %v1367 = vshrl.u32 %v1366, 7
        %v1368 = vsub.s32 %v1365, %v1367
        %v1369 = vrot.slane %v1335, %v1368
        %v1370 = vcombine.high %v1369, %v1369
        %v1372 = vunpack.c.l.s4 1966171168
        %v1373 = vunpack.c.0.s8 %v1372
        %v1374 = vlaneseq
        %v1375 = vshrl.u32 %v1374, 7
        %v1376 = vsub.s32 %v1373, %v1375
        %v1377 = vrot.slane %v1369, %v1376
        %v1379 = vunpack.c.l.s4 1966171168
        %v1380 = vunpack.c.0.s8 %v1379
        %v1381 = vlaneseq
        %v1382 = vshrl.u32 %v1381, 7
        %v1383 = vsub.s32 %v1380, %v1382
        %v1384 = vrot.slane %v1370, %v1383
        %v1385 = vlaneseq
        %v1386 = vshrl.u32 %v1385, 7
        %v1387 = vsub.s32 0, %v1386
        %v1388 = vrot.slane %v1377, %v1387
        %v1389 = vlaneseq
        %v1390 = vshrl.u32 %v1389, 7
        %v1391 = vsub.s32 0, %v1390
        %v1392 = vrot.slane %v1384, %v1391
        %v1395 = vmul.f32 %v1358, %v1388
        %v1396 = vmul.f32 %v1359, %v1388
        %v1397 = vmul.f32 %v1360, %v1392
        %v1398 = vmul.f32 %v1361, %v1392
        %1399 = vst [vmem:[%s557] sm:$0xff] %v1395
        %1400 = vst [vmem:[%s557 + $0x8] sm:$0xff] %v1396
        %1401 = vst [vmem:[%s557 + $0x10] sm:$0xff] %v1397
        %1402 = vst [vmem:[%s557 + $0x18] sm:$0xff] %v1398
        %s1403 = sand.u32 %s362, 1
        %s1404 = scalar_lea.sflag [#allocation4], %s1403
        %s1405 = sand.u32 %s362, 1
        %s1406 = smul.addr %s1405, 32
        %s1407 = scalar_lea.vmem [#allocation10], %s1406
        // Predicated region
        $region97: #{tpu_custom_call.1} parent=79 // pred_check
          %p1408 = pneg %p372
        $region98: #{tpu_custom_call.1} parent=79 // pred_check_branch
          %1410 = sbr.rel (%p1408) target = $region100
        $region99: #{tpu_custom_call.1} parent=79 // pred_region
          %s1411 = smul.u32 2, %s34
          %s1413 = ssub.s32 512, 512
          %1414 = vsyncadd %s1404, %s1413
          %s1415 = smul.addr %s1411, 2
          %s1416 = smul.addr %s1415, 128
          %s1417 = scalar_lea.hbm %s15, %s1416
          %s1418 = sshll.u32 %s1407, 4
          %s1419 = int_to_ptr.vmem [resolvable:$true] %s1418
          %1424 = dma.vmem_to_hbm [thread:$0]  %s1419, 512, %s1417, %s1404, 128, 128, 8
        $region100: #{tpu_custom_call.1} parent=79 // pred_fallthru
          _
      $region80: #{tpu_custom_call.1} parent=5 // pred_fallthru
        _
      %p1425 = scmp.le.s32.totalorder 2, %s29
      // Predicated region
      $region101: #{tpu_custom_call.1} parent=5 // pred_check
        %p1426 = pneg %p1425
      $region102: #{tpu_custom_call.1} parent=5 // pred_check_branch
        %1428 = sbr.rel (%p1426) target = $region104
      $region103: #{tpu_custom_call.1} parent=5 // pred_region
        %s1429 = ssub.s32 %s29, 2
        // Predicated region
        $region105: #{tpu_custom_call.1} parent=103 // pred_check
          %p1430 = pneg %p378
        $region106: #{tpu_custom_call.1} parent=103 // pred_check_branch
          %1432 = sbr.rel (%p1430) target = $region108
        $region107: #{tpu_custom_call.1} parent=103 // pred_region
          %s1433 = sand.u32 %s363, 1
          %s1434 = scalar_lea.sflag [#allocation4], %s1433
          %s1435 = sand.u32 %s363, 1
          %s1436 = smul.addr %s1435, 32
          %s1437 = scalar_lea.vmem [#allocation10], %s1436
          %1438 = dma.done %s1434, 512
        $region108: #{tpu_custom_call.1} parent=103 // pred_fallthru
          _
      $region104: #{tpu_custom_call.1} parent=5 // pred_fallthru
        _
    $region6: #{tpu_custom_call.1} parent=1 // loop_footer
      %s33 = sadd.s32 1, %s29
    $region7: #{tpu_custom_call.1} parent=1 // loop_footer_branch
      %28 = sbr.rel target = $region3
    $region8: #{tpu_custom_call.1} parent=1 // loop_exit
      _
    %1439 = vsyncpa [#allocation3], 1
    %s1440 = scalar_lea.sflag [#allocation3], 1
    %1441 = vsyncpa %s1440, 1
    %1442 = vsyncpa [#allocation6], 1
    %1443 = vsyncpa [#allocation9], 1
    %1444 = vsyncpa [#allocation4], 1
    %s1445 = scalar_lea.sflag [#allocation4], 1
    %1446 = vsyncpa %s1445, 1

</llo_original>
